<compile_context>
chip_gen: v6e
topology: v6e:2x2x1
jax: 0.10.0
libtpu: 0.0.40
codegen_flags: <defaults>
</compile_context>

<pallas_src>
import jax
import jax.numpy as jnp
from jax import lax
from jax.experimental import pallas as pl
from jax.experimental.pallas import tpu as pltpu


# ----------------------------------------------------------------------------
# Pallas kernels
# ----------------------------------------------------------------------------
def _conv_relu_pool_kernel(w_ref, b_ref, p00_ref, p01_ref, p10_ref, p11_ref,
                           o_ref):
    """Fused conv-as-GEMM + bias + ReLU + 2x2 max-pool.

    w:    (C_out, Kpad)      bf16  (PyTorch weight.reshape(C_out, -1), 0-padded)
    b:    (C_out, 1)         f32
    pXY:  (Kpad, N*Hp*Wp)    bf16  im2col patches of pooling quadrant (X, Y)
    o:    (C_out, N*Hp*Wp)   f32   lane-dense (big dim on the 128-lane axis)

    relu(max_q(.)) == max_q(relu(.)), so pooling the biased accumulators and
    applying one ReLU at the end reproduces PyTorch's relu -> max_pool order.
    """
    w = w_ref[...]
    b = b_ref[...]

    def quadrant(p_ref):
        acc = jnp.dot(w, p_ref[...], preferred_element_type=jnp.float32)
        return acc + b                      # f32 accumulate, f32 epilogue

    y = jnp.maximum(jnp.maximum(quadrant(p00_ref), quadrant(p01_ref)),
                    jnp.maximum(quadrant(p10_ref), quadrant(p11_ref)))
    o_ref[...] = jnp.maximum(y, 0.0)


def _fc_relu_fc_kernel(x_ref, w1_ref, b1_ref, w2_ref, b2_ref, o_ref):
    """Fused fc1 + ReLU + fc2; hidden activation stays in VMEM/registers."""
    h = jnp.dot(x_ref[...], w1_ref[...], preferred_element_type=jnp.float32)
    h = jnp.maximum(h + b1_ref[...], 0.0)
    o = jnp.dot(h.astype(jnp.bfloat16), w2_ref[...],
                preferred_element_type=jnp.float32)
    o_ref[...] = o + b2_ref[...]


# ----------------------------------------------------------------------------
# pallas_call wrappers (everything resident in VMEM; shapes are tiny)
# ----------------------------------------------------------------------------
def _full_spec(shape):
    return pl.BlockSpec(shape, lambda i: (0,) * len(shape))


def conv_relu_pool(w, b, p00, p01, p10, p11):
    c_out, kpad = w.shape
    _, m = p00.shape
    return pl.pallas_call(
        _conv_relu_pool_kernel,
        out_shape=jax.ShapeDtypeStruct((c_out, m), jnp.float32),
        grid=(1,),
        in_specs=[_full_spec((c_out, kpad)), _full_spec((c_out, 1))]
        + [_full_spec((kpad, m))] * 4,
        out_specs=_full_spec((c_out, m)),
        compiler_params=pltpu.CompilerParams(dimension_semantics=("arbitrary",)),
    )(w, b, p00, p01, p10, p11)


def fc_relu_fc(x, w1, b1, w2, b2):
    nb, k = x.shape
    _, h = w1.shape
    _, o = w2.shape
    return pl.pallas_call(
        _fc_relu_fc_kernel,
        out_shape=jax.ShapeDtypeStruct((nb, o), jnp.float32),
        grid=(1,),
        in_specs=[_full_spec((nb, k)), _full_spec((k, h)), _full_spec((1, h)),
                  _full_spec((h, o)), _full_spec((1, o))],
        out_specs=_full_spec((nb, o)),
        compiler_params=pltpu.CompilerParams(dimension_semantics=("arbitrary",)),
    )(x, w1, b1, w2, b2)


# ----------------------------------------------------------------------------
# Layout glue: per-pooling-quadrant im2col (pure layout prep, XLA)
# ----------------------------------------------------------------------------
def im2col_pool_quadrants(x_cnhw, kh, kw):
    """x (C, N, H, W) -> 4 patch matrices (C*kh*kw, N*Hp*Wp), one per 2x2
    pooling quadrant (di, dj).  Rows ordered (c, ki, kj) to match PyTorch's
    weight.reshape(C_out, -1); columns ordered (n, io, jo)."""
    c, n, hh, ww = x_cnhw.shape
    ho, wo = hh - kh + 1, ww - kw + 1
    hp, wp = ho // 2, wo // 2
    mats = []
    for di in range(2):
        for dj in range(2):
            rows = [
                x_cnhw[:, :, di + ki:di + ki + 2 * hp:2,
                       dj + kj:dj + kj + 2 * wp:2]
                for ki in range(kh) for kj in range(kw)
            ]                                            # each (C, N, Hp, Wp)
            p = jnp.stack(rows, axis=1)                  # (C, kh*kw, N, Hp, Wp)
            mats.append(p.reshape(c * kh * kw, n * hp * wp))
    return mats, (hp, wp)


# ----------------------------------------------------------------------------
# Net2Conv forward (Pallas)
# ----------------------------------------------------------------------------
def net2conv_forward(x, params):
    nb = x.shape[0]
    bf16 = jnp.bfloat16
    f32 = jnp.float32

    def pad_k(a, kpad):                       # zero-pad contraction rows
        return jnp.pad(a, ((0, kpad - a.shape[0]), (0, 0)))

    # --- conv1 (1->20, 5x5) + ReLU + 2x2 pool : one fused kernel -------------
    x_cnhw = x.reshape(1, nb, 28, 28)                       # C_in == 1: free
    p1, (hp1, wp1) = im2col_pool_quadrants(x_cnhw, 5, 5)    # 4 x (25, nb*144)
    k1, k1p = 25, 32
    p1 = [pad_k(p, k1p).astype(bf16) for p in p1]
    w1 = jnp.pad(params["conv1_w"].reshape(20, k1),
                 ((0, 0), (0, k1p - k1))).astype(bf16)
    b1 = params["conv1_b"].reshape(20, 1).astype(f32)
    y1 = conv_relu_pool(w1, b1, *p1)                        # (20, nb*12*12) f32
    y1 = y1.reshape(20, nb, hp1, wp1)                       # CNHW, no transpose

    # --- conv2 (20->50, 5x5) + ReLU + 2x2 pool : one fused kernel ------------
    p2, (hp2, wp2) = im2col_pool_quadrants(y1, 5, 5)        # 4 x (500, nb*16)
    k2, k2p = 500, 512
    p2 = [pad_k(p, k2p).astype(bf16) for p in p2]
    w2 = jnp.pad(params["conv2_w"].reshape(50, k2),
                 ((0, 0), (0, k2p - k2))).astype(bf16)
    b2 = params["conv2_b"].reshape(50, 1).astype(f32)
    y2 = conv_relu_pool(w2, b2, *p2)                        # (50, nb*4*4) f32

    # --- single permute at the flatten: PyTorch (n, c, h, w) order -----------
    flat = (y2.reshape(50, nb, hp2, wp2)
              .transpose(1, 0, 2, 3)
              .reshape(nb, 50 * hp2 * wp2))                 # (nb, 800)

    # --- fc1 + ReLU + fc2 : one fused kernel ---------------------------------
    return fc_relu_fc(flat.astype(bf16),
                      params["fc1_w"].T.astype(bf16),
                      params["fc1_b"].reshape(1, -1).astype(f32),
                      params["fc2_w"].T.astype(bf16),
                      params["fc2_b"].reshape(1, -1).astype(f32))


# ----------------------------------------------------------------------------
# Pure-JAX fp32 reference for correctness checking
# ----------------------------------------------------------------------------
def net2conv_reference(x, params):
    dn = ("NCHW", "OIHW", "NCHW")

    def pool(y):
        n, c, h, w = y.shape
        return y.reshape(n, c, h // 2, 2, w // 2, 2).max(axis=(3, 5))

    y = lax.conv_general_dilated(x, params["conv1_w"], (1, 1), "VALID",
                                 dimension_numbers=dn)
    y = jnp.maximum(y + params["conv1_b"].reshape(1, -1, 1, 1), 0.0)
    y = pool(y)
    y = lax.conv_general_dilated(y, params["conv2_w"], (1, 1), "VALID",
                                 dimension_numbers=dn)
    y = jnp.maximum(y + params["conv2_b"].reshape(1, -1, 1, 1), 0.0)
    y = pool(y)
    y = y.reshape(y.shape[0], -1)
    y = jnp.maximum(y @ params["fc1_w"].T + params["fc1_b"], 0.0)
    return y @ params["fc2_w"].T + params["fc2_b"]


# ----------------------------------------------------------------------------
# Deterministic parameter init (synthetic; shapes from Net2Conv.__init__)
# ----------------------------------------------------------------------------
def init_params(key):
    ks = jax.random.split(key, 8)
    f32 = jnp.float32
    return {
        "conv1_w": 0.10 * jax.random.normal(ks[0], (20, 1, 5, 5), f32),
        "conv1_b": 0.10 * jax.random.normal(ks[1], (20,), f32),
        "conv2_w": 0.05 * jax.random.normal(ks[2], (50, 20, 5, 5), f32),
        "conv2_b": 0.05 * jax.random.normal(ks[3], (50,), f32),
        "fc1_w":   0.02 * jax.random.normal(ks[4], (500, 800), f32),
        "fc1_b":   0.02 * jax.random.normal(ks[5], (500,), f32),
        "fc2_w":   0.05 * jax.random.normal(ks[6], (10, 500), f32),
        "fc2_b":   0.05 * jax.random.normal(ks[7], (10,), f32),
    }


if __name__ == "__main__":
    root = jax.random.PRNGKey(0)
    pkey, xkey = jax.random.split(root)
    params = init_params(pkey)

    # Net2Conv's fc1 (4*4*50) implies a 28x28 single-channel input (MNIST-like).
    x = jax.random.normal(xkey, (2, 1, 28, 28), jnp.float32)

    out = jax.block_until_ready(jax.jit(net2conv_forward)(x, params))
    assert out.shape == (2, 10) and out.dtype == jnp.float32

    ref = jax.block_until_ready(jax.jit(net2conv_reference)(x, params))
    # bf16 MXU operands (f32 accumulation) vs. fp32 reference -> ~1e-2 slack.
    assert jnp.allclose(out, ref, atol=1e-2, rtol=1e-2), (
        float(jnp.max(jnp.abs(out - ref))))

    print("KERNEL_OK")
</pallas_src>

<mosaic_0001>
module attributes {stable_mosaic.version = 11 : i64} {
  func.func @_conv_relu_pool_kernel(%arg0: i32, %arg1: memref<20x32xbf16, #tpu.memory_space<vmem>>, %arg2: memref<20x1xf32, #tpu.memory_space<vmem>>, %arg3: memref<32x288xbf16, #tpu.memory_space<vmem>>, %arg4: memref<32x288xbf16, #tpu.memory_space<vmem>>, %arg5: memref<32x288xbf16, #tpu.memory_space<vmem>>, %arg6: memref<32x288xbf16, #tpu.memory_space<vmem>>, %arg7: memref<20x288xf32, #tpu.memory_space<vmem>>) attributes {dimension_semantics = [#tpu.dimension_semantics<arbitrary>], iteration_bounds = array<i64: 1>, scalar_prefetch = 0 : i64, scratch_operands = 0 : i64, tpu.core_type = #tpu.core_type<tc>, window_params = [{pipeline_mode = #tpu.pipeline_mode<synchronous>, transform_indices = @transform_0, window_bounds = array<i64: 20, 32>}, {pipeline_mode = #tpu.pipeline_mode<synchronous>, transform_indices = @transform_1, window_bounds = array<i64: 20, 1>}, {pipeline_mode = #tpu.pipeline_mode<synchronous>, transform_indices = @transform_2, window_bounds = array<i64: 32, 288>}, {pipeline_mode = #tpu.pipeline_mode<synchronous>, transform_indices = @transform_3, window_bounds = array<i64: 32, 288>}, {pipeline_mode = #tpu.pipeline_mode<synchronous>, transform_indices = @transform_4, window_bounds = array<i64: 32, 288>}, {pipeline_mode = #tpu.pipeline_mode<synchronous>, transform_indices = @transform_5, window_bounds = array<i64: 32, 288>}, {pipeline_mode = #tpu.pipeline_mode<synchronous>, transform_indices = @transform_6, window_bounds = array<i64: 20, 288>}]} {
    %c0 = arith.constant 0 : index
    %c0_0 = arith.constant 0 : index
    %0 = vector.load %arg1[%c0, %c0_0] : memref<20x32xbf16, #tpu.memory_space<vmem>>, vector<20x32xbf16>
    %c0_1 = arith.constant 0 : index
    %c0_2 = arith.constant 0 : index
    %1 = vector.load %arg2[%c0_1, %c0_2] : memref<20x1xf32, #tpu.memory_space<vmem>>, vector<20x1xf32>
    %c0_3 = arith.constant 0 : index
    %c0_4 = arith.constant 0 : index
    %2 = vector.load %arg3[%c0_3, %c0_4] : memref<32x288xbf16, #tpu.memory_space<vmem>>, vector<32x288xbf16>
    %cst = arith.constant dense<0.000000e+00> : vector<20x288xf32>
    %3 = tpu.matmul %0, %2, %cst {dimension_numbers = #tpu.dot_dimension_numbers<[1], [0], [0], [1], [0, 0, 1, 1], [], []>} : vector<20x32xbf16>, vector<32x288xbf16>, vector<20x288xf32> -> vector<20x288xf32>
    %4 = vector.broadcast %1 : vector<20x1xf32> to vector<20x288xf32>
    %5 = arith.addf %3, %4 : vector<20x288xf32>
    %c0_5 = arith.constant 0 : index
    %c0_6 = arith.constant 0 : index
    %6 = vector.load %arg4[%c0_5, %c0_6] : memref<32x288xbf16, #tpu.memory_space<vmem>>, vector<32x288xbf16>
    %cst_7 = arith.constant dense<0.000000e+00> : vector<20x288xf32>
    %7 = tpu.matmul %0, %6, %cst_7 {dimension_numbers = #tpu.dot_dimension_numbers<[1], [0], [0], [1], [0, 0, 1, 1], [], []>} : vector<20x32xbf16>, vector<32x288xbf16>, vector<20x288xf32> -> vector<20x288xf32>
    %8 = vector.broadcast %1 : vector<20x1xf32> to vector<20x288xf32>
    %9 = arith.addf %7, %8 : vector<20x288xf32>
    %10 = arith.maximumf %5, %9 : vector<20x288xf32>
    %c0_8 = arith.constant 0 : index
    %c0_9 = arith.constant 0 : index
    %11 = vector.load %arg5[%c0_8, %c0_9] : memref<32x288xbf16, #tpu.memory_space<vmem>>, vector<32x288xbf16>
    %cst_10 = arith.constant dense<0.000000e+00> : vector<20x288xf32>
    %12 = tpu.matmul %0, %11, %cst_10 {dimension_numbers = #tpu.dot_dimension_numbers<[1], [0], [0], [1], [0, 0, 1, 1], [], []>} : vector<20x32xbf16>, vector<32x288xbf16>, vector<20x288xf32> -> vector<20x288xf32>
    %13 = vector.broadcast %1 : vector<20x1xf32> to vector<20x288xf32>
    %14 = arith.addf %12, %13 : vector<20x288xf32>
    %c0_11 = arith.constant 0 : index
    %c0_12 = arith.constant 0 : index
    %15 = vector.load %arg6[%c0_11, %c0_12] : memref<32x288xbf16, #tpu.memory_space<vmem>>, vector<32x288xbf16>
    %cst_13 = arith.constant dense<0.000000e+00> : vector<20x288xf32>
    %16 = tpu.matmul %0, %15, %cst_13 {dimension_numbers = #tpu.dot_dimension_numbers<[1], [0], [0], [1], [0, 0, 1, 1], [], []>} : vector<20x32xbf16>, vector<32x288xbf16>, vector<20x288xf32> -> vector<20x288xf32>
    %17 = vector.broadcast %1 : vector<20x1xf32> to vector<20x288xf32>
    %18 = arith.addf %16, %17 : vector<20x288xf32>
    %19 = arith.maximumf %14, %18 : vector<20x288xf32>
    %20 = arith.maximumf %10, %19 : vector<20x288xf32>
    %cst_14 = arith.constant 0.000000e+00 : f32
    %21 = vector.broadcast %cst_14 : f32 to vector<20x288xf32>
    %22 = arith.maximumf %20, %21 : vector<20x288xf32>
    %c0_15 = arith.constant 0 : index
    %c0_16 = arith.constant 0 : index
    %23 = vector.load %arg7[%c0_15, %c0_16] : memref<20x288xf32, #tpu.memory_space<vmem>>, vector<20x288xf32>
    tpu.vector_store %arg7[%c0_15, %c0_16], %22 {strides = array<i32>} : memref<20x288xf32, #tpu.memory_space<vmem>>, vector<20x288xf32>,
    return
  }
  func.func @transform_0(%arg0: i32) -> (i32, i32) {
    %c0_i32 = arith.constant 0 : i32
    %c0_i32_0 = arith.constant 0 : i32
    %c0_i32_1 = arith.constant 0 : i32
    return %c0_i32, %c0_i32_0 : i32, i32
  }
  func.func @transform_1(%arg0: i32) -> (i32, i32) {
    %c0_i32 = arith.constant 0 : i32
    %c0_i32_0 = arith.constant 0 : i32
    %c0_i32_1 = arith.constant 0 : i32
    return %c0_i32, %c0_i32_0 : i32, i32
  }
  func.func @transform_2(%arg0: i32) -> (i32, i32) {
    %c0_i32 = arith.constant 0 : i32
    %c0_i32_0 = arith.constant 0 : i32
    %c0_i32_1 = arith.constant 0 : i32
    return %c0_i32, %c0_i32_0 : i32, i32
  }
  func.func @transform_3(%arg0: i32) -> (i32, i32) {
    %c0_i32 = arith.constant 0 : i32
    %c0_i32_0 = arith.constant 0 : i32
    %c0_i32_1 = arith.constant 0 : i32
    return %c0_i32, %c0_i32_0 : i32, i32
  }
  func.func @transform_4(%arg0: i32) -> (i32, i32) {
    %c0_i32 = arith.constant 0 : i32
    %c0_i32_0 = arith.constant 0 : i32
    %c0_i32_1 = arith.constant 0 : i32
    return %c0_i32, %c0_i32_0 : i32, i32
  }
  func.func @transform_5(%arg0: i32) -> (i32, i32) {
    %c0_i32 = arith.constant 0 : i32
    %c0_i32_0 = arith.constant 0 : i32
    %c0_i32_1 = arith.constant 0 : i32
    return %c0_i32, %c0_i32_0 : i32, i32
  }
  func.func @transform_6(%arg0: i32) -> (i32, i32) {
    %c0_i32 = arith.constant 0 : i32
    %c0_i32_0 = arith.constant 0 : i32
    %c0_i32_1 = arith.constant 0 : i32
    return %c0_i32, %c0_i32_0 : i32, i32
  }
}

module attributes {stable_mosaic.version = 11 : i64} {
  func.func @_conv_relu_pool_kernel(%arg0: i32, %arg1: memref<50x512xbf16, #tpu.memory_space<vmem>>, %arg2: memref<50x1xf32, #tpu.memory_space<vmem>>, %arg3: memref<512x32xbf16, #tpu.memory_space<vmem>>, %arg4: memref<512x32xbf16, #tpu.memory_space<vmem>>, %arg5: memref<512x32xbf16, #tpu.memory_space<vmem>>, %arg6: memref<512x32xbf16, #tpu.memory_space<vmem>>, %arg7: memref<50x32xf32, #tpu.memory_space<vmem>>) attributes {dimension_semantics = [#tpu.dimension_semantics<arbitrary>], iteration_bounds = array<i64: 1>, scalar_prefetch = 0 : i64, scratch_operands = 0 : i64, tpu.core_type = #tpu.core_type<tc>, window_params = [{pipeline_mode = #tpu.pipeline_mode<synchronous>, transform_indices = @transform_0, window_bounds = array<i64: 50, 512>}, {pipeline_mode = #tpu.pipeline_mode<synchronous>, transform_indices = @transform_1, window_bounds = array<i64: 50, 1>}, {pipeline_mode = #tpu.pipeline_mode<synchronous>, transform_indices = @transform_2, window_bounds = array<i64: 512, 32>}, {pipeline_mode = #tpu.pipeline_mode<synchronous>, transform_indices = @transform_3, window_bounds = array<i64: 512, 32>}, {pipeline_mode = #tpu.pipeline_mode<synchronous>, transform_indices = @transform_4, window_bounds = array<i64: 512, 32>}, {pipeline_mode = #tpu.pipeline_mode<synchronous>, transform_indices = @transform_5, window_bounds = array<i64: 512, 32>}, {pipeline_mode = #tpu.pipeline_mode<synchronous>, transform_indices = @transform_6, window_bounds = array<i64: 50, 32>}]} {
    %c0 = arith.constant 0 : index
    %c0_0 = arith.constant 0 : index
    %0 = vector.load %arg1[%c0, %c0_0] : memref<50x512xbf16, #tpu.memory_space<vmem>>, vector<50x512xbf16>
    %c0_1 = arith.constant 0 : index
    %c0_2 = arith.constant 0 : index
    %1 = vector.load %arg2[%c0_1, %c0_2] : memref<50x1xf32, #tpu.memory_space<vmem>>, vector<50x1xf32>
    %c0_3 = arith.constant 0 : index
    %c0_4 = arith.constant 0 : index
    %2 = vector.load %arg3[%c0_3, %c0_4] : memref<512x32xbf16, #tpu.memory_space<vmem>>, vector<512x32xbf16>
    %cst = arith.constant dense<0.000000e+00> : vector<50x32xf32>
    %3 = tpu.matmul %0, %2, %cst {dimension_numbers = #tpu.dot_dimension_numbers<[1], [0], [0], [1], [0, 0, 1, 1], [], []>} : vector<50x512xbf16>, vector<512x32xbf16>, vector<50x32xf32> -> vector<50x32xf32>
    %4 = vector.broadcast %1 : vector<50x1xf32> to vector<50x32xf32>
    %5 = arith.addf %3, %4 : vector<50x32xf32>
    %c0_5 = arith.constant 0 : index
    %c0_6 = arith.constant 0 : index
    %6 = vector.load %arg4[%c0_5, %c0_6] : memref<512x32xbf16, #tpu.memory_space<vmem>>, vector<512x32xbf16>
    %cst_7 = arith.constant dense<0.000000e+00> : vector<50x32xf32>
    %7 = tpu.matmul %0, %6, %cst_7 {dimension_numbers = #tpu.dot_dimension_numbers<[1], [0], [0], [1], [0, 0, 1, 1], [], []>} : vector<50x512xbf16>, vector<512x32xbf16>, vector<50x32xf32> -> vector<50x32xf32>
    %8 = vector.broadcast %1 : vector<50x1xf32> to vector<50x32xf32>
    %9 = arith.addf %7, %8 : vector<50x32xf32>
    %10 = arith.maximumf %5, %9 : vector<50x32xf32>
    %c0_8 = arith.constant 0 : index
    %c0_9 = arith.constant 0 : index
    %11 = vector.load %arg5[%c0_8, %c0_9] : memref<512x32xbf16, #tpu.memory_space<vmem>>, vector<512x32xbf16>
    %cst_10 = arith.constant dense<0.000000e+00> : vector<50x32xf32>
    %12 = tpu.matmul %0, %11, %cst_10 {dimension_numbers = #tpu.dot_dimension_numbers<[1], [0], [0], [1], [0, 0, 1, 1], [], []>} : vector<50x512xbf16>, vector<512x32xbf16>, vector<50x32xf32> -> vector<50x32xf32>
    %13 = vector.broadcast %1 : vector<50x1xf32> to vector<50x32xf32>
    %14 = arith.addf %12, %13 : vector<50x32xf32>
    %c0_11 = arith.constant 0 : index
    %c0_12 = arith.constant 0 : index
    %15 = vector.load %arg6[%c0_11, %c0_12] : memref<512x32xbf16, #tpu.memory_space<vmem>>, vector<512x32xbf16>
    %cst_13 = arith.constant dense<0.000000e+00> : vector<50x32xf32>
    %16 = tpu.matmul %0, %15, %cst_13 {dimension_numbers = #tpu.dot_dimension_numbers<[1], [0], [0], [1], [0, 0, 1, 1], [], []>} : vector<50x512xbf16>, vector<512x32xbf16>, vector<50x32xf32> -> vector<50x32xf32>
    %17 = vector.broadcast %1 : vector<50x1xf32> to vector<50x32xf32>
    %18 = arith.addf %16, %17 : vector<50x32xf32>
    %19 = arith.maximumf %14, %18 : vector<50x32xf32>
    %20 = arith.maximumf %10, %19 : vector<50x32xf32>
    %cst_14 = arith.constant 0.000000e+00 : f32
    %21 = vector.broadcast %cst_14 : f32 to vector<50x32xf32>
    %22 = arith.maximumf %20, %21 : vector<50x32xf32>
    %c0_15 = arith.constant 0 : index
    %c0_16 = arith.constant 0 : index
    %23 = vector.load %arg7[%c0_15, %c0_16] : memref<50x32xf32, #tpu.memory_space<vmem>>, vector<50x32xf32>
    tpu.vector_store %arg7[%c0_15, %c0_16], %22 {strides = array<i32>} : memref<50x32xf32, #tpu.memory_space<vmem>>, vector<50x32xf32>,
    return
  }
  func.func @transform_0(%arg0: i32) -> (i32, i32) {
    %c0_i32 = arith.constant 0 : i32
    %c0_i32_0 = arith.constant 0 : i32
    %c0_i32_1 = arith.constant 0 : i32
    return %c0_i32, %c0_i32_0 : i32, i32
  }
  func.func @transform_1(%arg0: i32) -> (i32, i32) {
    %c0_i32 = arith.constant 0 : i32
    %c0_i32_0 = arith.constant 0 : i32
    %c0_i32_1 = arith.constant 0 : i32
    return %c0_i32, %c0_i32_0 : i32, i32
  }
  func.func @transform_2(%arg0: i32) -> (i32, i32) {
    %c0_i32 = arith.constant 0 : i32
    %c0_i32_0 = arith.constant 0 : i32
    %c0_i32_1 = arith.constant 0 : i32
    return %c0_i32, %c0_i32_0 : i32, i32
  }
  func.func @transform_3(%arg0: i32) -> (i32, i32) {
    %c0_i32 = arith.constant 0 : i32
    %c0_i32_0 = arith.constant 0 : i32
    %c0_i32_1 = arith.constant 0 : i32
    return %c0_i32, %c0_i32_0 : i32, i32
  }
  func.func @transform_4(%arg0: i32) -> (i32, i32) {
    %c0_i32 = arith.constant 0 : i32
    %c0_i32_0 = arith.constant 0 : i32
    %c0_i32_1 = arith.constant 0 : i32
    return %c0_i32, %c0_i32_0 : i32, i32
  }
  func.func @transform_5(%arg0: i32) -> (i32, i32) {
    %c0_i32 = arith.constant 0 : i32
    %c0_i32_0 = arith.constant 0 : i32
    %c0_i32_1 = arith.constant 0 : i32
    return %c0_i32, %c0_i32_0 : i32, i32
  }
  func.func @transform_6(%arg0: i32) -> (i32, i32) {
    %c0_i32 = arith.constant 0 : i32
    %c0_i32_0 = arith.constant 0 : i32
    %c0_i32_1 = arith.constant 0 : i32
    return %c0_i32, %c0_i32_0 : i32, i32
  }
}

module attributes {stable_mosaic.version = 11 : i64} {
  func.func @_fc_relu_fc_kernel(%arg0: i32, %arg1: memref<2x800xbf16, #tpu.memory_space<vmem>>, %arg2: memref<800x500xbf16, #tpu.memory_space<vmem>>, %arg3: memref<1x500xf32, #tpu.memory_space<vmem>>, %arg4: memref<500x10xbf16, #tpu.memory_space<vmem>>, %arg5: memref<1x10xf32, #tpu.memory_space<vmem>>, %arg6: memref<2x10xf32, #tpu.memory_space<vmem>>) attributes {dimension_semantics = [#tpu.dimension_semantics<arbitrary>], iteration_bounds = array<i64: 1>, scalar_prefetch = 0 : i64, scratch_operands = 0 : i64, tpu.core_type = #tpu.core_type<tc>, window_params = [{pipeline_mode = #tpu.pipeline_mode<synchronous>, transform_indices = @transform_0, window_bounds = array<i64: 2, 800>}, {pipeline_mode = #tpu.pipeline_mode<synchronous>, transform_indices = @transform_1, window_bounds = array<i64: 800, 500>}, {pipeline_mode = #tpu.pipeline_mode<synchronous>, transform_indices = @transform_2, window_bounds = array<i64: 1, 500>}, {pipeline_mode = #tpu.pipeline_mode<synchronous>, transform_indices = @transform_3, window_bounds = array<i64: 500, 10>}, {pipeline_mode = #tpu.pipeline_mode<synchronous>, transform_indices = @transform_4, window_bounds = array<i64: 1, 10>}, {pipeline_mode = #tpu.pipeline_mode<synchronous>, transform_indices = @transform_5, window_bounds = array<i64: 2, 10>}]} {
    %c0 = arith.constant 0 : index
    %c0_0 = arith.constant 0 : index
    %0 = vector.load %arg1[%c0, %c0_0] : memref<2x800xbf16, #tpu.memory_space<vmem>>, vector<2x800xbf16>
    %c0_1 = arith.constant 0 : index
    %c0_2 = arith.constant 0 : index
    %1 = vector.load %arg2[%c0_1, %c0_2] : memref<800x500xbf16, #tpu.memory_space<vmem>>, vector<800x500xbf16>
    %cst = arith.constant dense<0.000000e+00> : vector<2x500xf32>
    %2 = tpu.matmul %0, %1, %cst {dimension_numbers = #tpu.dot_dimension_numbers<[1], [0], [0], [1], [0, 0, 1, 1], [], []>} : vector<2x800xbf16>, vector<800x500xbf16>, vector<2x500xf32> -> vector<2x500xf32>
    %c0_3 = arith.constant 0 : index
    %c0_4 = arith.constant 0 : index
    %3 = vector.load %arg3[%c0_3, %c0_4] : memref<1x500xf32, #tpu.memory_space<vmem>>, vector<1x500xf32>
    %4 = vector.broadcast %3 : vector<1x500xf32> to vector<2x500xf32>
    %5 = arith.addf %2, %4 : vector<2x500xf32>
    %cst_5 = arith.constant 0.000000e+00 : f32
    %6 = vector.broadcast %cst_5 : f32 to vector<2x500xf32>
    %7 = arith.maximumf %5, %6 : vector<2x500xf32>
    %8 = arith.truncf %7 : vector<2x500xf32> to vector<2x500xbf16>
    %c0_6 = arith.constant 0 : index
    %c0_7 = arith.constant 0 : index
    %9 = vector.load %arg4[%c0_6, %c0_7] : memref<500x10xbf16, #tpu.memory_space<vmem>>, vector<500x10xbf16>
    %cst_8 = arith.constant dense<0.000000e+00> : vector<2x10xf32>
    %10 = tpu.matmul %8, %9, %cst_8 {dimension_numbers = #tpu.dot_dimension_numbers<[1], [0], [0], [1], [0, 0, 1, 1], [], []>} : vector<2x500xbf16>, vector<500x10xbf16>, vector<2x10xf32> -> vector<2x10xf32>
    %c0_9 = arith.constant 0 : index
    %c0_10 = arith.constant 0 : index
    %11 = vector.load %arg5[%c0_9, %c0_10] : memref<1x10xf32, #tpu.memory_space<vmem>>, vector<1x10xf32>
    %12 = vector.broadcast %11 : vector<1x10xf32> to vector<2x10xf32>
    %13 = arith.addf %10, %12 : vector<2x10xf32>
    %c0_11 = arith.constant 0 : index
    %c0_12 = arith.constant 0 : index
    %14 = vector.load %arg6[%c0_11, %c0_12] : memref<2x10xf32, #tpu.memory_space<vmem>>, vector<2x10xf32>
    tpu.vector_store %arg6[%c0_11, %c0_12], %13 {strides = array<i32>} : memref<2x10xf32, #tpu.memory_space<vmem>>, vector<2x10xf32>,
    return
  }
  func.func @transform_0(%arg0: i32) -> (i32, i32) {
    %c0_i32 = arith.constant 0 : i32
    %c0_i32_0 = arith.constant 0 : i32
    %c0_i32_1 = arith.constant 0 : i32
    return %c0_i32, %c0_i32_0 : i32, i32
  }
  func.func @transform_1(%arg0: i32) -> (i32, i32) {
    %c0_i32 = arith.constant 0 : i32
    %c0_i32_0 = arith.constant 0 : i32
    %c0_i32_1 = arith.constant 0 : i32
    return %c0_i32, %c0_i32_0 : i32, i32
  }
  func.func @transform_2(%arg0: i32) -> (i32, i32) {
    %c0_i32 = arith.constant 0 : i32
    %c0_i32_0 = arith.constant 0 : i32
    %c0_i32_1 = arith.constant 0 : i32
    return %c0_i32, %c0_i32_0 : i32, i32
  }
  func.func @transform_3(%arg0: i32) -> (i32, i32) {
    %c0_i32 = arith.constant 0 : i32
    %c0_i32_0 = arith.constant 0 : i32
    %c0_i32_1 = arith.constant 0 : i32
    return %c0_i32, %c0_i32_0 : i32, i32
  }
  func.func @transform_4(%arg0: i32) -> (i32, i32) {
    %c0_i32 = arith.constant 0 : i32
    %c0_i32_0 = arith.constant 0 : i32
    %c0_i32_1 = arith.constant 0 : i32
    return %c0_i32, %c0_i32_0 : i32, i32
  }
  func.func @transform_5(%arg0: i32) -> (i32, i32) {
    %c0_i32 = arith.constant 0 : i32
    %c0_i32_0 = arith.constant 0 : i32
    %c0_i32_1 = arith.constant 0 : i32
    return %c0_i32, %c0_i32_0 : i32, i32
  }
}

</mosaic_0001>

<llo_original>
// kernel: net2conv_forward.3
$region0: #{net2conv_forward.3}
  #allocation0 [shape = 'u32[]', space=smem, size = 0x4, offset = 0x4, fixed_abs, tag = 'smem constant byte address 0x4 - core index']
  #allocation1 [shape = 'u32[144,128]{1,0:T(1,128)}', space=vmem, size = 0x12000, scoped, tag = 'internal scratch']
  %s0 = inlined_call_operand.vmem [shape: bf16[20,32], index: 0, kind: input, shape index: {}]
  %s1 = inlined_call_operand.vmem [shape: f32[20,1], index: 1, kind: input, shape index: {}]
  %s2 = inlined_call_operand.vmem [shape: bf16[32,288], index: 2, kind: input, shape index: {}]
  %s3 = inlined_call_operand.vmem [shape: bf16[32,288], index: 3, kind: input, shape index: {}]
  %s4 = inlined_call_operand.vmem [shape: bf16[32,288], index: 4, kind: input, shape index: {}]
  %s5 = inlined_call_operand.vmem [shape: bf16[32,288], index: 5, kind: input, shape index: {}]
  %s6 = inlined_call_operand.vmem [shape: f32[20,288], index: 6, kind: output, shape index: {}]
  %s7 = sld [smem:[#allocation0]]
  $region34: #{net2conv_forward.3} parent=0
    _
  %s9 = ssub.s32 1, %s7
  %s10 = scalar_select 0, %s9, %s7
  // Predicated region
  $region2: #{net2conv_forward.3} parent=0 // pred_check
    _
  $region3: #{net2conv_forward.3} parent=0 // pred_check_branch
    %12 = sbr.rel (0) target = $region5
  $region4: #{net2conv_forward.3} parent=0 // pred_region
    _
  $region5: #{net2conv_forward.3} parent=0 // pred_fallthru
    _
  // Predicated region
  $region6: #{net2conv_forward.3} parent=0 // pred_check
    _
  $region7: #{net2conv_forward.3} parent=0 // pred_check_branch
    %14 = sbr.rel (0) target = $region9
  $region8: #{net2conv_forward.3} parent=0 // pred_region
    _
  $region9: #{net2conv_forward.3} parent=0 // pred_fallthru
    _
  // Predicated region
  $region10: #{net2conv_forward.3} parent=0 // pred_check
    _
  $region11: #{net2conv_forward.3} parent=0 // pred_check_branch
    %16 = sbr.rel (0) target = $region13
  $region12: #{net2conv_forward.3} parent=0 // pred_region
    _
  $region13: #{net2conv_forward.3} parent=0 // pred_fallthru
    _
  // Predicated region
  $region14: #{net2conv_forward.3} parent=0 // pred_check
    _
  $region15: #{net2conv_forward.3} parent=0 // pred_check_branch
    %18 = sbr.rel (0) target = $region17
  $region16: #{net2conv_forward.3} parent=0 // pred_region
    _
  $region17: #{net2conv_forward.3} parent=0 // pred_fallthru
    _
  // Predicated region
  $region18: #{net2conv_forward.3} parent=0 // pred_check
    _
  $region19: #{net2conv_forward.3} parent=0 // pred_check_branch
    %20 = sbr.rel (0) target = $region21
  $region20: #{net2conv_forward.3} parent=0 // pred_region
    _
  $region21: #{net2conv_forward.3} parent=0 // pred_fallthru
    _
  // Predicated region
  $region22: #{net2conv_forward.3} parent=0 // pred_check
    _
  $region23: #{net2conv_forward.3} parent=0 // pred_check_branch
    %22 = sbr.rel (0) target = $region25
  $region24: #{net2conv_forward.3} parent=0 // pred_region
    _
  $region25: #{net2conv_forward.3} parent=0 // pred_fallthru
    _
  %v24 = vld [vmem:[%s0] sm:$0xf]
  %v25 = vld [vmem:[%s0 + $0x4] sm:$0xf]
  %v26 = vld [vmem:[%s0 + $0x8] sm:$0x3]
  %v27 = vld [vmem:[%s1] sm:$0xff]
  %v28 = vld [vmem:[%s1 + $0x8] sm:$0xff]
  %v29 = vld [vmem:[%s1 + $0x10] sm:$0xf]
  %v30 = vld [vmem:[%s2] sm:$0xff]
  %v31 = vld [vmem:[%s2 + $0x8] sm:$0xf]
  %v32 = vld [vmem:[%s2 + $0xc] sm:$0xff]
  %v33 = vld [vmem:[%s2 + $0x14] sm:$0xf]
  %v34 = vld [vmem:[%s2 + $0x18] sm:$0xff]
  %v35 = vld [vmem:[%s2 + $0x20] sm:$0xf]
  %v36 = vld [vmem:[%s2 + $0x24] sm:$0xff]
  %v37 = vld [vmem:[%s2 + $0x2c] sm:$0xf]
  %39 = vset.pattern.permute.xlu0 0
  %40 = vperm.xlu0 %39, %v27
  %v41 = vpop.permute.xlu0 %40
  %44 = vset.pattern.permute.xlu0 0
  %45 = vperm.xlu0 %44, %v28
  %v46 = vpop.permute.xlu0 %45
  %49 = vset.pattern.permute.xlu0 0
  %50 = vperm.xlu0 %49, %v29
  %v51 = vpop.permute.xlu0 %50
  %v56 = vunpack.c.l.b16 %v24
  %v57 = vunpack.c.l.b16 %v25
  %v58 = vunpack.c.l.b16 %v26
  %v59 = vpack.c.b16 %v57, %v56
  %v60 = vpack.c.b16 %v58, %v58
  %v69 = vunpack.c.l.b16 %v30
  %v70 = vunpack.c.h.b16 %v30
  %v71 = vunpack.c.l.b16 %v31
  %v72 = vunpack.c.l.b16 %v32
  %v73 = vunpack.c.h.b16 %v32
  %v74 = vunpack.c.l.b16 %v33
  %v75 = vunpack.c.l.b16 %v34
  %v76 = vunpack.c.h.b16 %v34
  %v77 = vunpack.c.l.b16 %v35
  %v78 = vunpack.c.l.b16 %v36
  %v79 = vunpack.c.h.b16 %v36
  %v80 = vunpack.c.l.b16 %v37
  %v81 = vpack.c.b16 %v72, %v69
  %v82 = vpack.c.b16 %v73, %v70
  %v83 = vpack.c.b16 %v74, %v71
  %v84 = vpack.c.b16 %v78, %v75
  %v85 = vpack.c.b16 %v79, %v76
  %v86 = vpack.c.b16 %v80, %v77
  %vm93 = vcmask 261120
  %v95 = vsel %vm93, %v59, 0
  %v98 = vsel %vm93, %v60, 0
  %100 = vmatprep.subr.bf16.mxu0 0
  %101 = vmatpush1.bf16.msra.mxu0 0
  %102 = vmatprep.subr.bf16.mxu0 0
  %103 = vmatpush1.bf16.msra.mxu0 0
  %104 = vmatprep.subr.bf16.mxu0 0
  %105 = vmatpush1.bf16.msra.mxu0 0
  %106 = vmatprep.subr.bf16.mxu0 0
  %107 = vmatpush1.bf16.msra.mxu0 0
  %108 = vmatprep.subr.bf16.mxu0 0
  %109 = vmatpush1.bf16.msra.mxu0 0
  %110 = vmatprep.subr.bf16.mxu0 0
  %111 = vmatpush1.bf16.msra.mxu0 0
  %112 = vmatprep.subr.bf16.mxu0 %v85
  %113 = vmatpush1.bf16.msra.mxu0 %v84
  %114 = vmatprep.subr.bf16.mxu0 %v82
  %115 = vmatpush1.bf16.msra.mxu0 %v81
  %116 = vmatprep.subr.bf16.mxu0 0
  %117 = vmatpush2.bf16.msra.mxu0 0
  %118 = vmatprep.subr.bf16.mxu0 0
  %119 = vmatpush2.bf16.msra.mxu0 0
  %120 = vmatprep.subr.bf16.mxu0 0
  %121 = vmatpush2.bf16.msra.mxu0 0
  %122 = vmatprep.subr.bf16.mxu0 0
  %123 = vmatpush2.bf16.msra.mxu0 0
  %124 = vmatprep.subr.bf16.mxu0 0
  %125 = vmatpush2.bf16.msra.mxu0 0
  %126 = vmatprep.subr.bf16.mxu0 0
  %127 = vmatpush2.bf16.msra.mxu0 0
  %128 = vmatprep.subr.bf16.mxu0 0
  %129 = vmatpush2.bf16.msra.mxu0 0
  %130 = vmatprep.subr.bf16.mxu0 0
  %131 = vmatpush2.bf16.msra.mxu0 0
  %132 = vmatprep.mubr.bf16.mxu0 0
  %133 = vmatmul.mubr.bf16.gmra.mxu0 %v95
  %v134 = vpop.f32.mrf.mxu0
  %v135 = vadd.f32 %v41, %v134
  %v136 = vpop.f32.mrf.mxu0
  %v137 = vadd.f32 %v41, %v136
  %v138 = vpop.f32.mrf.mxu0
  %v139 = vadd.f32 %v46, %v138
  %v140 = vpop.f32.mrf.mxu0
  %v141 = vadd.f32 %v46, %v140
  %142 = vmatprep.mubr.bf16.mxu0 0
  %143 = vmatmul.mubr.bf16.gmra.mxu0 %v98
  %v144 = vpop.f32.mrf.mxu0
  %v145 = vadd.f32 %v51, %v144
  %v146 = vpop.f32.mrf.mxu0
  %v147 = vadd.f32 %v51, %v146
  %v148 = vpop.f32.mrf.mxu0
  %v149 = vpop.f32.mrf.mxu0
  %150 = vdwg.mxu0
  %151 = vmatprep.subr.bf16.mxu0 0
  %152 = vmatpush1.bf16.msra.mxu0 0
  %153 = vmatprep.subr.bf16.mxu0 0
  %154 = vmatpush1.bf16.msra.mxu0 0
  %155 = vmatprep.subr.bf16.mxu0 0
  %156 = vmatpush1.bf16.msra.mxu0 0
  %157 = vmatprep.subr.bf16.mxu0 0
  %158 = vmatpush1.bf16.msra.mxu0 0
  %159 = vmatprep.subr.bf16.mxu0 0
  %160 = vmatpush1.bf16.msra.mxu0 0
  %161 = vmatprep.subr.bf16.mxu0 0
  %162 = vmatpush1.bf16.msra.mxu0 0
  %163 = vmatprep.subr.bf16.mxu0 0
  %164 = vmatpush1.bf16.msra.mxu0 %v86
  %165 = vmatprep.subr.bf16.mxu0 0
  %166 = vmatpush1.bf16.msra.mxu0 %v83
  %167 = vmatprep.subr.bf16.mxu0 0
  %168 = vmatpush2.bf16.msra.mxu0 0
  %169 = vmatprep.subr.bf16.mxu0 0
  %170 = vmatpush2.bf16.msra.mxu0 0
  %171 = vmatprep.subr.bf16.mxu0 0
  %172 = vmatpush2.bf16.msra.mxu0 0
  %173 = vmatprep.subr.bf16.mxu0 0
  %174 = vmatpush2.bf16.msra.mxu0 0
  %175 = vmatprep.subr.bf16.mxu0 0
  %176 = vmatpush2.bf16.msra.mxu0 0
  %177 = vmatprep.subr.bf16.mxu0 0
  %178 = vmatpush2.bf16.msra.mxu0 0
  %179 = vmatprep.subr.bf16.mxu0 0
  %180 = vmatpush2.bf16.msra.mxu0 0
  %181 = vmatprep.subr.bf16.mxu0 0
  %182 = vmatpush2.bf16.msra.mxu0 0
  %183 = vmatprep.mubr.bf16.mxu0 0
  %184 = vmatmul.mubr.bf16.gmra.mxu0 %v95
  %v185 = vpop.f32.mrf.mxu0
  %v186 = vadd.f32 %v41, %v185
  %v187 = vpop.f32.mrf.mxu0
  %v188 = vpop.f32.mrf.mxu0
  %v189 = vadd.f32 %v46, %v188
  %v190 = vpop.f32.mrf.mxu0
  %191 = vmatprep.mubr.bf16.mxu0 0
  %192 = vmatmul.mubr.bf16.gmra.mxu0 %v98
  %v193 = vpop.f32.mrf.mxu0
  %v194 = vadd.f32 %v51, %v193
  %v195 = vpop.f32.mrf.mxu0
  %v196 = vpop.f32.mrf.mxu0
  %v197 = vpop.f32.mrf.mxu0
  %198 = vdwg.mxu0
  %v199 = vld [vmem:[%s3] sm:$0xff]
  %v200 = vld [vmem:[%s3 + $0x8] sm:$0xf]
  %v201 = vld [vmem:[%s3 + $0xc] sm:$0xff]
  %v202 = vld [vmem:[%s3 + $0x14] sm:$0xf]
  %v203 = vld [vmem:[%s3 + $0x18] sm:$0xff]
  %v204 = vld [vmem:[%s3 + $0x20] sm:$0xf]
  %v205 = vld [vmem:[%s3 + $0x24] sm:$0xff]
  %v206 = vld [vmem:[%s3 + $0x2c] sm:$0xf]
  %v215 = vunpack.c.l.b16 %v199
  %v216 = vunpack.c.h.b16 %v199
  %v217 = vunpack.c.l.b16 %v200
  %v218 = vunpack.c.l.b16 %v201
  %v219 = vunpack.c.h.b16 %v201
  %v220 = vunpack.c.l.b16 %v202
  %v221 = vunpack.c.l.b16 %v203
  %v222 = vunpack.c.h.b16 %v203
  %v223 = vunpack.c.l.b16 %v204
  %v224 = vunpack.c.l.b16 %v205
  %v225 = vunpack.c.h.b16 %v205
  %v226 = vunpack.c.l.b16 %v206
  %v227 = vpack.c.b16 %v218, %v215
  %v228 = vpack.c.b16 %v219, %v216
  %v229 = vpack.c.b16 %v220, %v217
  %v230 = vpack.c.b16 %v224, %v221
  %v231 = vpack.c.b16 %v225, %v222
  %v232 = vpack.c.b16 %v226, %v223
  %239 = vmatprep.subr.bf16.mxu0 0
  %240 = vmatpush1.bf16.msra.mxu0 0
  %241 = vmatprep.subr.bf16.mxu0 0
  %242 = vmatpush1.bf16.msra.mxu0 0
  %243 = vmatprep.subr.bf16.mxu0 0
  %244 = vmatpush1.bf16.msra.mxu0 0
  %245 = vmatprep.subr.bf16.mxu0 0
  %246 = vmatpush1.bf16.msra.mxu0 0
  %247 = vmatprep.subr.bf16.mxu0 0
  %248 = vmatpush1.bf16.msra.mxu0 0
  %249 = vmatprep.subr.bf16.mxu0 0
  %250 = vmatpush1.bf16.msra.mxu0 0
  %251 = vmatprep.subr.bf16.mxu0 %v231
  %252 = vmatpush1.bf16.msra.mxu0 %v230
  %253 = vmatprep.subr.bf16.mxu0 %v228
  %254 = vmatpush1.bf16.msra.mxu0 %v227
  %255 = vmatprep.subr.bf16.mxu0 0
  %256 = vmatpush2.bf16.msra.mxu0 0
  %257 = vmatprep.subr.bf16.mxu0 0
  %258 = vmatpush2.bf16.msra.mxu0 0
  %259 = vmatprep.subr.bf16.mxu0 0
  %260 = vmatpush2.bf16.msra.mxu0 0
  %261 = vmatprep.subr.bf16.mxu0 0
  %262 = vmatpush2.bf16.msra.mxu0 0
  %263 = vmatprep.subr.bf16.mxu0 0
  %264 = vmatpush2.bf16.msra.mxu0 0
  %265 = vmatprep.subr.bf16.mxu0 0
  %266 = vmatpush2.bf16.msra.mxu0 0
  %267 = vmatprep.subr.bf16.mxu0 0
  %268 = vmatpush2.bf16.msra.mxu0 0
  %269 = vmatprep.subr.bf16.mxu0 0
  %270 = vmatpush2.bf16.msra.mxu0 0
  %271 = vmatprep.mubr.bf16.mxu0 0
  %272 = vmatmul.mubr.bf16.gmra.mxu0 %v95
  %v273 = vpop.f32.mrf.mxu0
  %v274 = vadd.f32 %v41, %v273
  %v275 = vpop.f32.mrf.mxu0
  %v276 = vadd.f32 %v41, %v275
  %v277 = vpop.f32.mrf.mxu0
  %v278 = vadd.f32 %v46, %v277
  %v279 = vpop.f32.mrf.mxu0
  %v280 = vadd.f32 %v46, %v279
  %281 = vmatprep.mubr.bf16.mxu0 0
  %282 = vmatmul.mubr.bf16.gmra.mxu0 %v98
  %v283 = vpop.f32.mrf.mxu0
  %v284 = vadd.f32 %v51, %v283
  %v285 = vpop.f32.mrf.mxu0
  %v286 = vadd.f32 %v51, %v285
  %v287 = vpop.f32.mrf.mxu0
  %v288 = vpop.f32.mrf.mxu0
  %289 = vdwg.mxu0
  %290 = vmatprep.subr.bf16.mxu0 0
  %291 = vmatpush1.bf16.msra.mxu0 0
  %292 = vmatprep.subr.bf16.mxu0 0
  %293 = vmatpush1.bf16.msra.mxu0 0
  %294 = vmatprep.subr.bf16.mxu0 0
  %295 = vmatpush1.bf16.msra.mxu0 0
  %296 = vmatprep.subr.bf16.mxu0 0
  %297 = vmatpush1.bf16.msra.mxu0 0
  %298 = vmatprep.subr.bf16.mxu0 0
  %299 = vmatpush1.bf16.msra.mxu0 0
  %300 = vmatprep.subr.bf16.mxu0 0
  %301 = vmatpush1.bf16.msra.mxu0 0
  %302 = vmatprep.subr.bf16.mxu0 0
  %303 = vmatpush1.bf16.msra.mxu0 %v232
  %304 = vmatprep.subr.bf16.mxu0 0
  %305 = vmatpush1.bf16.msra.mxu0 %v229
  %306 = vmatprep.subr.bf16.mxu0 0
  %307 = vmatpush2.bf16.msra.mxu0 0
  %308 = vmatprep.subr.bf16.mxu0 0
  %309 = vmatpush2.bf16.msra.mxu0 0
  %310 = vmatprep.subr.bf16.mxu0 0
  %311 = vmatpush2.bf16.msra.mxu0 0
  %312 = vmatprep.subr.bf16.mxu0 0
  %313 = vmatpush2.bf16.msra.mxu0 0
  %314 = vmatprep.subr.bf16.mxu0 0
  %315 = vmatpush2.bf16.msra.mxu0 0
  %316 = vmatprep.subr.bf16.mxu0 0
  %317 = vmatpush2.bf16.msra.mxu0 0
  %318 = vmatprep.subr.bf16.mxu0 0
  %319 = vmatpush2.bf16.msra.mxu0 0
  %320 = vmatprep.subr.bf16.mxu0 0
  %321 = vmatpush2.bf16.msra.mxu0 0
  %322 = vmatprep.mubr.bf16.mxu0 0
  %323 = vmatmul.mubr.bf16.gmra.mxu0 %v95
  %v324 = vpop.f32.mrf.mxu0
  %v325 = vadd.f32 %v41, %v324
  %v326 = vpop.f32.mrf.mxu0
  %v327 = vpop.f32.mrf.mxu0
  %v328 = vadd.f32 %v46, %v327
  %v329 = vpop.f32.mrf.mxu0
  %330 = vmatprep.mubr.bf16.mxu0 0
  %331 = vmatmul.mubr.bf16.gmra.mxu0 %v98
  %v332 = vpop.f32.mrf.mxu0
  %v333 = vadd.f32 %v51, %v332
  %v334 = vpop.f32.mrf.mxu0
  %v335 = vpop.f32.mrf.mxu0
  %v336 = vpop.f32.mrf.mxu0
  %337 = vdwg.mxu0
  %v338 = vmax.f32 %v135, %v274
  %v339 = vmax.f32 %v137, %v276
  %v340 = vmax.f32 %v186, %v325
  %v341 = vmax.f32 %v139, %v278
  %v342 = vmax.f32 %v141, %v280
  %v343 = vmax.f32 %v189, %v328
  %v344 = vmax.f32 %v145, %v284
  %v345 = vmax.f32 %v147, %v286
  %v346 = vmax.f32 %v194, %v333
  %v347 = vld [vmem:[%s4] sm:$0xff]
  %v348 = vld [vmem:[%s4 + $0x8] sm:$0xf]
  %v349 = vld [vmem:[%s4 + $0xc] sm:$0xff]
  %v350 = vld [vmem:[%s4 + $0x14] sm:$0xf]
  %v351 = vld [vmem:[%s4 + $0x18] sm:$0xff]
  %v352 = vld [vmem:[%s4 + $0x20] sm:$0xf]
  %v353 = vld [vmem:[%s4 + $0x24] sm:$0xff]
  %v354 = vld [vmem:[%s4 + $0x2c] sm:$0xf]
  %v363 = vunpack.c.l.b16 %v347
  %v364 = vunpack.c.h.b16 %v347
  %v365 = vunpack.c.l.b16 %v348
  %v366 = vunpack.c.l.b16 %v349
  %v367 = vunpack.c.h.b16 %v349
  %v368 = vunpack.c.l.b16 %v350
  %v369 = vunpack.c.l.b16 %v351
  %v370 = vunpack.c.h.b16 %v351
  %v371 = vunpack.c.l.b16 %v352
  %v372 = vunpack.c.l.b16 %v353
  %v373 = vunpack.c.h.b16 %v353
  %v374 = vunpack.c.l.b16 %v354
  %v375 = vpack.c.b16 %v366, %v363
  %v376 = vpack.c.b16 %v367, %v364
  %v377 = vpack.c.b16 %v368, %v365
  %v378 = vpack.c.b16 %v372, %v369
  %v379 = vpack.c.b16 %v373, %v370
  %v380 = vpack.c.b16 %v374, %v371
  %387 = vmatprep.subr.bf16.mxu0 0
  %388 = vmatpush1.bf16.msra.mxu0 0
  %389 = vmatprep.subr.bf16.mxu0 0
  %390 = vmatpush1.bf16.msra.mxu0 0
  %391 = vmatprep.subr.bf16.mxu0 0
  %392 = vmatpush1.bf16.msra.mxu0 0
  %393 = vmatprep.subr.bf16.mxu0 0
  %394 = vmatpush1.bf16.msra.mxu0 0
  %395 = vmatprep.subr.bf16.mxu0 0
  %396 = vmatpush1.bf16.msra.mxu0 0
  %397 = vmatprep.subr.bf16.mxu0 0
  %398 = vmatpush1.bf16.msra.mxu0 0
  %399 = vmatprep.subr.bf16.mxu0 %v379
  %400 = vmatpush1.bf16.msra.mxu0 %v378
  %401 = vmatprep.subr.bf16.mxu0 %v376
  %402 = vmatpush1.bf16.msra.mxu0 %v375
  %403 = vmatprep.subr.bf16.mxu0 0
  %404 = vmatpush2.bf16.msra.mxu0 0
  %405 = vmatprep.subr.bf16.mxu0 0
  %406 = vmatpush2.bf16.msra.mxu0 0
  %407 = vmatprep.subr.bf16.mxu0 0
  %408 = vmatpush2.bf16.msra.mxu0 0
  %409 = vmatprep.subr.bf16.mxu0 0
  %410 = vmatpush2.bf16.msra.mxu0 0
  %411 = vmatprep.subr.bf16.mxu0 0
  %412 = vmatpush2.bf16.msra.mxu0 0
  %413 = vmatprep.subr.bf16.mxu0 0
  %414 = vmatpush2.bf16.msra.mxu0 0
  %415 = vmatprep.subr.bf16.mxu0 0
  %416 = vmatpush2.bf16.msra.mxu0 0
  %417 = vmatprep.subr.bf16.mxu0 0
  %418 = vmatpush2.bf16.msra.mxu0 0
  %419 = vmatprep.mubr.bf16.mxu0 0
  %420 = vmatmul.mubr.bf16.gmra.mxu0 %v95
  %v421 = vpop.f32.mrf.mxu0
  %v422 = vadd.f32 %v41, %v421
  %v423 = vpop.f32.mrf.mxu0
  %v424 = vadd.f32 %v41, %v423
  %v425 = vpop.f32.mrf.mxu0
  %v426 = vadd.f32 %v46, %v425
  %v427 = vpop.f32.mrf.mxu0
  %v428 = vadd.f32 %v46, %v427
  %429 = vmatprep.mubr.bf16.mxu0 0
  %430 = vmatmul.mubr.bf16.gmra.mxu0 %v98
  %v431 = vpop.f32.mrf.mxu0
  %v432 = vadd.f32 %v51, %v431
  %v433 = vpop.f32.mrf.mxu0
  %v434 = vadd.f32 %v51, %v433
  %v435 = vpop.f32.mrf.mxu0
  %v436 = vpop.f32.mrf.mxu0
  %437 = vdwg.mxu0
  %438 = vmatprep.subr.bf16.mxu0 0
  %439 = vmatpush1.bf16.msra.mxu0 0
  %440 = vmatprep.subr.bf16.mxu0 0
  %441 = vmatpush1.bf16.msra.mxu0 0
  %442 = vmatprep.subr.bf16.mxu0 0
  %443 = vmatpush1.bf16.msra.mxu0 0
  %444 = vmatprep.subr.bf16.mxu0 0
  %445 = vmatpush1.bf16.msra.mxu0 0
  %446 = vmatprep.subr.bf16.mxu0 0
  %447 = vmatpush1.bf16.msra.mxu0 0
  %448 = vmatprep.subr.bf16.mxu0 0
  %449 = vmatpush1.bf16.msra.mxu0 0
  %450 = vmatprep.subr.bf16.mxu0 0
  %451 = vmatpush1.bf16.msra.mxu0 %v380
  %452 = vmatprep.subr.bf16.mxu0 0
  %453 = vmatpush1.bf16.msra.mxu0 %v377
  %454 = vmatprep.subr.bf16.mxu0 0
  %455 = vmatpush2.bf16.msra.mxu0 0
  %456 = vmatprep.subr.bf16.mxu0 0
  %457 = vmatpush2.bf16.msra.mxu0 0
  %458 = vmatprep.subr.bf16.mxu0 0
  %459 = vmatpush2.bf16.msra.mxu0 0
  %460 = vmatprep.subr.bf16.mxu0 0
  %461 = vmatpush2.bf16.msra.mxu0 0
  %462 = vmatprep.subr.bf16.mxu0 0
  %463 = vmatpush2.bf16.msra.mxu0 0
  %464 = vmatprep.subr.bf16.mxu0 0
  %465 = vmatpush2.bf16.msra.mxu0 0
  %466 = vmatprep.subr.bf16.mxu0 0
  %467 = vmatpush2.bf16.msra.mxu0 0
  %468 = vmatprep.subr.bf16.mxu0 0
  %469 = vmatpush2.bf16.msra.mxu0 0
  %470 = vmatprep.mubr.bf16.mxu0 0
  %471 = vmatmul.mubr.bf16.gmra.mxu0 %v95
  %v472 = vpop.f32.mrf.mxu0
  %v473 = vadd.f32 %v41, %v472
  %v474 = vpop.f32.mrf.mxu0
  %v475 = vpop.f32.mrf.mxu0
  %v476 = vadd.f32 %v46, %v475
  %v477 = vpop.f32.mrf.mxu0
  %478 = vmatprep.mubr.bf16.mxu0 0
  %479 = vmatmul.mubr.bf16.gmra.mxu0 %v98
  %v480 = vpop.f32.mrf.mxu0
  %v481 = vadd.f32 %v51, %v480
  %v482 = vpop.f32.mrf.mxu0
  %v483 = vpop.f32.mrf.mxu0
  %v484 = vpop.f32.mrf.mxu0
  %485 = vdwg.mxu0
  %v486 = vld [vmem:[%s5] sm:$0xff]
  %v487 = vld [vmem:[%s5 + $0x8] sm:$0xf]
  %v488 = vld [vmem:[%s5 + $0xc] sm:$0xff]
  %v489 = vld [vmem:[%s5 + $0x14] sm:$0xf]
  %v490 = vld [vmem:[%s5 + $0x18] sm:$0xff]
  %v491 = vld [vmem:[%s5 + $0x20] sm:$0xf]
  %v492 = vld [vmem:[%s5 + $0x24] sm:$0xff]
  %v493 = vld [vmem:[%s5 + $0x2c] sm:$0xf]
  %v502 = vunpack.c.l.b16 %v486
  %v503 = vunpack.c.h.b16 %v486
  %v504 = vunpack.c.l.b16 %v487
  %v505 = vunpack.c.l.b16 %v488
  %v506 = vunpack.c.h.b16 %v488
  %v507 = vunpack.c.l.b16 %v489
  %v508 = vunpack.c.l.b16 %v490
  %v509 = vunpack.c.h.b16 %v490
  %v510 = vunpack.c.l.b16 %v491
  %v511 = vunpack.c.l.b16 %v492
  %v512 = vunpack.c.h.b16 %v492
  %v513 = vunpack.c.l.b16 %v493
  %v514 = vpack.c.b16 %v505, %v502
  %v515 = vpack.c.b16 %v506, %v503
  %v516 = vpack.c.b16 %v507, %v504
  %v517 = vpack.c.b16 %v511, %v508
  %v518 = vpack.c.b16 %v512, %v509
  %v519 = vpack.c.b16 %v513, %v510
  %526 = vmatprep.subr.bf16.mxu0 0
  %527 = vmatpush1.bf16.msra.mxu0 0
  %528 = vmatprep.subr.bf16.mxu0 0
  %529 = vmatpush1.bf16.msra.mxu0 0
  %530 = vmatprep.subr.bf16.mxu0 0
  %531 = vmatpush1.bf16.msra.mxu0 0
  %532 = vmatprep.subr.bf16.mxu0 0
  %533 = vmatpush1.bf16.msra.mxu0 0
  %534 = vmatprep.subr.bf16.mxu0 0
  %535 = vmatpush1.bf16.msra.mxu0 0
  %536 = vmatprep.subr.bf16.mxu0 0
  %537 = vmatpush1.bf16.msra.mxu0 0
  %538 = vmatprep.subr.bf16.mxu0 %v518
  %539 = vmatpush1.bf16.msra.mxu0 %v517
  %540 = vmatprep.subr.bf16.mxu0 %v515
  %541 = vmatpush1.bf16.msra.mxu0 %v514
  %542 = vmatprep.subr.bf16.mxu0 0
  %543 = vmatpush2.bf16.msra.mxu0 0
  %544 = vmatprep.subr.bf16.mxu0 0
  %545 = vmatpush2.bf16.msra.mxu0 0
  %546 = vmatprep.subr.bf16.mxu0 0
  %547 = vmatpush2.bf16.msra.mxu0 0
  %548 = vmatprep.subr.bf16.mxu0 0
  %549 = vmatpush2.bf16.msra.mxu0 0
  %550 = vmatprep.subr.bf16.mxu0 0
  %551 = vmatpush2.bf16.msra.mxu0 0
  %552 = vmatprep.subr.bf16.mxu0 0
  %553 = vmatpush2.bf16.msra.mxu0 0
  %554 = vmatprep.subr.bf16.mxu0 0
  %555 = vmatpush2.bf16.msra.mxu0 0
  %556 = vmatprep.subr.bf16.mxu0 0
  %557 = vmatpush2.bf16.msra.mxu0 0
  %558 = vmatprep.mubr.bf16.mxu0 0
  %559 = vmatmul.mubr.bf16.gmra.mxu0 %v95
  %v560 = vpop.f32.mrf.mxu0
  %v561 = vadd.f32 %v41, %v560
  %v562 = vpop.f32.mrf.mxu0
  %v563 = vadd.f32 %v41, %v562
  %v564 = vpop.f32.mrf.mxu0
  %v565 = vadd.f32 %v46, %v564
  %v566 = vpop.f32.mrf.mxu0
  %v567 = vadd.f32 %v46, %v566
  %568 = vmatprep.mubr.bf16.mxu0 0
  %569 = vmatmul.mubr.bf16.gmra.mxu0 %v98
  %v570 = vpop.f32.mrf.mxu0
  %v571 = vadd.f32 %v51, %v570
  %v572 = vpop.f32.mrf.mxu0
  %v573 = vadd.f32 %v51, %v572
  %v574 = vpop.f32.mrf.mxu0
  %v575 = vpop.f32.mrf.mxu0
  %576 = vdwg.mxu0
  %577 = vmatprep.subr.bf16.mxu0 0
  %578 = vmatpush1.bf16.msra.mxu0 0
  %579 = vmatprep.subr.bf16.mxu0 0
  %580 = vmatpush1.bf16.msra.mxu0 0
  %581 = vmatprep.subr.bf16.mxu0 0
  %582 = vmatpush1.bf16.msra.mxu0 0
  %583 = vmatprep.subr.bf16.mxu0 0
  %584 = vmatpush1.bf16.msra.mxu0 0
  %585 = vmatprep.subr.bf16.mxu0 0
  %586 = vmatpush1.bf16.msra.mxu0 0
  %587 = vmatprep.subr.bf16.mxu0 0
  %588 = vmatpush1.bf16.msra.mxu0 0
  %589 = vmatprep.subr.bf16.mxu0 0
  %590 = vmatpush1.bf16.msra.mxu0 %v519
  %591 = vmatprep.subr.bf16.mxu0 0
  %592 = vmatpush1.bf16.msra.mxu0 %v516
  %593 = vmatprep.subr.bf16.mxu0 0
  %594 = vmatpush2.bf16.msra.mxu0 0
  %595 = vmatprep.subr.bf16.mxu0 0
  %596 = vmatpush2.bf16.msra.mxu0 0
  %597 = vmatprep.subr.bf16.mxu0 0
  %598 = vmatpush2.bf16.msra.mxu0 0
  %599 = vmatprep.subr.bf16.mxu0 0
  %600 = vmatpush2.bf16.msra.mxu0 0
  %601 = vmatprep.subr.bf16.mxu0 0
  %602 = vmatpush2.bf16.msra.mxu0 0
  %603 = vmatprep.subr.bf16.mxu0 0
  %604 = vmatpush2.bf16.msra.mxu0 0
  %605 = vmatprep.subr.bf16.mxu0 0
  %606 = vmatpush2.bf16.msra.mxu0 0
  %607 = vmatprep.subr.bf16.mxu0 0
  %608 = vmatpush2.bf16.msra.mxu0 0
  %609 = vmatprep.mubr.bf16.mxu0 0
  %610 = vmatmul.mubr.bf16.gmra.mxu0 %v95
  %v611 = vpop.f32.mrf.mxu0
  %v612 = vadd.f32 %v41, %v611
  %v613 = vpop.f32.mrf.mxu0
  %v614 = vpop.f32.mrf.mxu0
  %v615 = vadd.f32 %v46, %v614
  %v616 = vpop.f32.mrf.mxu0
  %617 = vmatprep.mubr.bf16.mxu0 0
  %618 = vmatmul.mubr.bf16.gmra.mxu0 %v98
  %v619 = vpop.f32.mrf.mxu0
  %v620 = vadd.f32 %v51, %v619
  %v621 = vpop.f32.mrf.mxu0
  %v622 = vpop.f32.mrf.mxu0
  %v623 = vpop.f32.mrf.mxu0
  %624 = vdwg.mxu0
  %v625 = vmax.f32 %v422, %v561
  %v626 = vmax.f32 %v424, %v563
  %v627 = vmax.f32 %v473, %v612
  %v628 = vmax.f32 %v426, %v565
  %v629 = vmax.f32 %v428, %v567
  %v630 = vmax.f32 %v476, %v615
  %v631 = vmax.f32 %v432, %v571
  %v632 = vmax.f32 %v434, %v573
  %v633 = vmax.f32 %v481, %v620
  %v634 = vmax.f32 %v338, %v625
  %v635 = vmax.f32 %v339, %v626
  %v636 = vmax.f32 %v340, %v627
  %v637 = vmax.f32 %v341, %v628
  %v638 = vmax.f32 %v342, %v629
  %v639 = vmax.f32 %v343, %v630
  %v640 = vmax.f32 %v344, %v631
  %v641 = vmax.f32 %v345, %v632
  %v642 = vmax.f32 %v346, %v633
  %v643 = vmax.f32 %v634, 0.0
  %v644 = vmax.f32 %v635, 0.0
  %v645 = vmax.f32 %v636, 0.0
  %v646 = vmax.f32 %v637, 0.0
  %v647 = vmax.f32 %v638, 0.0
  %v648 = vmax.f32 %v639, 0.0
  %v649 = vmax.f32 %v640, 0.0
  %v650 = vmax.f32 %v641, 0.0
  %v651 = vmax.f32 %v642, 0.0
  %652 = vst [vmem:[%s6] sm:$0xff] %v643
  %653 = vst [vmem:[%s6 + $0x8] sm:$0xff] %v644
  %654 = vst.msk [vmem:[%s6 + $0x10] sm:$0xff] %vm93, %v645
  %655 = vst [vmem:[%s6 + $0x18] sm:$0xff] %v646
  %656 = vst [vmem:[%s6 + $0x20] sm:$0xff] %v647
  %657 = vst.msk [vmem:[%s6 + $0x28] sm:$0xff] %vm93, %v648
  %658 = vst [vmem:[%s6 + $0x30] sm:$0xf] %v649
  %659 = vst [vmem:[%s6 + $0x38] sm:$0xf] %v650
  %vm660 = vcmask 257024
  %661 = vst.msk [vmem:[%s6 + $0x40] sm:$0xf] %vm660, %v651
  // Predicated region
  $region26: #{net2conv_forward.3} parent=0 // pred_check
    _
  $region27: #{net2conv_forward.3} parent=0 // pred_check_branch
    %663 = sbr.rel (0) target = $region29
  $region28: #{net2conv_forward.3} parent=0 // pred_region
    _
  $region29: #{net2conv_forward.3} parent=0 // pred_fallthru
    _
  // Predicated region
  $region30: #{net2conv_forward.3} parent=0 // pred_check
    _
  $region31: #{net2conv_forward.3} parent=0 // pred_check_branch
    %665 = sbr.rel (0) target = $region33
  $region32: #{net2conv_forward.3} parent=0 // pred_region
    _
  $region33: #{net2conv_forward.3} parent=0 // pred_fallthru
    _

// kernel: net2conv_forward.4
$region0: #{net2conv_forward.4}
  #allocation0 [shape = 'u32[]', space=smem, size = 0x4, offset = 0x4, fixed_abs, tag = 'smem constant byte address 0x4 - core index']
  #allocation1 [shape = 'u32[144,128]{1,0:T(1,128)}', space=vmem, size = 0x12000, scoped, tag = 'internal scratch']
  %s0 = inlined_call_operand.vmem [shape: bf16[50,512], index: 0, kind: input, shape index: {}]
  %s1 = inlined_call_operand.vmem [shape: f32[50,1], index: 1, kind: input, shape index: {}]
  %s2 = inlined_call_operand.vmem [shape: bf16[512,32], index: 2, kind: input, shape index: {}]
  %s3 = inlined_call_operand.vmem [shape: bf16[512,32], index: 3, kind: input, shape index: {}]
  %s4 = inlined_call_operand.vmem [shape: bf16[512,32], index: 4, kind: input, shape index: {}]
  %s5 = inlined_call_operand.vmem [shape: bf16[512,32], index: 5, kind: input, shape index: {}]
  %s6 = inlined_call_operand.vmem [shape: f32[50,32], index: 6, kind: output, shape index: {}]
  %s7 = sld [smem:[#allocation0]]
  $region34: #{net2conv_forward.4} parent=0
    _
  %s9 = ssub.s32 1, %s7
  %s10 = scalar_select 0, %s9, %s7
  // Predicated region
  $region2: #{net2conv_forward.4} parent=0 // pred_check
    _
  $region3: #{net2conv_forward.4} parent=0 // pred_check_branch
    %12 = sbr.rel (0) target = $region5
  $region4: #{net2conv_forward.4} parent=0 // pred_region
    _
  $region5: #{net2conv_forward.4} parent=0 // pred_fallthru
    _
  // Predicated region
  $region6: #{net2conv_forward.4} parent=0 // pred_check
    _
  $region7: #{net2conv_forward.4} parent=0 // pred_check_branch
    %14 = sbr.rel (0) target = $region9
  $region8: #{net2conv_forward.4} parent=0 // pred_region
    _
  $region9: #{net2conv_forward.4} parent=0 // pred_fallthru
    _
  // Predicated region
  $region10: #{net2conv_forward.4} parent=0 // pred_check
    _
  $region11: #{net2conv_forward.4} parent=0 // pred_check_branch
    %16 = sbr.rel (0) target = $region13
  $region12: #{net2conv_forward.4} parent=0 // pred_region
    _
  $region13: #{net2conv_forward.4} parent=0 // pred_fallthru
    _
  // Predicated region
  $region14: #{net2conv_forward.4} parent=0 // pred_check
    _
  $region15: #{net2conv_forward.4} parent=0 // pred_check_branch
    %18 = sbr.rel (0) target = $region17
  $region16: #{net2conv_forward.4} parent=0 // pred_region
    _
  $region17: #{net2conv_forward.4} parent=0 // pred_fallthru
    _
  // Predicated region
  $region18: #{net2conv_forward.4} parent=0 // pred_check
    _
  $region19: #{net2conv_forward.4} parent=0 // pred_check_branch
    %20 = sbr.rel (0) target = $region21
  $region20: #{net2conv_forward.4} parent=0 // pred_region
    _
  $region21: #{net2conv_forward.4} parent=0 // pred_fallthru
    _
  // Predicated region
  $region22: #{net2conv_forward.4} parent=0 // pred_check
    _
  $region23: #{net2conv_forward.4} parent=0 // pred_check_branch
    %22 = sbr.rel (0) target = $region25
  $region24: #{net2conv_forward.4} parent=0 // pred_region
    _
  $region25: #{net2conv_forward.4} parent=0 // pred_fallthru
    _
  %v24 = vld [vmem:[%s0] sm:$0xff]
  %v25 = vld [vmem:[%s0 + $0x8] sm:$0xff]
  %v26 = vld [vmem:[%s0 + $0x10] sm:$0xff]
  %v27 = vld [vmem:[%s0 + $0x18] sm:$0xff]
  %v28 = vld [vmem:[%s0 + $0x20] sm:$0xff]
  %v29 = vld [vmem:[%s0 + $0x28] sm:$0xff]
  %v30 = vld [vmem:[%s0 + $0x30] sm:$0xff]
  %v31 = vld [vmem:[%s0 + $0x38] sm:$0xff]
  %v32 = vld [vmem:[%s0 + $0x40] sm:$0xff]
  %v33 = vld [vmem:[%s0 + $0x48] sm:$0xff]
  %v34 = vld [vmem:[%s0 + $0x50] sm:$0xff]
  %v35 = vld [vmem:[%s0 + $0x58] sm:$0xff]
  %v36 = vld [vmem:[%s0 + $0x60] sm:$0x11]
  %v37 = vld [vmem:[%s0 + $0x68] sm:$0x11]
  %v38 = vld [vmem:[%s1] sm:$0xff]
  %v39 = vld [vmem:[%s1 + $0x8] sm:$0xff]
  %v40 = vld [vmem:[%s1 + $0x10] sm:$0xff]
  %v41 = vld [vmem:[%s1 + $0x18] sm:$0xff]
  %v42 = vld [vmem:[%s1 + $0x20] sm:$0xff]
  %v43 = vld [vmem:[%s1 + $0x28] sm:$0xff]
  %v44 = vld [vmem:[%s1 + $0x30] sm:$0x3]
  %v45 = vld [vmem:[%s2] sm:$0xf]
  %v46 = vld [vmem:[%s2 + $0x4] sm:$0xf]
  %v47 = vld [vmem:[%s2 + $0x8] sm:$0xf]
  %v48 = vld [vmem:[%s2 + $0xc] sm:$0xf]
  %v49 = vld [vmem:[%s2 + $0x10] sm:$0xf]
  %v50 = vld [vmem:[%s2 + $0x14] sm:$0xf]
  %v51 = vld [vmem:[%s2 + $0x18] sm:$0xf]
  %v52 = vld [vmem:[%s2 + $0x1c] sm:$0xf]
  %v53 = vld [vmem:[%s2 + $0x20] sm:$0xf]
  %v54 = vld [vmem:[%s2 + $0x24] sm:$0xf]
  %v55 = vld [vmem:[%s2 + $0x28] sm:$0xf]
  %v56 = vld [vmem:[%s2 + $0x2c] sm:$0xf]
  %v57 = vld [vmem:[%s2 + $0x30] sm:$0xf]
  %v58 = vld [vmem:[%s2 + $0x34] sm:$0xf]
  %v59 = vld [vmem:[%s2 + $0x38] sm:$0xf]
  %v60 = vld [vmem:[%s2 + $0x3c] sm:$0xf]
  %v61 = vld [vmem:[%s2 + $0x40] sm:$0xf]
  %v62 = vld [vmem:[%s2 + $0x44] sm:$0xf]
  %v63 = vld [vmem:[%s2 + $0x48] sm:$0xf]
  %v64 = vld [vmem:[%s2 + $0x4c] sm:$0xf]
  %v65 = vld [vmem:[%s2 + $0x50] sm:$0xf]
  %v66 = vld [vmem:[%s2 + $0x54] sm:$0xf]
  %v67 = vld [vmem:[%s2 + $0x58] sm:$0xf]
  %v68 = vld [vmem:[%s2 + $0x5c] sm:$0xf]
  %v69 = vld [vmem:[%s2 + $0x60] sm:$0xf]
  %v70 = vld [vmem:[%s2 + $0x64] sm:$0xf]
  %v71 = vld [vmem:[%s2 + $0x68] sm:$0xf]
  %v72 = vld [vmem:[%s2 + $0x6c] sm:$0xf]
  %v73 = vld [vmem:[%s2 + $0x70] sm:$0xf]
  %v74 = vld [vmem:[%s2 + $0x74] sm:$0xf]
  %v75 = vld [vmem:[%s2 + $0x78] sm:$0xf]
  %v76 = vld [vmem:[%s2 + $0x7c] sm:$0xf]
  %v77 = vld [vmem:[%s2 + $0x80] sm:$0xf]
  %v78 = vld [vmem:[%s2 + $0x84] sm:$0xf]
  %v79 = vld [vmem:[%s2 + $0x88] sm:$0xf]
  %v80 = vld [vmem:[%s2 + $0x8c] sm:$0xf]
  %v81 = vld [vmem:[%s2 + $0x90] sm:$0xf]
  %v82 = vld [vmem:[%s2 + $0x94] sm:$0xf]
  %v83 = vld [vmem:[%s2 + $0x98] sm:$0xf]
  %v84 = vld [vmem:[%s2 + $0x9c] sm:$0xf]
  %v85 = vld [vmem:[%s2 + $0xa0] sm:$0xf]
  %v86 = vld [vmem:[%s2 + $0xa4] sm:$0xf]
  %v87 = vld [vmem:[%s2 + $0xa8] sm:$0xf]
  %v88 = vld [vmem:[%s2 + $0xac] sm:$0xf]
  %v89 = vld [vmem:[%s2 + $0xb0] sm:$0xf]
  %v90 = vld [vmem:[%s2 + $0xb4] sm:$0xf]
  %v91 = vld [vmem:[%s2 + $0xb8] sm:$0xf]
  %v92 = vld [vmem:[%s2 + $0xbc] sm:$0xf]
  %v93 = vld [vmem:[%s2 + $0xc0] sm:$0xf]
  %v94 = vld [vmem:[%s2 + $0xc4] sm:$0xf]
  %v95 = vld [vmem:[%s2 + $0xc8] sm:$0xf]
  %v96 = vld [vmem:[%s2 + $0xcc] sm:$0xf]
  %v97 = vld [vmem:[%s2 + $0xd0] sm:$0xf]
  %v98 = vld [vmem:[%s2 + $0xd4] sm:$0xf]
  %v99 = vld [vmem:[%s2 + $0xd8] sm:$0xf]
  %v100 = vld [vmem:[%s2 + $0xdc] sm:$0xf]
  %v101 = vld [vmem:[%s2 + $0xe0] sm:$0xf]
  %v102 = vld [vmem:[%s2 + $0xe4] sm:$0xf]
  %v103 = vld [vmem:[%s2 + $0xe8] sm:$0xf]
  %v104 = vld [vmem:[%s2 + $0xec] sm:$0xf]
  %v105 = vld [vmem:[%s2 + $0xf0] sm:$0xf]
  %v106 = vld [vmem:[%s2 + $0xf4] sm:$0xf]
  %v107 = vld [vmem:[%s2 + $0xf8] sm:$0xf]
  %v108 = vld [vmem:[%s2 + $0xfc] sm:$0xf]
  %110 = vset.pattern.permute.xlu0 0
  %111 = vperm.xlu0 %110, %v38
  %v112 = vpop.permute.xlu0 %111
  %115 = vset.pattern.permute.xlu0 0
  %116 = vperm.xlu0 %115, %v39
  %v117 = vpop.permute.xlu0 %116
  %120 = vset.pattern.permute.xlu0 0
  %121 = vperm.xlu0 %120, %v40
  %v122 = vpop.permute.xlu0 %121
  %125 = vset.pattern.permute.xlu0 0
  %126 = vperm.xlu0 %125, %v41
  %v127 = vpop.permute.xlu0 %126
  %130 = vset.pattern.permute.xlu0 0
  %131 = vperm.xlu0 %130, %v42
  %v132 = vpop.permute.xlu0 %131
  %135 = vset.pattern.permute.xlu0 0
  %136 = vperm.xlu0 %135, %v43
  %v137 = vpop.permute.xlu0 %136
  %140 = vset.pattern.permute.xlu0 0
  %141 = vperm.xlu0 %140, %v44
  %v142 = vpop.permute.xlu0 %141
  %v158 = vunpack.c.l.b16 %v24
  %v159 = vunpack.c.h.b16 %v24
  %v160 = vunpack.c.l.b16 %v25
  %v161 = vunpack.c.h.b16 %v25
  %v162 = vunpack.c.l.b16 %v26
  %v163 = vunpack.c.h.b16 %v26
  %v164 = vunpack.c.l.b16 %v27
  %v165 = vunpack.c.h.b16 %v27
  %v166 = vunpack.c.l.b16 %v28
  %v167 = vunpack.c.h.b16 %v28
  %v168 = vunpack.c.l.b16 %v29
  %v169 = vunpack.c.h.b16 %v29
  %v170 = vunpack.c.l.b16 %v30
  %v171 = vunpack.c.h.b16 %v30
  %v172 = vunpack.c.l.b16 %v31
  %v173 = vunpack.c.h.b16 %v31
  %v174 = vunpack.c.l.b16 %v32
  %v175 = vunpack.c.h.b16 %v32
  %v176 = vunpack.c.l.b16 %v33
  %v177 = vunpack.c.h.b16 %v33
  %v178 = vunpack.c.l.b16 %v34
  %v179 = vunpack.c.h.b16 %v34
  %v180 = vunpack.c.l.b16 %v35
  %v181 = vunpack.c.h.b16 %v35
  %v182 = vunpack.c.l.b16 %v36
  %v183 = vunpack.c.h.b16 %v36
  %v184 = vunpack.c.l.b16 %v37
  %v185 = vunpack.c.h.b16 %v37
  %v186 = vpack.c.b16 %v162, %v158
  %v187 = vpack.c.b16 %v163, %v159
  %v188 = vpack.c.b16 %v164, %v160
  %v189 = vpack.c.b16 %v165, %v161
  %v190 = vpack.c.b16 %v170, %v166
  %v191 = vpack.c.b16 %v171, %v167
  %v192 = vpack.c.b16 %v172, %v168
  %v193 = vpack.c.b16 %v173, %v169
  %v194 = vpack.c.b16 %v178, %v174
  %v195 = vpack.c.b16 %v179, %v175
  %v196 = vpack.c.b16 %v180, %v176
  %v197 = vpack.c.b16 %v181, %v177
  %v198 = vpack.c.b16 %v182, %v182
  %v199 = vpack.c.b16 %v183, %v183
  %v200 = vpack.c.b16 %v184, %v184
  %v201 = vpack.c.b16 %v185, %v185
  %v282 = vunpack.c.l.b16 %v45
  %v283 = vunpack.c.l.b16 %v46
  %v284 = vunpack.c.l.b16 %v47
  %v285 = vunpack.c.l.b16 %v48
  %v286 = vunpack.c.l.b16 %v49
  %v287 = vunpack.c.l.b16 %v50
  %v288 = vunpack.c.l.b16 %v51
  %v289 = vunpack.c.l.b16 %v52
  %v290 = vunpack.c.l.b16 %v53
  %v291 = vunpack.c.l.b16 %v54
  %v292 = vunpack.c.l.b16 %v55
  %v293 = vunpack.c.l.b16 %v56
  %v294 = vunpack.c.l.b16 %v57
  %v295 = vunpack.c.l.b16 %v58
  %v296 = vunpack.c.l.b16 %v59
  %v297 = vunpack.c.l.b16 %v60
  %v298 = vunpack.c.l.b16 %v61
  %v299 = vunpack.c.l.b16 %v62
  %v300 = vunpack.c.l.b16 %v63
  %v301 = vunpack.c.l.b16 %v64
  %v302 = vunpack.c.l.b16 %v65
  %v303 = vunpack.c.l.b16 %v66
  %v304 = vunpack.c.l.b16 %v67
  %v305 = vunpack.c.l.b16 %v68
  %v306 = vunpack.c.l.b16 %v69
  %v307 = vunpack.c.l.b16 %v70
  %v308 = vunpack.c.l.b16 %v71
  %v309 = vunpack.c.l.b16 %v72
  %v310 = vunpack.c.l.b16 %v73
  %v311 = vunpack.c.l.b16 %v74
  %v312 = vunpack.c.l.b16 %v75
  %v313 = vunpack.c.l.b16 %v76
  %v314 = vunpack.c.l.b16 %v77
  %v315 = vunpack.c.l.b16 %v78
  %v316 = vunpack.c.l.b16 %v79
  %v317 = vunpack.c.l.b16 %v80
  %v318 = vunpack.c.l.b16 %v81
  %v319 = vunpack.c.l.b16 %v82
  %v320 = vunpack.c.l.b16 %v83
  %v321 = vunpack.c.l.b16 %v84
  %v322 = vunpack.c.l.b16 %v85
  %v323 = vunpack.c.l.b16 %v86
  %v324 = vunpack.c.l.b16 %v87
  %v325 = vunpack.c.l.b16 %v88
  %v326 = vunpack.c.l.b16 %v89
  %v327 = vunpack.c.l.b16 %v90
  %v328 = vunpack.c.l.b16 %v91
  %v329 = vunpack.c.l.b16 %v92
  %v330 = vunpack.c.l.b16 %v93
  %v331 = vunpack.c.l.b16 %v94
  %v332 = vunpack.c.l.b16 %v95
  %v333 = vunpack.c.l.b16 %v96
  %v334 = vunpack.c.l.b16 %v97
  %v335 = vunpack.c.l.b16 %v98
  %v336 = vunpack.c.l.b16 %v99
  %v337 = vunpack.c.l.b16 %v100
  %v338 = vunpack.c.l.b16 %v101
  %v339 = vunpack.c.l.b16 %v102
  %v340 = vunpack.c.l.b16 %v103
  %v341 = vunpack.c.l.b16 %v104
  %v342 = vunpack.c.l.b16 %v105
  %v343 = vunpack.c.l.b16 %v106
  %v344 = vunpack.c.l.b16 %v107
  %v345 = vunpack.c.l.b16 %v108
  %v346 = vpack.c.b16 %v283, %v282
  %v347 = vpack.c.b16 %v285, %v284
  %v348 = vpack.c.b16 %v287, %v286
  %v349 = vpack.c.b16 %v289, %v288
  %v350 = vpack.c.b16 %v291, %v290
  %v351 = vpack.c.b16 %v293, %v292
  %v352 = vpack.c.b16 %v295, %v294
  %v353 = vpack.c.b16 %v297, %v296
  %v354 = vpack.c.b16 %v299, %v298
  %v355 = vpack.c.b16 %v301, %v300
  %v356 = vpack.c.b16 %v303, %v302
  %v357 = vpack.c.b16 %v305, %v304
  %v358 = vpack.c.b16 %v307, %v306
  %v359 = vpack.c.b16 %v309, %v308
  %v360 = vpack.c.b16 %v311, %v310
  %v361 = vpack.c.b16 %v313, %v312
  %v362 = vpack.c.b16 %v315, %v314
  %v363 = vpack.c.b16 %v317, %v316
  %v364 = vpack.c.b16 %v319, %v318
  %v365 = vpack.c.b16 %v321, %v320
  %v366 = vpack.c.b16 %v323, %v322
  %v367 = vpack.c.b16 %v325, %v324
  %v368 = vpack.c.b16 %v327, %v326
  %v369 = vpack.c.b16 %v329, %v328
  %v370 = vpack.c.b16 %v331, %v330
  %v371 = vpack.c.b16 %v333, %v332
  %v372 = vpack.c.b16 %v335, %v334
  %v373 = vpack.c.b16 %v337, %v336
  %v374 = vpack.c.b16 %v339, %v338
  %v375 = vpack.c.b16 %v341, %v340
  %v376 = vpack.c.b16 %v343, %v342
  %v377 = vpack.c.b16 %v345, %v344
  %410 = vmatprep.subr.bf16.mxu0 0
  %411 = vmatpush1.bf16.msra.mxu0 %v353
  %412 = vmatprep.subr.bf16.mxu0 0
  %413 = vmatpush1.bf16.msra.mxu0 %v352
  %414 = vmatprep.subr.bf16.mxu0 0
  %415 = vmatpush1.bf16.msra.mxu0 %v351
  %416 = vmatprep.subr.bf16.mxu0 0
  %417 = vmatpush1.bf16.msra.mxu0 %v350
  %418 = vmatprep.subr.bf16.mxu0 0
  %419 = vmatpush1.bf16.msra.mxu0 %v349
  %420 = vmatprep.subr.bf16.mxu0 0
  %421 = vmatpush1.bf16.msra.mxu0 %v348
  %422 = vmatprep.subr.bf16.mxu0 0
  %423 = vmatpush1.bf16.msra.mxu0 %v347
  %424 = vmatprep.subr.bf16.mxu0 0
  %425 = vmatpush1.bf16.msra.mxu0 %v346
  %426 = vmatprep.subr.bf16.mxu0 0
  %427 = vmatpush2.bf16.msra.mxu0 %v361
  %428 = vmatprep.subr.bf16.mxu0 0
  %429 = vmatpush2.bf16.msra.mxu0 %v360
  %430 = vmatprep.subr.bf16.mxu0 0
  %431 = vmatpush2.bf16.msra.mxu0 %v359
  %432 = vmatprep.subr.bf16.mxu0 0
  %433 = vmatpush2.bf16.msra.mxu0 %v358
  %434 = vmatprep.subr.bf16.mxu0 0
  %435 = vmatpush2.bf16.msra.mxu0 %v357
  %436 = vmatprep.subr.bf16.mxu0 0
  %437 = vmatpush2.bf16.msra.mxu0 %v356
  %438 = vmatprep.subr.bf16.mxu0 0
  %439 = vmatpush2.bf16.msra.mxu0 %v355
  %440 = vmatprep.subr.bf16.mxu0 0
  %441 = vmatpush2.bf16.msra.mxu0 %v354
  %442 = vmatprep.mubr.bf16.mxu0 %v187
  %443 = vmatmul.mubr.bf16.gmra.mxu0 %v186
  %v444 = vpop.f32.mrf.mxu0
  %v445 = vadd.f32 %v112, %v444
  %v446 = vpop.f32.mrf.mxu0
  %v447 = vpop.f32.mrf.mxu0
  %v448 = vadd.f32 %v117, %v447
  %v449 = vpop.f32.mrf.mxu0
  %450 = vmatprep.mubr.bf16.mxu0 %v191
  %451 = vmatmul.mubr.bf16.gmra.mxu0 %v190
  %v452 = vpop.f32.mrf.mxu0
  %v453 = vadd.f32 %v122, %v452
  %v454 = vpop.f32.mrf.mxu0
  %v455 = vpop.f32.mrf.mxu0
  %v456 = vadd.f32 %v127, %v455
  %v457 = vpop.f32.mrf.mxu0
  %458 = vmatprep.mubr.bf16.mxu0 %v195
  %459 = vmatmul.mubr.bf16.gmra.mxu0 %v194
  %v460 = vpop.f32.mrf.mxu0
  %v461 = vadd.f32 %v132, %v460
  %v462 = vpop.f32.mrf.mxu0
  %v463 = vpop.f32.mrf.mxu0
  %v464 = vadd.f32 %v137, %v463
  %v465 = vpop.f32.mrf.mxu0
  %466 = vmatprep.mubr.bf16.mxu0 %v199
  %467 = vmatmul.mubr.bf16.gmra.mxu0 %v198
  %v468 = vpop.f32.mrf.mxu0
  %v469 = vadd.f32 %v142, %v468
  %v470 = vpop.f32.mrf.mxu0
  %v471 = vpop.f32.mrf.mxu0
  %v472 = vpop.f32.mrf.mxu0
  %473 = vdwg.mxu0
  %474 = vmatprep.subr.bf16.mxu0 0
  %475 = vmatpush1.bf16.msra.mxu0 %v369
  %476 = vmatprep.subr.bf16.mxu0 0
  %477 = vmatpush1.bf16.msra.mxu0 %v368
  %478 = vmatprep.subr.bf16.mxu0 0
  %479 = vmatpush1.bf16.msra.mxu0 %v367
  %480 = vmatprep.subr.bf16.mxu0 0
  %481 = vmatpush1.bf16.msra.mxu0 %v366
  %482 = vmatprep.subr.bf16.mxu0 0
  %483 = vmatpush1.bf16.msra.mxu0 %v365
  %484 = vmatprep.subr.bf16.mxu0 0
  %485 = vmatpush1.bf16.msra.mxu0 %v364
  %486 = vmatprep.subr.bf16.mxu0 0
  %487 = vmatpush1.bf16.msra.mxu0 %v363
  %488 = vmatprep.subr.bf16.mxu0 0
  %489 = vmatpush1.bf16.msra.mxu0 %v362
  %490 = vmatprep.subr.bf16.mxu0 0
  %491 = vmatpush2.bf16.msra.mxu0 %v377
  %492 = vmatprep.subr.bf16.mxu0 0
  %493 = vmatpush2.bf16.msra.mxu0 %v376
  %494 = vmatprep.subr.bf16.mxu0 0
  %495 = vmatpush2.bf16.msra.mxu0 %v375
  %496 = vmatprep.subr.bf16.mxu0 0
  %497 = vmatpush2.bf16.msra.mxu0 %v374
  %498 = vmatprep.subr.bf16.mxu0 0
  %499 = vmatpush2.bf16.msra.mxu0 %v373
  %500 = vmatprep.subr.bf16.mxu0 0
  %501 = vmatpush2.bf16.msra.mxu0 %v372
  %502 = vmatprep.subr.bf16.mxu0 0
  %503 = vmatpush2.bf16.msra.mxu0 %v371
  %504 = vmatprep.subr.bf16.mxu0 0
  %505 = vmatpush2.bf16.msra.mxu0 %v370
  %506 = vmatprep.mubr.bf16.mxu0 %v189
  %507 = vmatmul.mubr.bf16.gmra.mxu0 %v188
  %v508 = vpop.f32.mrf.mxu0
  %v509 = vadd.f32 %v445, %v508
  %v510 = vpop.f32.mrf.mxu0
  %v511 = vpop.f32.mrf.mxu0
  %v512 = vadd.f32 %v448, %v511
  %v513 = vpop.f32.mrf.mxu0
  %514 = vmatprep.mubr.bf16.mxu0 %v193
  %515 = vmatmul.mubr.bf16.gmra.mxu0 %v192
  %v516 = vpop.f32.mrf.mxu0
  %v517 = vadd.f32 %v453, %v516
  %v518 = vpop.f32.mrf.mxu0
  %v519 = vpop.f32.mrf.mxu0
  %v520 = vadd.f32 %v456, %v519
  %v521 = vpop.f32.mrf.mxu0
  %522 = vmatprep.mubr.bf16.mxu0 %v197
  %523 = vmatmul.mubr.bf16.gmra.mxu0 %v196
  %v524 = vpop.f32.mrf.mxu0
  %v525 = vadd.f32 %v461, %v524
  %v526 = vpop.f32.mrf.mxu0
  %v527 = vpop.f32.mrf.mxu0
  %v528 = vadd.f32 %v464, %v527
  %v529 = vpop.f32.mrf.mxu0
  %530 = vmatprep.mubr.bf16.mxu0 %v201
  %531 = vmatmul.mubr.bf16.gmra.mxu0 %v200
  %v532 = vpop.f32.mrf.mxu0
  %v533 = vadd.f32 %v469, %v532
  %v534 = vpop.f32.mrf.mxu0
  %v535 = vpop.f32.mrf.mxu0
  %v536 = vpop.f32.mrf.mxu0
  %537 = vdwg.mxu0
  %v538 = vld [vmem:[%s3] sm:$0xf]
  %v539 = vld [vmem:[%s3 + $0x4] sm:$0xf]
  %v540 = vld [vmem:[%s3 + $0x8] sm:$0xf]
  %v541 = vld [vmem:[%s3 + $0xc] sm:$0xf]
  %v542 = vld [vmem:[%s3 + $0x10] sm:$0xf]
  %v543 = vld [vmem:[%s3 + $0x14] sm:$0xf]
  %v544 = vld [vmem:[%s3 + $0x18] sm:$0xf]
  %v545 = vld [vmem:[%s3 + $0x1c] sm:$0xf]
  %v546 = vld [vmem:[%s3 + $0x20] sm:$0xf]
  %v547 = vld [vmem:[%s3 + $0x24] sm:$0xf]
  %v548 = vld [vmem:[%s3 + $0x28] sm:$0xf]
  %v549 = vld [vmem:[%s3 + $0x2c] sm:$0xf]
  %v550 = vld [vmem:[%s3 + $0x30] sm:$0xf]
  %v551 = vld [vmem:[%s3 + $0x34] sm:$0xf]
  %v552 = vld [vmem:[%s3 + $0x38] sm:$0xf]
  %v553 = vld [vmem:[%s3 + $0x3c] sm:$0xf]
  %v554 = vld [vmem:[%s3 + $0x40] sm:$0xf]
  %v555 = vld [vmem:[%s3 + $0x44] sm:$0xf]
  %v556 = vld [vmem:[%s3 + $0x48] sm:$0xf]
  %v557 = vld [vmem:[%s3 + $0x4c] sm:$0xf]
  %v558 = vld [vmem:[%s3 + $0x50] sm:$0xf]
  %v559 = vld [vmem:[%s3 + $0x54] sm:$0xf]
  %v560 = vld [vmem:[%s3 + $0x58] sm:$0xf]
  %v561 = vld [vmem:[%s3 + $0x5c] sm:$0xf]
  %v562 = vld [vmem:[%s3 + $0x60] sm:$0xf]
  %v563 = vld [vmem:[%s3 + $0x64] sm:$0xf]
  %v564 = vld [vmem:[%s3 + $0x68] sm:$0xf]
  %v565 = vld [vmem:[%s3 + $0x6c] sm:$0xf]
  %v566 = vld [vmem:[%s3 + $0x70] sm:$0xf]
  %v567 = vld [vmem:[%s3 + $0x74] sm:$0xf]
  %v568 = vld [vmem:[%s3 + $0x78] sm:$0xf]
  %v569 = vld [vmem:[%s3 + $0x7c] sm:$0xf]
  %v570 = vld [vmem:[%s3 + $0x80] sm:$0xf]
  %v571 = vld [vmem:[%s3 + $0x84] sm:$0xf]
  %v572 = vld [vmem:[%s3 + $0x88] sm:$0xf]
  %v573 = vld [vmem:[%s3 + $0x8c] sm:$0xf]
  %v574 = vld [vmem:[%s3 + $0x90] sm:$0xf]
  %v575 = vld [vmem:[%s3 + $0x94] sm:$0xf]
  %v576 = vld [vmem:[%s3 + $0x98] sm:$0xf]
  %v577 = vld [vmem:[%s3 + $0x9c] sm:$0xf]
  %v578 = vld [vmem:[%s3 + $0xa0] sm:$0xf]
  %v579 = vld [vmem:[%s3 + $0xa4] sm:$0xf]
  %v580 = vld [vmem:[%s3 + $0xa8] sm:$0xf]
  %v581 = vld [vmem:[%s3 + $0xac] sm:$0xf]
  %v582 = vld [vmem:[%s3 + $0xb0] sm:$0xf]
  %v583 = vld [vmem:[%s3 + $0xb4] sm:$0xf]
  %v584 = vld [vmem:[%s3 + $0xb8] sm:$0xf]
  %v585 = vld [vmem:[%s3 + $0xbc] sm:$0xf]
  %v586 = vld [vmem:[%s3 + $0xc0] sm:$0xf]
  %v587 = vld [vmem:[%s3 + $0xc4] sm:$0xf]
  %v588 = vld [vmem:[%s3 + $0xc8] sm:$0xf]
  %v589 = vld [vmem:[%s3 + $0xcc] sm:$0xf]
  %v590 = vld [vmem:[%s3 + $0xd0] sm:$0xf]
  %v591 = vld [vmem:[%s3 + $0xd4] sm:$0xf]
  %v592 = vld [vmem:[%s3 + $0xd8] sm:$0xf]
  %v593 = vld [vmem:[%s3 + $0xdc] sm:$0xf]
  %v594 = vld [vmem:[%s3 + $0xe0] sm:$0xf]
  %v595 = vld [vmem:[%s3 + $0xe4] sm:$0xf]
  %v596 = vld [vmem:[%s3 + $0xe8] sm:$0xf]
  %v597 = vld [vmem:[%s3 + $0xec] sm:$0xf]
  %v598 = vld [vmem:[%s3 + $0xf0] sm:$0xf]
  %v599 = vld [vmem:[%s3 + $0xf4] sm:$0xf]
  %v600 = vld [vmem:[%s3 + $0xf8] sm:$0xf]
  %v601 = vld [vmem:[%s3 + $0xfc] sm:$0xf]
  %v666 = vunpack.c.l.b16 %v538
  %v667 = vunpack.c.l.b16 %v539
  %v668 = vunpack.c.l.b16 %v540
  %v669 = vunpack.c.l.b16 %v541
  %v670 = vunpack.c.l.b16 %v542
  %v671 = vunpack.c.l.b16 %v543
  %v672 = vunpack.c.l.b16 %v544
  %v673 = vunpack.c.l.b16 %v545
  %v674 = vunpack.c.l.b16 %v546
  %v675 = vunpack.c.l.b16 %v547
  %v676 = vunpack.c.l.b16 %v548
  %v677 = vunpack.c.l.b16 %v549
  %v678 = vunpack.c.l.b16 %v550
  %v679 = vunpack.c.l.b16 %v551
  %v680 = vunpack.c.l.b16 %v552
  %v681 = vunpack.c.l.b16 %v553
  %v682 = vunpack.c.l.b16 %v554
  %v683 = vunpack.c.l.b16 %v555
  %v684 = vunpack.c.l.b16 %v556
  %v685 = vunpack.c.l.b16 %v557
  %v686 = vunpack.c.l.b16 %v558
  %v687 = vunpack.c.l.b16 %v559
  %v688 = vunpack.c.l.b16 %v560
  %v689 = vunpack.c.l.b16 %v561
  %v690 = vunpack.c.l.b16 %v562
  %v691 = vunpack.c.l.b16 %v563
  %v692 = vunpack.c.l.b16 %v564
  %v693 = vunpack.c.l.b16 %v565
  %v694 = vunpack.c.l.b16 %v566
  %v695 = vunpack.c.l.b16 %v567
  %v696 = vunpack.c.l.b16 %v568
  %v697 = vunpack.c.l.b16 %v569
  %v698 = vunpack.c.l.b16 %v570
  %v699 = vunpack.c.l.b16 %v571
  %v700 = vunpack.c.l.b16 %v572
  %v701 = vunpack.c.l.b16 %v573
  %v702 = vunpack.c.l.b16 %v574
  %v703 = vunpack.c.l.b16 %v575
  %v704 = vunpack.c.l.b16 %v576
  %v705 = vunpack.c.l.b16 %v577
  %v706 = vunpack.c.l.b16 %v578
  %v707 = vunpack.c.l.b16 %v579
  %v708 = vunpack.c.l.b16 %v580
  %v709 = vunpack.c.l.b16 %v581
  %v710 = vunpack.c.l.b16 %v582
  %v711 = vunpack.c.l.b16 %v583
  %v712 = vunpack.c.l.b16 %v584
  %v713 = vunpack.c.l.b16 %v585
  %v714 = vunpack.c.l.b16 %v586
  %v715 = vunpack.c.l.b16 %v587
  %v716 = vunpack.c.l.b16 %v588
  %v717 = vunpack.c.l.b16 %v589
  %v718 = vunpack.c.l.b16 %v590
  %v719 = vunpack.c.l.b16 %v591
  %v720 = vunpack.c.l.b16 %v592
  %v721 = vunpack.c.l.b16 %v593
  %v722 = vunpack.c.l.b16 %v594
  %v723 = vunpack.c.l.b16 %v595
  %v724 = vunpack.c.l.b16 %v596
  %v725 = vunpack.c.l.b16 %v597
  %v726 = vunpack.c.l.b16 %v598
  %v727 = vunpack.c.l.b16 %v599
  %v728 = vunpack.c.l.b16 %v600
  %v729 = vunpack.c.l.b16 %v601
  %v730 = vpack.c.b16 %v667, %v666
  %v731 = vpack.c.b16 %v669, %v668
  %v732 = vpack.c.b16 %v671, %v670
  %v733 = vpack.c.b16 %v673, %v672
  %v734 = vpack.c.b16 %v675, %v674
  %v735 = vpack.c.b16 %v677, %v676
  %v736 = vpack.c.b16 %v679, %v678
  %v737 = vpack.c.b16 %v681, %v680
  %v738 = vpack.c.b16 %v683, %v682
  %v739 = vpack.c.b16 %v685, %v684
  %v740 = vpack.c.b16 %v687, %v686
  %v741 = vpack.c.b16 %v689, %v688
  %v742 = vpack.c.b16 %v691, %v690
  %v743 = vpack.c.b16 %v693, %v692
  %v744 = vpack.c.b16 %v695, %v694
  %v745 = vpack.c.b16 %v697, %v696
  %v746 = vpack.c.b16 %v699, %v698
  %v747 = vpack.c.b16 %v701, %v700
  %v748 = vpack.c.b16 %v703, %v702
  %v749 = vpack.c.b16 %v705, %v704
  %v750 = vpack.c.b16 %v707, %v706
  %v751 = vpack.c.b16 %v709, %v708
  %v752 = vpack.c.b16 %v711, %v710
  %v753 = vpack.c.b16 %v713, %v712
  %v754 = vpack.c.b16 %v715, %v714
  %v755 = vpack.c.b16 %v717, %v716
  %v756 = vpack.c.b16 %v719, %v718
  %v757 = vpack.c.b16 %v721, %v720
  %v758 = vpack.c.b16 %v723, %v722
  %v759 = vpack.c.b16 %v725, %v724
  %v760 = vpack.c.b16 %v727, %v726
  %v761 = vpack.c.b16 %v729, %v728
  %794 = vmatprep.subr.bf16.mxu0 0
  %795 = vmatpush1.bf16.msra.mxu0 %v737
  %796 = vmatprep.subr.bf16.mxu0 0
  %797 = vmatpush1.bf16.msra.mxu0 %v736
  %798 = vmatprep.subr.bf16.mxu0 0
  %799 = vmatpush1.bf16.msra.mxu0 %v735
  %800 = vmatprep.subr.bf16.mxu0 0
  %801 = vmatpush1.bf16.msra.mxu0 %v734
  %802 = vmatprep.subr.bf16.mxu0 0
  %803 = vmatpush1.bf16.msra.mxu0 %v733
  %804 = vmatprep.subr.bf16.mxu0 0
  %805 = vmatpush1.bf16.msra.mxu0 %v732
  %806 = vmatprep.subr.bf16.mxu0 0
  %807 = vmatpush1.bf16.msra.mxu0 %v731
  %808 = vmatprep.subr.bf16.mxu0 0
  %809 = vmatpush1.bf16.msra.mxu0 %v730
  %810 = vmatprep.subr.bf16.mxu0 0
  %811 = vmatpush2.bf16.msra.mxu0 %v745
  %812 = vmatprep.subr.bf16.mxu0 0
  %813 = vmatpush2.bf16.msra.mxu0 %v744
  %814 = vmatprep.subr.bf16.mxu0 0
  %815 = vmatpush2.bf16.msra.mxu0 %v743
  %816 = vmatprep.subr.bf16.mxu0 0
  %817 = vmatpush2.bf16.msra.mxu0 %v742
  %818 = vmatprep.subr.bf16.mxu0 0
  %819 = vmatpush2.bf16.msra.mxu0 %v741
  %820 = vmatprep.subr.bf16.mxu0 0
  %821 = vmatpush2.bf16.msra.mxu0 %v740
  %822 = vmatprep.subr.bf16.mxu0 0
  %823 = vmatpush2.bf16.msra.mxu0 %v739
  %824 = vmatprep.subr.bf16.mxu0 0
  %825 = vmatpush2.bf16.msra.mxu0 %v738
  %826 = vmatprep.mubr.bf16.mxu0 %v187
  %827 = vmatmul.mubr.bf16.gmra.mxu0 %v186
  %v828 = vpop.f32.mrf.mxu0
  %v829 = vadd.f32 %v112, %v828
  %v830 = vpop.f32.mrf.mxu0
  %v831 = vpop.f32.mrf.mxu0
  %v832 = vadd.f32 %v117, %v831
  %v833 = vpop.f32.mrf.mxu0
  %834 = vmatprep.mubr.bf16.mxu0 %v191
  %835 = vmatmul.mubr.bf16.gmra.mxu0 %v190
  %v836 = vpop.f32.mrf.mxu0
  %v837 = vadd.f32 %v122, %v836
  %v838 = vpop.f32.mrf.mxu0
  %v839 = vpop.f32.mrf.mxu0
  %v840 = vadd.f32 %v127, %v839
  %v841 = vpop.f32.mrf.mxu0
  %842 = vmatprep.mubr.bf16.mxu0 %v195
  %843 = vmatmul.mubr.bf16.gmra.mxu0 %v194
  %v844 = vpop.f32.mrf.mxu0
  %v845 = vadd.f32 %v132, %v844
  %v846 = vpop.f32.mrf.mxu0
  %v847 = vpop.f32.mrf.mxu0
  %v848 = vadd.f32 %v137, %v847
  %v849 = vpop.f32.mrf.mxu0
  %850 = vmatprep.mubr.bf16.mxu0 %v199
  %851 = vmatmul.mubr.bf16.gmra.mxu0 %v198
  %v852 = vpop.f32.mrf.mxu0
  %v853 = vadd.f32 %v142, %v852
  %v854 = vpop.f32.mrf.mxu0
  %v855 = vpop.f32.mrf.mxu0
  %v856 = vpop.f32.mrf.mxu0
  %857 = vdwg.mxu0
  %858 = vmatprep.subr.bf16.mxu0 0
  %859 = vmatpush1.bf16.msra.mxu0 %v753
  %860 = vmatprep.subr.bf16.mxu0 0
  %861 = vmatpush1.bf16.msra.mxu0 %v752
  %862 = vmatprep.subr.bf16.mxu0 0
  %863 = vmatpush1.bf16.msra.mxu0 %v751
  %864 = vmatprep.subr.bf16.mxu0 0
  %865 = vmatpush1.bf16.msra.mxu0 %v750
  %866 = vmatprep.subr.bf16.mxu0 0
  %867 = vmatpush1.bf16.msra.mxu0 %v749
  %868 = vmatprep.subr.bf16.mxu0 0
  %869 = vmatpush1.bf16.msra.mxu0 %v748
  %870 = vmatprep.subr.bf16.mxu0 0
  %871 = vmatpush1.bf16.msra.mxu0 %v747
  %872 = vmatprep.subr.bf16.mxu0 0
  %873 = vmatpush1.bf16.msra.mxu0 %v746
  %874 = vmatprep.subr.bf16.mxu0 0
  %875 = vmatpush2.bf16.msra.mxu0 %v761
  %876 = vmatprep.subr.bf16.mxu0 0
  %877 = vmatpush2.bf16.msra.mxu0 %v760
  %878 = vmatprep.subr.bf16.mxu0 0
  %879 = vmatpush2.bf16.msra.mxu0 %v759
  %880 = vmatprep.subr.bf16.mxu0 0
  %881 = vmatpush2.bf16.msra.mxu0 %v758
  %882 = vmatprep.subr.bf16.mxu0 0
  %883 = vmatpush2.bf16.msra.mxu0 %v757
  %884 = vmatprep.subr.bf16.mxu0 0
  %885 = vmatpush2.bf16.msra.mxu0 %v756
  %886 = vmatprep.subr.bf16.mxu0 0
  %887 = vmatpush2.bf16.msra.mxu0 %v755
  %888 = vmatprep.subr.bf16.mxu0 0
  %889 = vmatpush2.bf16.msra.mxu0 %v754
  %890 = vmatprep.mubr.bf16.mxu0 %v189
  %891 = vmatmul.mubr.bf16.gmra.mxu0 %v188
  %v892 = vpop.f32.mrf.mxu0
  %v893 = vadd.f32 %v829, %v892
  %v894 = vpop.f32.mrf.mxu0
  %v895 = vpop.f32.mrf.mxu0
  %v896 = vadd.f32 %v832, %v895
  %v897 = vpop.f32.mrf.mxu0
  %898 = vmatprep.mubr.bf16.mxu0 %v193
  %899 = vmatmul.mubr.bf16.gmra.mxu0 %v192
  %v900 = vpop.f32.mrf.mxu0
  %v901 = vadd.f32 %v837, %v900
  %v902 = vpop.f32.mrf.mxu0
  %v903 = vpop.f32.mrf.mxu0
  %v904 = vadd.f32 %v840, %v903
  %v905 = vpop.f32.mrf.mxu0
  %906 = vmatprep.mubr.bf16.mxu0 %v197
  %907 = vmatmul.mubr.bf16.gmra.mxu0 %v196
  %v908 = vpop.f32.mrf.mxu0
  %v909 = vadd.f32 %v845, %v908
  %v910 = vpop.f32.mrf.mxu0
  %v911 = vpop.f32.mrf.mxu0
  %v912 = vadd.f32 %v848, %v911
  %v913 = vpop.f32.mrf.mxu0
  %914 = vmatprep.mubr.bf16.mxu0 %v201
  %915 = vmatmul.mubr.bf16.gmra.mxu0 %v200
  %v916 = vpop.f32.mrf.mxu0
  %v917 = vadd.f32 %v853, %v916
  %v918 = vpop.f32.mrf.mxu0
  %v919 = vpop.f32.mrf.mxu0
  %v920 = vpop.f32.mrf.mxu0
  %921 = vdwg.mxu0
  %v922 = vmax.f32 %v509, %v893
  %v923 = vmax.f32 %v512, %v896
  %v924 = vmax.f32 %v517, %v901
  %v925 = vmax.f32 %v520, %v904
  %v926 = vmax.f32 %v525, %v909
  %v927 = vmax.f32 %v528, %v912
  %v928 = vmax.f32 %v533, %v917
  %v929 = vld [vmem:[%s4] sm:$0xf]
  %v930 = vld [vmem:[%s4 + $0x4] sm:$0xf]
  %v931 = vld [vmem:[%s4 + $0x8] sm:$0xf]
  %v932 = vld [vmem:[%s4 + $0xc] sm:$0xf]
  %v933 = vld [vmem:[%s4 + $0x10] sm:$0xf]
  %v934 = vld [vmem:[%s4 + $0x14] sm:$0xf]
  %v935 = vld [vmem:[%s4 + $0x18] sm:$0xf]
  %v936 = vld [vmem:[%s4 + $0x1c] sm:$0xf]
  %v937 = vld [vmem:[%s4 + $0x20] sm:$0xf]
  %v938 = vld [vmem:[%s4 + $0x24] sm:$0xf]
  %v939 = vld [vmem:[%s4 + $0x28] sm:$0xf]
  %v940 = vld [vmem:[%s4 + $0x2c] sm:$0xf]
  %v941 = vld [vmem:[%s4 + $0x30] sm:$0xf]
  %v942 = vld [vmem:[%s4 + $0x34] sm:$0xf]
  %v943 = vld [vmem:[%s4 + $0x38] sm:$0xf]
  %v944 = vld [vmem:[%s4 + $0x3c] sm:$0xf]
  %v945 = vld [vmem:[%s4 + $0x40] sm:$0xf]
  %v946 = vld [vmem:[%s4 + $0x44] sm:$0xf]
  %v947 = vld [vmem:[%s4 + $0x48] sm:$0xf]
  %v948 = vld [vmem:[%s4 + $0x4c] sm:$0xf]
  %v949 = vld [vmem:[%s4 + $0x50] sm:$0xf]
  %v950 = vld [vmem:[%s4 + $0x54] sm:$0xf]
  %v951 = vld [vmem:[%s4 + $0x58] sm:$0xf]
  %v952 = vld [vmem:[%s4 + $0x5c] sm:$0xf]
  %v953 = vld [vmem:[%s4 + $0x60] sm:$0xf]
  %v954 = vld [vmem:[%s4 + $0x64] sm:$0xf]
  %v955 = vld [vmem:[%s4 + $0x68] sm:$0xf]
  %v956 = vld [vmem:[%s4 + $0x6c] sm:$0xf]
  %v957 = vld [vmem:[%s4 + $0x70] sm:$0xf]
  %v958 = vld [vmem:[%s4 + $0x74] sm:$0xf]
  %v959 = vld [vmem:[%s4 + $0x78] sm:$0xf]
  %v960 = vld [vmem:[%s4 + $0x7c] sm:$0xf]
  %v961 = vld [vmem:[%s4 + $0x80] sm:$0xf]
  %v962 = vld [vmem:[%s4 + $0x84] sm:$0xf]
  %v963 = vld [vmem:[%s4 + $0x88] sm:$0xf]
  %v964 = vld [vmem:[%s4 + $0x8c] sm:$0xf]
  %v965 = vld [vmem:[%s4 + $0x90] sm:$0xf]
  %v966 = vld [vmem:[%s4 + $0x94] sm:$0xf]
  %v967 = vld [vmem:[%s4 + $0x98] sm:$0xf]
  %v968 = vld [vmem:[%s4 + $0x9c] sm:$0xf]
  %v969 = vld [vmem:[%s4 + $0xa0] sm:$0xf]
  %v970 = vld [vmem:[%s4 + $0xa4] sm:$0xf]
  %v971 = vld [vmem:[%s4 + $0xa8] sm:$0xf]
  %v972 = vld [vmem:[%s4 + $0xac] sm:$0xf]
  %v973 = vld [vmem:[%s4 + $0xb0] sm:$0xf]
  %v974 = vld [vmem:[%s4 + $0xb4] sm:$0xf]
  %v975 = vld [vmem:[%s4 + $0xb8] sm:$0xf]
  %v976 = vld [vmem:[%s4 + $0xbc] sm:$0xf]
  %v977 = vld [vmem:[%s4 + $0xc0] sm:$0xf]
  %v978 = vld [vmem:[%s4 + $0xc4] sm:$0xf]
  %v979 = vld [vmem:[%s4 + $0xc8] sm:$0xf]
  %v980 = vld [vmem:[%s4 + $0xcc] sm:$0xf]
  %v981 = vld [vmem:[%s4 + $0xd0] sm:$0xf]
  %v982 = vld [vmem:[%s4 + $0xd4] sm:$0xf]
  %v983 = vld [vmem:[%s4 + $0xd8] sm:$0xf]
  %v984 = vld [vmem:[%s4 + $0xdc] sm:$0xf]
  %v985 = vld [vmem:[%s4 + $0xe0] sm:$0xf]
  %v986 = vld [vmem:[%s4 + $0xe4] sm:$0xf]
  %v987 = vld [vmem:[%s4 + $0xe8] sm:$0xf]
  %v988 = vld [vmem:[%s4 + $0xec] sm:$0xf]
  %v989 = vld [vmem:[%s4 + $0xf0] sm:$0xf]
  %v990 = vld [vmem:[%s4 + $0xf4] sm:$0xf]
  %v991 = vld [vmem:[%s4 + $0xf8] sm:$0xf]
  %v992 = vld [vmem:[%s4 + $0xfc] sm:$0xf]
  %v1057 = vunpack.c.l.b16 %v929
  %v1058 = vunpack.c.l.b16 %v930
  %v1059 = vunpack.c.l.b16 %v931
  %v1060 = vunpack.c.l.b16 %v932
  %v1061 = vunpack.c.l.b16 %v933
  %v1062 = vunpack.c.l.b16 %v934
  %v1063 = vunpack.c.l.b16 %v935
  %v1064 = vunpack.c.l.b16 %v936
  %v1065 = vunpack.c.l.b16 %v937
  %v1066 = vunpack.c.l.b16 %v938
  %v1067 = vunpack.c.l.b16 %v939
  %v1068 = vunpack.c.l.b16 %v940
  %v1069 = vunpack.c.l.b16 %v941
  %v1070 = vunpack.c.l.b16 %v942
  %v1071 = vunpack.c.l.b16 %v943
  %v1072 = vunpack.c.l.b16 %v944
  %v1073 = vunpack.c.l.b16 %v945
  %v1074 = vunpack.c.l.b16 %v946
  %v1075 = vunpack.c.l.b16 %v947
  %v1076 = vunpack.c.l.b16 %v948
  %v1077 = vunpack.c.l.b16 %v949
  %v1078 = vunpack.c.l.b16 %v950
  %v1079 = vunpack.c.l.b16 %v951
  %v1080 = vunpack.c.l.b16 %v952
  %v1081 = vunpack.c.l.b16 %v953
  %v1082 = vunpack.c.l.b16 %v954
  %v1083 = vunpack.c.l.b16 %v955
  %v1084 = vunpack.c.l.b16 %v956
  %v1085 = vunpack.c.l.b16 %v957
  %v1086 = vunpack.c.l.b16 %v958
  %v1087 = vunpack.c.l.b16 %v959
  %v1088 = vunpack.c.l.b16 %v960
  %v1089 = vunpack.c.l.b16 %v961
  %v1090 = vunpack.c.l.b16 %v962
  %v1091 = vunpack.c.l.b16 %v963
  %v1092 = vunpack.c.l.b16 %v964
  %v1093 = vunpack.c.l.b16 %v965
  %v1094 = vunpack.c.l.b16 %v966
  %v1095 = vunpack.c.l.b16 %v967
  %v1096 = vunpack.c.l.b16 %v968
  %v1097 = vunpack.c.l.b16 %v969
  %v1098 = vunpack.c.l.b16 %v970
  %v1099 = vunpack.c.l.b16 %v971
  %v1100 = vunpack.c.l.b16 %v972
  %v1101 = vunpack.c.l.b16 %v973
  %v1102 = vunpack.c.l.b16 %v974
  %v1103 = vunpack.c.l.b16 %v975
  %v1104 = vunpack.c.l.b16 %v976
  %v1105 = vunpack.c.l.b16 %v977
  %v1106 = vunpack.c.l.b16 %v978
  %v1107 = vunpack.c.l.b16 %v979
  %v1108 = vunpack.c.l.b16 %v980
  %v1109 = vunpack.c.l.b16 %v981
  %v1110 = vunpack.c.l.b16 %v982
  %v1111 = vunpack.c.l.b16 %v983
  %v1112 = vunpack.c.l.b16 %v984
  %v1113 = vunpack.c.l.b16 %v985
  %v1114 = vunpack.c.l.b16 %v986
  %v1115 = vunpack.c.l.b16 %v987
  %v1116 = vunpack.c.l.b16 %v988
  %v1117 = vunpack.c.l.b16 %v989
  %v1118 = vunpack.c.l.b16 %v990
  %v1119 = vunpack.c.l.b16 %v991
  %v1120 = vunpack.c.l.b16 %v992
  %v1121 = vpack.c.b16 %v1058, %v1057
  %v1122 = vpack.c.b16 %v1060, %v1059
  %v1123 = vpack.c.b16 %v1062, %v1061
  %v1124 = vpack.c.b16 %v1064, %v1063
  %v1125 = vpack.c.b16 %v1066, %v1065
  %v1126 = vpack.c.b16 %v1068, %v1067
  %v1127 = vpack.c.b16 %v1070, %v1069
  %v1128 = vpack.c.b16 %v1072, %v1071
  %v1129 = vpack.c.b16 %v1074, %v1073
  %v1130 = vpack.c.b16 %v1076, %v1075
  %v1131 = vpack.c.b16 %v1078, %v1077
  %v1132 = vpack.c.b16 %v1080, %v1079
  %v1133 = vpack.c.b16 %v1082, %v1081
  %v1134 = vpack.c.b16 %v1084, %v1083
  %v1135 = vpack.c.b16 %v1086, %v1085
  %v1136 = vpack.c.b16 %v1088, %v1087
  %v1137 = vpack.c.b16 %v1090, %v1089
  %v1138 = vpack.c.b16 %v1092, %v1091
  %v1139 = vpack.c.b16 %v1094, %v1093
  %v1140 = vpack.c.b16 %v1096, %v1095
  %v1141 = vpack.c.b16 %v1098, %v1097
  %v1142 = vpack.c.b16 %v1100, %v1099
  %v1143 = vpack.c.b16 %v1102, %v1101
  %v1144 = vpack.c.b16 %v1104, %v1103
  %v1145 = vpack.c.b16 %v1106, %v1105
  %v1146 = vpack.c.b16 %v1108, %v1107
  %v1147 = vpack.c.b16 %v1110, %v1109
  %v1148 = vpack.c.b16 %v1112, %v1111
  %v1149 = vpack.c.b16 %v1114, %v1113
  %v1150 = vpack.c.b16 %v1116, %v1115
  %v1151 = vpack.c.b16 %v1118, %v1117
  %v1152 = vpack.c.b16 %v1120, %v1119
  %1185 = vmatprep.subr.bf16.mxu0 0
  %1186 = vmatpush1.bf16.msra.mxu0 %v1128
  %1187 = vmatprep.subr.bf16.mxu0 0
  %1188 = vmatpush1.bf16.msra.mxu0 %v1127
  %1189 = vmatprep.subr.bf16.mxu0 0
  %1190 = vmatpush1.bf16.msra.mxu0 %v1126
  %1191 = vmatprep.subr.bf16.mxu0 0
  %1192 = vmatpush1.bf16.msra.mxu0 %v1125
  %1193 = vmatprep.subr.bf16.mxu0 0
  %1194 = vmatpush1.bf16.msra.mxu0 %v1124
  %1195 = vmatprep.subr.bf16.mxu0 0
  %1196 = vmatpush1.bf16.msra.mxu0 %v1123
  %1197 = vmatprep.subr.bf16.mxu0 0
  %1198 = vmatpush1.bf16.msra.mxu0 %v1122
  %1199 = vmatprep.subr.bf16.mxu0 0
  %1200 = vmatpush1.bf16.msra.mxu0 %v1121
  %1201 = vmatprep.subr.bf16.mxu0 0
  %1202 = vmatpush2.bf16.msra.mxu0 %v1136
  %1203 = vmatprep.subr.bf16.mxu0 0
  %1204 = vmatpush2.bf16.msra.mxu0 %v1135
  %1205 = vmatprep.subr.bf16.mxu0 0
  %1206 = vmatpush2.bf16.msra.mxu0 %v1134
  %1207 = vmatprep.subr.bf16.mxu0 0
  %1208 = vmatpush2.bf16.msra.mxu0 %v1133
  %1209 = vmatprep.subr.bf16.mxu0 0
  %1210 = vmatpush2.bf16.msra.mxu0 %v1132
  %1211 = vmatprep.subr.bf16.mxu0 0
  %1212 = vmatpush2.bf16.msra.mxu0 %v1131
  %1213 = vmatprep.subr.bf16.mxu0 0
  %1214 = vmatpush2.bf16.msra.mxu0 %v1130
  %1215 = vmatprep.subr.bf16.mxu0 0
  %1216 = vmatpush2.bf16.msra.mxu0 %v1129
  %1217 = vmatprep.mubr.bf16.mxu0 %v187
  %1218 = vmatmul.mubr.bf16.gmra.mxu0 %v186
  %v1219 = vpop.f32.mrf.mxu0
  %v1220 = vadd.f32 %v112, %v1219
  %v1221 = vpop.f32.mrf.mxu0
  %v1222 = vpop.f32.mrf.mxu0
  %v1223 = vadd.f32 %v117, %v1222
  %v1224 = vpop.f32.mrf.mxu0
  %1225 = vmatprep.mubr.bf16.mxu0 %v191
  %1226 = vmatmul.mubr.bf16.gmra.mxu0 %v190
  %v1227 = vpop.f32.mrf.mxu0
  %v1228 = vadd.f32 %v122, %v1227
  %v1229 = vpop.f32.mrf.mxu0
  %v1230 = vpop.f32.mrf.mxu0
  %v1231 = vadd.f32 %v127, %v1230
  %v1232 = vpop.f32.mrf.mxu0
  %1233 = vmatprep.mubr.bf16.mxu0 %v195
  %1234 = vmatmul.mubr.bf16.gmra.mxu0 %v194
  %v1235 = vpop.f32.mrf.mxu0
  %v1236 = vadd.f32 %v132, %v1235
  %v1237 = vpop.f32.mrf.mxu0
  %v1238 = vpop.f32.mrf.mxu0
  %v1239 = vadd.f32 %v137, %v1238
  %v1240 = vpop.f32.mrf.mxu0
  %1241 = vmatprep.mubr.bf16.mxu0 %v199
  %1242 = vmatmul.mubr.bf16.gmra.mxu0 %v198
  %v1243 = vpop.f32.mrf.mxu0
  %v1244 = vadd.f32 %v142, %v1243
  %v1245 = vpop.f32.mrf.mxu0
  %v1246 = vpop.f32.mrf.mxu0
  %v1247 = vpop.f32.mrf.mxu0
  %1248 = vdwg.mxu0
  %1249 = vmatprep.subr.bf16.mxu0 0
  %1250 = vmatpush1.bf16.msra.mxu0 %v1144
  %1251 = vmatprep.subr.bf16.mxu0 0
  %1252 = vmatpush1.bf16.msra.mxu0 %v1143
  %1253 = vmatprep.subr.bf16.mxu0 0
  %1254 = vmatpush1.bf16.msra.mxu0 %v1142
  %1255 = vmatprep.subr.bf16.mxu0 0
  %1256 = vmatpush1.bf16.msra.mxu0 %v1141
  %1257 = vmatprep.subr.bf16.mxu0 0
  %1258 = vmatpush1.bf16.msra.mxu0 %v1140
  %1259 = vmatprep.subr.bf16.mxu0 0
  %1260 = vmatpush1.bf16.msra.mxu0 %v1139
  %1261 = vmatprep.subr.bf16.mxu0 0
  %1262 = vmatpush1.bf16.msra.mxu0 %v1138
  %1263 = vmatprep.subr.bf16.mxu0 0
  %1264 = vmatpush1.bf16.msra.mxu0 %v1137
  %1265 = vmatprep.subr.bf16.mxu0 0
  %1266 = vmatpush2.bf16.msra.mxu0 %v1152
  %1267 = vmatprep.subr.bf16.mxu0 0
  %1268 = vmatpush2.bf16.msra.mxu0 %v1151
  %1269 = vmatprep.subr.bf16.mxu0 0
  %1270 = vmatpush2.bf16.msra.mxu0 %v1150
  %1271 = vmatprep.subr.bf16.mxu0 0
  %1272 = vmatpush2.bf16.msra.mxu0 %v1149
  %1273 = vmatprep.subr.bf16.mxu0 0
  %1274 = vmatpush2.bf16.msra.mxu0 %v1148
  %1275 = vmatprep.subr.bf16.mxu0 0
  %1276 = vmatpush2.bf16.msra.mxu0 %v1147
  %1277 = vmatprep.subr.bf16.mxu0 0
  %1278 = vmatpush2.bf16.msra.mxu0 %v1146
  %1279 = vmatprep.subr.bf16.mxu0 0
  %1280 = vmatpush2.bf16.msra.mxu0 %v1145
  %1281 = vmatprep.mubr.bf16.mxu0 %v189
  %1282 = vmatmul.mubr.bf16.gmra.mxu0 %v188
  %v1283 = vpop.f32.mrf.mxu0
  %v1284 = vadd.f32 %v1220, %v1283
  %v1285 = vpop.f32.mrf.mxu0
  %v1286 = vpop.f32.mrf.mxu0
  %v1287 = vadd.f32 %v1223, %v1286
  %v1288 = vpop.f32.mrf.mxu0
  %1289 = vmatprep.mubr.bf16.mxu0 %v193
  %1290 = vmatmul.mubr.bf16.gmra.mxu0 %v192
  %v1291 = vpop.f32.mrf.mxu0
  %v1292 = vadd.f32 %v1228, %v1291
  %v1293 = vpop.f32.mrf.mxu0
  %v1294 = vpop.f32.mrf.mxu0
  %v1295 = vadd.f32 %v1231, %v1294
  %v1296 = vpop.f32.mrf.mxu0
  %1297 = vmatprep.mubr.bf16.mxu0 %v197
  %1298 = vmatmul.mubr.bf16.gmra.mxu0 %v196
  %v1299 = vpop.f32.mrf.mxu0
  %v1300 = vadd.f32 %v1236, %v1299
  %v1301 = vpop.f32.mrf.mxu0
  %v1302 = vpop.f32.mrf.mxu0
  %v1303 = vadd.f32 %v1239, %v1302
  %v1304 = vpop.f32.mrf.mxu0
  %1305 = vmatprep.mubr.bf16.mxu0 %v201
  %1306 = vmatmul.mubr.bf16.gmra.mxu0 %v200
  %v1307 = vpop.f32.mrf.mxu0
  %v1308 = vadd.f32 %v1244, %v1307
  %v1309 = vpop.f32.mrf.mxu0
  %v1310 = vpop.f32.mrf.mxu0
  %v1311 = vpop.f32.mrf.mxu0
  %1312 = vdwg.mxu0
  %v1313 = vld [vmem:[%s5] sm:$0xf]
  %v1314 = vld [vmem:[%s5 + $0x4] sm:$0xf]
  %v1315 = vld [vmem:[%s5 + $0x8] sm:$0xf]
  %v1316 = vld [vmem:[%s5 + $0xc] sm:$0xf]
  %v1317 = vld [vmem:[%s5 + $0x10] sm:$0xf]
  %v1318 = vld [vmem:[%s5 + $0x14] sm:$0xf]
  %v1319 = vld [vmem:[%s5 + $0x18] sm:$0xf]
  %v1320 = vld [vmem:[%s5 + $0x1c] sm:$0xf]
  %v1321 = vld [vmem:[%s5 + $0x20] sm:$0xf]
  %v1322 = vld [vmem:[%s5 + $0x24] sm:$0xf]
  %v1323 = vld [vmem:[%s5 + $0x28] sm:$0xf]
  %v1324 = vld [vmem:[%s5 + $0x2c] sm:$0xf]
  %v1325 = vld [vmem:[%s5 + $0x30] sm:$0xf]
  %v1326 = vld [vmem:[%s5 + $0x34] sm:$0xf]
  %v1327 = vld [vmem:[%s5 + $0x38] sm:$0xf]
  %v1328 = vld [vmem:[%s5 + $0x3c] sm:$0xf]
  %v1329 = vld [vmem:[%s5 + $0x40] sm:$0xf]
  %v1330 = vld [vmem:[%s5 + $0x44] sm:$0xf]
  %v1331 = vld [vmem:[%s5 + $0x48] sm:$0xf]
  %v1332 = vld [vmem:[%s5 + $0x4c] sm:$0xf]
  %v1333 = vld [vmem:[%s5 + $0x50] sm:$0xf]
  %v1334 = vld [vmem:[%s5 + $0x54] sm:$0xf]
  %v1335 = vld [vmem:[%s5 + $0x58] sm:$0xf]
  %v1336 = vld [vmem:[%s5 + $0x5c] sm:$0xf]
  %v1337 = vld [vmem:[%s5 + $0x60] sm:$0xf]
  %v1338 = vld [vmem:[%s5 + $0x64] sm:$0xf]
  %v1339 = vld [vmem:[%s5 + $0x68] sm:$0xf]
  %v1340 = vld [vmem:[%s5 + $0x6c] sm:$0xf]
  %v1341 = vld [vmem:[%s5 + $0x70] sm:$0xf]
  %v1342 = vld [vmem:[%s5 + $0x74] sm:$0xf]
  %v1343 = vld [vmem:[%s5 + $0x78] sm:$0xf]
  %v1344 = vld [vmem:[%s5 + $0x7c] sm:$0xf]
  %v1345 = vld [vmem:[%s5 + $0x80] sm:$0xf]
  %v1346 = vld [vmem:[%s5 + $0x84] sm:$0xf]
  %v1347 = vld [vmem:[%s5 + $0x88] sm:$0xf]
  %v1348 = vld [vmem:[%s5 + $0x8c] sm:$0xf]
  %v1349 = vld [vmem:[%s5 + $0x90] sm:$0xf]
  %v1350 = vld [vmem:[%s5 + $0x94] sm:$0xf]
  %v1351 = vld [vmem:[%s5 + $0x98] sm:$0xf]
  %v1352 = vld [vmem:[%s5 + $0x9c] sm:$0xf]
  %v1353 = vld [vmem:[%s5 + $0xa0] sm:$0xf]
  %v1354 = vld [vmem:[%s5 + $0xa4] sm:$0xf]
  %v1355 = vld [vmem:[%s5 + $0xa8] sm:$0xf]
  %v1356 = vld [vmem:[%s5 + $0xac] sm:$0xf]
  %v1357 = vld [vmem:[%s5 + $0xb0] sm:$0xf]
  %v1358 = vld [vmem:[%s5 + $0xb4] sm:$0xf]
  %v1359 = vld [vmem:[%s5 + $0xb8] sm:$0xf]
  %v1360 = vld [vmem:[%s5 + $0xbc] sm:$0xf]
  %v1361 = vld [vmem:[%s5 + $0xc0] sm:$0xf]
  %v1362 = vld [vmem:[%s5 + $0xc4] sm:$0xf]
  %v1363 = vld [vmem:[%s5 + $0xc8] sm:$0xf]
  %v1364 = vld [vmem:[%s5 + $0xcc] sm:$0xf]
  %v1365 = vld [vmem:[%s5 + $0xd0] sm:$0xf]
  %v1366 = vld [vmem:[%s5 + $0xd4] sm:$0xf]
  %v1367 = vld [vmem:[%s5 + $0xd8] sm:$0xf]
  %v1368 = vld [vmem:[%s5 + $0xdc] sm:$0xf]
  %v1369 = vld [vmem:[%s5 + $0xe0] sm:$0xf]
  %v1370 = vld [vmem:[%s5 + $0xe4] sm:$0xf]
  %v1371 = vld [vmem:[%s5 + $0xe8] sm:$0xf]
  %v1372 = vld [vmem:[%s5 + $0xec] sm:$0xf]
  %v1373 = vld [vmem:[%s5 + $0xf0] sm:$0xf]
  %v1374 = vld [vmem:[%s5 + $0xf4] sm:$0xf]
  %v1375 = vld [vmem:[%s5 + $0xf8] sm:$0xf]
  %v1376 = vld [vmem:[%s5 + $0xfc] sm:$0xf]
  %v1441 = vunpack.c.l.b16 %v1313
  %v1442 = vunpack.c.l.b16 %v1314
  %v1443 = vunpack.c.l.b16 %v1315
  %v1444 = vunpack.c.l.b16 %v1316
  %v1445 = vunpack.c.l.b16 %v1317
  %v1446 = vunpack.c.l.b16 %v1318
  %v1447 = vunpack.c.l.b16 %v1319
  %v1448 = vunpack.c.l.b16 %v1320
  %v1449 = vunpack.c.l.b16 %v1321
  %v1450 = vunpack.c.l.b16 %v1322
  %v1451 = vunpack.c.l.b16 %v1323
  %v1452 = vunpack.c.l.b16 %v1324
  %v1453 = vunpack.c.l.b16 %v1325
  %v1454 = vunpack.c.l.b16 %v1326
  %v1455 = vunpack.c.l.b16 %v1327
  %v1456 = vunpack.c.l.b16 %v1328
  %v1457 = vunpack.c.l.b16 %v1329
  %v1458 = vunpack.c.l.b16 %v1330
  %v1459 = vunpack.c.l.b16 %v1331
  %v1460 = vunpack.c.l.b16 %v1332
  %v1461 = vunpack.c.l.b16 %v1333
  %v1462 = vunpack.c.l.b16 %v1334
  %v1463 = vunpack.c.l.b16 %v1335
  %v1464 = vunpack.c.l.b16 %v1336
  %v1465 = vunpack.c.l.b16 %v1337
  %v1466 = vunpack.c.l.b16 %v1338
  %v1467 = vunpack.c.l.b16 %v1339
  %v1468 = vunpack.c.l.b16 %v1340
  %v1469 = vunpack.c.l.b16 %v1341
  %v1470 = vunpack.c.l.b16 %v1342
  %v1471 = vunpack.c.l.b16 %v1343
  %v1472 = vunpack.c.l.b16 %v1344
  %v1473 = vunpack.c.l.b16 %v1345
  %v1474 = vunpack.c.l.b16 %v1346
  %v1475 = vunpack.c.l.b16 %v1347
  %v1476 = vunpack.c.l.b16 %v1348
  %v1477 = vunpack.c.l.b16 %v1349
  %v1478 = vunpack.c.l.b16 %v1350
  %v1479 = vunpack.c.l.b16 %v1351
  %v1480 = vunpack.c.l.b16 %v1352
  %v1481 = vunpack.c.l.b16 %v1353
  %v1482 = vunpack.c.l.b16 %v1354
  %v1483 = vunpack.c.l.b16 %v1355
  %v1484 = vunpack.c.l.b16 %v1356
  %v1485 = vunpack.c.l.b16 %v1357
  %v1486 = vunpack.c.l.b16 %v1358
  %v1487 = vunpack.c.l.b16 %v1359
  %v1488 = vunpack.c.l.b16 %v1360
  %v1489 = vunpack.c.l.b16 %v1361
  %v1490 = vunpack.c.l.b16 %v1362
  %v1491 = vunpack.c.l.b16 %v1363
  %v1492 = vunpack.c.l.b16 %v1364
  %v1493 = vunpack.c.l.b16 %v1365
  %v1494 = vunpack.c.l.b16 %v1366
  %v1495 = vunpack.c.l.b16 %v1367
  %v1496 = vunpack.c.l.b16 %v1368
  %v1497 = vunpack.c.l.b16 %v1369
  %v1498 = vunpack.c.l.b16 %v1370
  %v1499 = vunpack.c.l.b16 %v1371
  %v1500 = vunpack.c.l.b16 %v1372
  %v1501 = vunpack.c.l.b16 %v1373
  %v1502 = vunpack.c.l.b16 %v1374
  %v1503 = vunpack.c.l.b16 %v1375
  %v1504 = vunpack.c.l.b16 %v1376
  %v1505 = vpack.c.b16 %v1442, %v1441
  %v1506 = vpack.c.b16 %v1444, %v1443
  %v1507 = vpack.c.b16 %v1446, %v1445
  %v1508 = vpack.c.b16 %v1448, %v1447
  %v1509 = vpack.c.b16 %v1450, %v1449
  %v1510 = vpack.c.b16 %v1452, %v1451
  %v1511 = vpack.c.b16 %v1454, %v1453
  %v1512 = vpack.c.b16 %v1456, %v1455
  %v1513 = vpack.c.b16 %v1458, %v1457
  %v1514 = vpack.c.b16 %v1460, %v1459
  %v1515 = vpack.c.b16 %v1462, %v1461
  %v1516 = vpack.c.b16 %v1464, %v1463
  %v1517 = vpack.c.b16 %v1466, %v1465
  %v1518 = vpack.c.b16 %v1468, %v1467
  %v1519 = vpack.c.b16 %v1470, %v1469
  %v1520 = vpack.c.b16 %v1472, %v1471
  %v1521 = vpack.c.b16 %v1474, %v1473
  %v1522 = vpack.c.b16 %v1476, %v1475
  %v1523 = vpack.c.b16 %v1478, %v1477
  %v1524 = vpack.c.b16 %v1480, %v1479
  %v1525 = vpack.c.b16 %v1482, %v1481
  %v1526 = vpack.c.b16 %v1484, %v1483
  %v1527 = vpack.c.b16 %v1486, %v1485
  %v1528 = vpack.c.b16 %v1488, %v1487
  %v1529 = vpack.c.b16 %v1490, %v1489
  %v1530 = vpack.c.b16 %v1492, %v1491
  %v1531 = vpack.c.b16 %v1494, %v1493
  %v1532 = vpack.c.b16 %v1496, %v1495
  %v1533 = vpack.c.b16 %v1498, %v1497
  %v1534 = vpack.c.b16 %v1500, %v1499
  %v1535 = vpack.c.b16 %v1502, %v1501
  %v1536 = vpack.c.b16 %v1504, %v1503
  %1569 = vmatprep.subr.bf16.mxu0 0
  %1570 = vmatpush1.bf16.msra.mxu0 %v1512
  %1571 = vmatprep.subr.bf16.mxu0 0
  %1572 = vmatpush1.bf16.msra.mxu0 %v1511
  %1573 = vmatprep.subr.bf16.mxu0 0
  %1574 = vmatpush1.bf16.msra.mxu0 %v1510
  %1575 = vmatprep.subr.bf16.mxu0 0
  %1576 = vmatpush1.bf16.msra.mxu0 %v1509
  %1577 = vmatprep.subr.bf16.mxu0 0
  %1578 = vmatpush1.bf16.msra.mxu0 %v1508
  %1579 = vmatprep.subr.bf16.mxu0 0
  %1580 = vmatpush1.bf16.msra.mxu0 %v1507
  %1581 = vmatprep.subr.bf16.mxu0 0
  %1582 = vmatpush1.bf16.msra.mxu0 %v1506
  %1583 = vmatprep.subr.bf16.mxu0 0
  %1584 = vmatpush1.bf16.msra.mxu0 %v1505
  %1585 = vmatprep.subr.bf16.mxu0 0
  %1586 = vmatpush2.bf16.msra.mxu0 %v1520
  %1587 = vmatprep.subr.bf16.mxu0 0
  %1588 = vmatpush2.bf16.msra.mxu0 %v1519
  %1589 = vmatprep.subr.bf16.mxu0 0
  %1590 = vmatpush2.bf16.msra.mxu0 %v1518
  %1591 = vmatprep.subr.bf16.mxu0 0
  %1592 = vmatpush2.bf16.msra.mxu0 %v1517
  %1593 = vmatprep.subr.bf16.mxu0 0
  %1594 = vmatpush2.bf16.msra.mxu0 %v1516
  %1595 = vmatprep.subr.bf16.mxu0 0
  %1596 = vmatpush2.bf16.msra.mxu0 %v1515
  %1597 = vmatprep.subr.bf16.mxu0 0
  %1598 = vmatpush2.bf16.msra.mxu0 %v1514
  %1599 = vmatprep.subr.bf16.mxu0 0
  %1600 = vmatpush2.bf16.msra.mxu0 %v1513
  %1601 = vmatprep.mubr.bf16.mxu0 %v187
  %1602 = vmatmul.mubr.bf16.gmra.mxu0 %v186
  %v1603 = vpop.f32.mrf.mxu0
  %v1604 = vadd.f32 %v112, %v1603
  %v1605 = vpop.f32.mrf.mxu0
  %v1606 = vpop.f32.mrf.mxu0
  %v1607 = vadd.f32 %v117, %v1606
  %v1608 = vpop.f32.mrf.mxu0
  %1609 = vmatprep.mubr.bf16.mxu0 %v191
  %1610 = vmatmul.mubr.bf16.gmra.mxu0 %v190
  %v1611 = vpop.f32.mrf.mxu0
  %v1612 = vadd.f32 %v122, %v1611
  %v1613 = vpop.f32.mrf.mxu0
  %v1614 = vpop.f32.mrf.mxu0
  %v1615 = vadd.f32 %v127, %v1614
  %v1616 = vpop.f32.mrf.mxu0
  %1617 = vmatprep.mubr.bf16.mxu0 %v195
  %1618 = vmatmul.mubr.bf16.gmra.mxu0 %v194
  %v1619 = vpop.f32.mrf.mxu0
  %v1620 = vadd.f32 %v132, %v1619
  %v1621 = vpop.f32.mrf.mxu0
  %v1622 = vpop.f32.mrf.mxu0
  %v1623 = vadd.f32 %v137, %v1622
  %v1624 = vpop.f32.mrf.mxu0
  %1625 = vmatprep.mubr.bf16.mxu0 %v199
  %1626 = vmatmul.mubr.bf16.gmra.mxu0 %v198
  %v1627 = vpop.f32.mrf.mxu0
  %v1628 = vadd.f32 %v142, %v1627
  %v1629 = vpop.f32.mrf.mxu0
  %v1630 = vpop.f32.mrf.mxu0
  %v1631 = vpop.f32.mrf.mxu0
  %1632 = vdwg.mxu0
  %1633 = vmatprep.subr.bf16.mxu0 0
  %1634 = vmatpush1.bf16.msra.mxu0 %v1528
  %1635 = vmatprep.subr.bf16.mxu0 0
  %1636 = vmatpush1.bf16.msra.mxu0 %v1527
  %1637 = vmatprep.subr.bf16.mxu0 0
  %1638 = vmatpush1.bf16.msra.mxu0 %v1526
  %1639 = vmatprep.subr.bf16.mxu0 0
  %1640 = vmatpush1.bf16.msra.mxu0 %v1525
  %1641 = vmatprep.subr.bf16.mxu0 0
  %1642 = vmatpush1.bf16.msra.mxu0 %v1524
  %1643 = vmatprep.subr.bf16.mxu0 0
  %1644 = vmatpush1.bf16.msra.mxu0 %v1523
  %1645 = vmatprep.subr.bf16.mxu0 0
  %1646 = vmatpush1.bf16.msra.mxu0 %v1522
  %1647 = vmatprep.subr.bf16.mxu0 0
  %1648 = vmatpush1.bf16.msra.mxu0 %v1521
  %1649 = vmatprep.subr.bf16.mxu0 0
  %1650 = vmatpush2.bf16.msra.mxu0 %v1536
  %1651 = vmatprep.subr.bf16.mxu0 0
  %1652 = vmatpush2.bf16.msra.mxu0 %v1535
  %1653 = vmatprep.subr.bf16.mxu0 0
  %1654 = vmatpush2.bf16.msra.mxu0 %v1534
  %1655 = vmatprep.subr.bf16.mxu0 0
  %1656 = vmatpush2.bf16.msra.mxu0 %v1533
  %1657 = vmatprep.subr.bf16.mxu0 0
  %1658 = vmatpush2.bf16.msra.mxu0 %v1532
  %1659 = vmatprep.subr.bf16.mxu0 0
  %1660 = vmatpush2.bf16.msra.mxu0 %v1531
  %1661 = vmatprep.subr.bf16.mxu0 0
  %1662 = vmatpush2.bf16.msra.mxu0 %v1530
  %1663 = vmatprep.subr.bf16.mxu0 0
  %1664 = vmatpush2.bf16.msra.mxu0 %v1529
  %1665 = vmatprep.mubr.bf16.mxu0 %v189
  %1666 = vmatmul.mubr.bf16.gmra.mxu0 %v188
  %v1667 = vpop.f32.mrf.mxu0
  %v1668 = vadd.f32 %v1604, %v1667
  %v1669 = vpop.f32.mrf.mxu0
  %v1670 = vpop.f32.mrf.mxu0
  %v1671 = vadd.f32 %v1607, %v1670
  %v1672 = vpop.f32.mrf.mxu0
  %1673 = vmatprep.mubr.bf16.mxu0 %v193
  %1674 = vmatmul.mubr.bf16.gmra.mxu0 %v192
  %v1675 = vpop.f32.mrf.mxu0
  %v1676 = vadd.f32 %v1612, %v1675
  %v1677 = vpop.f32.mrf.mxu0
  %v1678 = vpop.f32.mrf.mxu0
  %v1679 = vadd.f32 %v1615, %v1678
  %v1680 = vpop.f32.mrf.mxu0
  %1681 = vmatprep.mubr.bf16.mxu0 %v197
  %1682 = vmatmul.mubr.bf16.gmra.mxu0 %v196
  %v1683 = vpop.f32.mrf.mxu0
  %v1684 = vadd.f32 %v1620, %v1683
  %v1685 = vpop.f32.mrf.mxu0
  %v1686 = vpop.f32.mrf.mxu0
  %v1687 = vadd.f32 %v1623, %v1686
  %v1688 = vpop.f32.mrf.mxu0
  %1689 = vmatprep.mubr.bf16.mxu0 %v201
  %1690 = vmatmul.mubr.bf16.gmra.mxu0 %v200
  %v1691 = vpop.f32.mrf.mxu0
  %v1692 = vadd.f32 %v1628, %v1691
  %v1693 = vpop.f32.mrf.mxu0
  %v1694 = vpop.f32.mrf.mxu0
  %v1695 = vpop.f32.mrf.mxu0
  %1696 = vdwg.mxu0
  %v1697 = vmax.f32 %v1284, %v1668
  %v1698 = vmax.f32 %v1287, %v1671
  %v1699 = vmax.f32 %v1292, %v1676
  %v1700 = vmax.f32 %v1295, %v1679
  %v1701 = vmax.f32 %v1300, %v1684
  %v1702 = vmax.f32 %v1303, %v1687
  %v1703 = vmax.f32 %v1308, %v1692
  %v1704 = vmax.f32 %v922, %v1697
  %v1705 = vmax.f32 %v923, %v1698
  %v1706 = vmax.f32 %v924, %v1699
  %v1707 = vmax.f32 %v925, %v1700
  %v1708 = vmax.f32 %v926, %v1701
  %v1709 = vmax.f32 %v927, %v1702
  %v1710 = vmax.f32 %v928, %v1703
  %v1711 = vmax.f32 %v1704, 0.0
  %v1712 = vmax.f32 %v1705, 0.0
  %v1713 = vmax.f32 %v1706, 0.0
  %v1714 = vmax.f32 %v1707, 0.0
  %v1715 = vmax.f32 %v1708, 0.0
  %v1716 = vmax.f32 %v1709, 0.0
  %v1717 = vmax.f32 %v1710, 0.0
  %vm1718 = vcmask 261120
  %1719 = vst.msk [vmem:[%s6] sm:$0xff] %vm1718, %v1711
  %1720 = vst.msk [vmem:[%s6 + $0x8] sm:$0xff] %vm1718, %v1712
  %1721 = vst.msk [vmem:[%s6 + $0x10] sm:$0xff] %vm1718, %v1713
  %1722 = vst.msk [vmem:[%s6 + $0x18] sm:$0xff] %vm1718, %v1714
  %1723 = vst.msk [vmem:[%s6 + $0x20] sm:$0xff] %vm1718, %v1715
  %1724 = vst.msk [vmem:[%s6 + $0x28] sm:$0xff] %vm1718, %v1716
  %vm1725 = vcmask 254976
  %1726 = vst.msk [vmem:[%s6 + $0x30] sm:$0x3] %vm1725, %v1717
  // Predicated region
  $region26: #{net2conv_forward.4} parent=0 // pred_check
    _
  $region27: #{net2conv_forward.4} parent=0 // pred_check_branch
    %1728 = sbr.rel (0) target = $region29
  $region28: #{net2conv_forward.4} parent=0 // pred_region
    _
  $region29: #{net2conv_forward.4} parent=0 // pred_fallthru
    _
  // Predicated region
  $region30: #{net2conv_forward.4} parent=0 // pred_check
    _
  $region31: #{net2conv_forward.4} parent=0 // pred_check_branch
    %1730 = sbr.rel (0) target = $region33
  $region32: #{net2conv_forward.4} parent=0 // pred_region
    _
  $region33: #{net2conv_forward.4} parent=0 // pred_fallthru
    _

// kernel: net2conv_forward.5
$region0: #{net2conv_forward.5}
  #allocation0 [shape = 'u32[]', space=smem, size = 0x4, offset = 0x4, fixed_abs, tag = 'smem constant byte address 0x4 - core index']
  #allocation1 [shape = 'u32[144,128]{1,0:T(1,128)}', space=vmem, size = 0x12000, scoped, tag = 'internal scratch']
  %s0 = inlined_call_operand.vmem [shape: bf16[2,800], index: 0, kind: input, shape index: {}]
  %s1 = inlined_call_operand.vmem [shape: bf16[800,500], index: 1, kind: input, shape index: {}]
  %s2 = inlined_call_operand.vmem [shape: f32[1,500], index: 2, kind: input, shape index: {}]
  %s3 = inlined_call_operand.vmem [shape: bf16[500,10], index: 3, kind: input, shape index: {}]
  %s4 = inlined_call_operand.vmem [shape: f32[1,10], index: 4, kind: input, shape index: {}]
  %s5 = inlined_call_operand.hbm [shape: f32[2,10], index: 5, kind: output, shape index: {}]
  %s6 = sld [smem:[#allocation0]]
  $region30: #{net2conv_forward.5} parent=0
    _
  %s8 = ssub.s32 1, %s6
  %s9 = scalar_select 0, %s8, %s6
  $region1: #{net2conv_forward.5} parent=0
    #allocation2 [shape = 'u8[1024]{0}', space=vmem, size = 0x400, scoped, tag = 'output window, operand 0, single buffered']
    #allocation3 [shape = 's32[1]{0}', space=sflag, size = 0x4, scoped, tag = 'scoped memory for net2conv_forward.5']
    %10 = vsyncpa [#allocation3], 0
    // Predicated region
    $region2: #{net2conv_forward.5} parent=1 // pred_check
      _
    $region3: #{net2conv_forward.5} parent=1 // pred_check_branch
      %12 = sbr.rel (0) target = $region5
    $region4: #{net2conv_forward.5} parent=1 // pred_region
      _
    $region5: #{net2conv_forward.5} parent=1 // pred_fallthru
      _
    // Predicated region
    $region6: #{net2conv_forward.5} parent=1 // pred_check
      _
    $region7: #{net2conv_forward.5} parent=1 // pred_check_branch
      %14 = sbr.rel (0) target = $region9
    $region8: #{net2conv_forward.5} parent=1 // pred_region
      _
    $region9: #{net2conv_forward.5} parent=1 // pred_fallthru
      _
    // Predicated region
    $region10: #{net2conv_forward.5} parent=1 // pred_check
      _
    $region11: #{net2conv_forward.5} parent=1 // pred_check_branch
      %16 = sbr.rel (0) target = $region13
    $region12: #{net2conv_forward.5} parent=1 // pred_region
      _
    $region13: #{net2conv_forward.5} parent=1 // pred_fallthru
      _
    // Predicated region
    $region14: #{net2conv_forward.5} parent=1 // pred_check
      _
    $region15: #{net2conv_forward.5} parent=1 // pred_check_branch
      %18 = sbr.rel (0) target = $region17
    $region16: #{net2conv_forward.5} parent=1 // pred_region
      _
    $region17: #{net2conv_forward.5} parent=1 // pred_fallthru
      _
    // Predicated region
    $region18: #{net2conv_forward.5} parent=1 // pred_check
      _
    $region19: #{net2conv_forward.5} parent=1 // pred_check_branch
      %20 = sbr.rel (0) target = $region21
    $region20: #{net2conv_forward.5} parent=1 // pred_region
      _
    $region21: #{net2conv_forward.5} parent=1 // pred_fallthru
      _
    %v22 = vld [vmem:[%s0] sm:$0x7f]
    %v23 = vld [vmem:[%s1] sm:$0xff]
    %v24 = vld [vmem:[%s1 + $0x8] sm:$0xff]
    %v25 = vld [vmem:[%s1 + $0x10] sm:$0xff]
    %v26 = vld [vmem:[%s1 + $0x18] sm:$0xff]
    %v27 = vld [vmem:[%s1 + $0x20] sm:$0xff]
    %v28 = vld [vmem:[%s1 + $0x28] sm:$0xff]
    %v29 = vld [vmem:[%s1 + $0x30] sm:$0xff]
    %v30 = vld [vmem:[%s1 + $0x38] sm:$0xff]
    %v31 = vld [vmem:[%s1 + $0x40] sm:$0xff]
    %v32 = vld [vmem:[%s1 + $0x48] sm:$0xff]
    %v33 = vld [vmem:[%s1 + $0x50] sm:$0xff]
    %v34 = vld [vmem:[%s1 + $0x58] sm:$0xff]
    %v35 = vld [vmem:[%s1 + $0x60] sm:$0xff]
    %v36 = vld [vmem:[%s1 + $0x68] sm:$0xff]
    %v37 = vld [vmem:[%s1 + $0x70] sm:$0xff]
    %v38 = vld [vmem:[%s1 + $0x78] sm:$0xff]
    %v39 = vld [vmem:[%s1 + $0x80] sm:$0xff]
    %v40 = vld [vmem:[%s1 + $0x88] sm:$0xff]
    %v41 = vld [vmem:[%s1 + $0x90] sm:$0xff]
    %v42 = vld [vmem:[%s1 + $0x98] sm:$0xff]
    %v43 = vld [vmem:[%s1 + $0xa0] sm:$0xff]
    %v44 = vld [vmem:[%s1 + $0xa8] sm:$0xff]
    %v45 = vld [vmem:[%s1 + $0xb0] sm:$0xff]
    %v46 = vld [vmem:[%s1 + $0xb8] sm:$0xff]
    %v47 = vld [vmem:[%s1 + $0xc0] sm:$0xff]
    %v48 = vld [vmem:[%s1 + $0xc8] sm:$0xff]
    %v49 = vld [vmem:[%s1 + $0xd0] sm:$0xff]
    %v50 = vld [vmem:[%s1 + $0xd8] sm:$0xff]
    %v51 = vld [vmem:[%s1 + $0xe0] sm:$0xff]
    %v52 = vld [vmem:[%s1 + $0xe8] sm:$0xff]
    %v53 = vld [vmem:[%s1 + $0xf0] sm:$0xff]
    %v54 = vld [vmem:[%s1 + $0xf8] sm:$0xff]
    %v55 = vld [vmem:[%s1 + $0x100] sm:$0xff]
    %v56 = vld [vmem:[%s1 + $0x108] sm:$0xff]
    %v57 = vld [vmem:[%s1 + $0x110] sm:$0xff]
    %v58 = vld [vmem:[%s1 + $0x118] sm:$0xff]
    %v59 = vld [vmem:[%s1 + $0x120] sm:$0xff]
    %v60 = vld [vmem:[%s1 + $0x128] sm:$0xff]
    %v61 = vld [vmem:[%s1 + $0x130] sm:$0xff]
    %v62 = vld [vmem:[%s1 + $0x138] sm:$0xff]
    %v63 = vld [vmem:[%s1 + $0x140] sm:$0xff]
    %v64 = vld [vmem:[%s1 + $0x148] sm:$0xff]
    %v65 = vld [vmem:[%s1 + $0x150] sm:$0xff]
    %v66 = vld [vmem:[%s1 + $0x158] sm:$0xff]
    %v67 = vld [vmem:[%s1 + $0x160] sm:$0xff]
    %v68 = vld [vmem:[%s1 + $0x168] sm:$0xff]
    %v69 = vld [vmem:[%s1 + $0x170] sm:$0xff]
    %v70 = vld [vmem:[%s1 + $0x178] sm:$0xff]
    %v71 = vld [vmem:[%s1 + $0x180] sm:$0xff]
    %v72 = vld [vmem:[%s1 + $0x188] sm:$0xff]
    %v73 = vld [vmem:[%s1 + $0x190] sm:$0xff]
    %v74 = vld [vmem:[%s1 + $0x198] sm:$0xff]
    %v75 = vld [vmem:[%s1 + $0x1a0] sm:$0xff]
    %v76 = vld [vmem:[%s1 + $0x1a8] sm:$0xff]
    %v77 = vld [vmem:[%s1 + $0x1b0] sm:$0xff]
    %v78 = vld [vmem:[%s1 + $0x1b8] sm:$0xff]
    %v79 = vld [vmem:[%s1 + $0x1c0] sm:$0xff]
    %v80 = vld [vmem:[%s1 + $0x1c8] sm:$0xff]
    %v81 = vld [vmem:[%s1 + $0x1d0] sm:$0xff]
    %v82 = vld [vmem:[%s1 + $0x1d8] sm:$0xff]
    %v83 = vld [vmem:[%s1 + $0x1e0] sm:$0xff]
    %v84 = vld [vmem:[%s1 + $0x1e8] sm:$0xff]
    %v85 = vld [vmem:[%s1 + $0x1f0] sm:$0xff]
    %v86 = vld [vmem:[%s1 + $0x1f8] sm:$0xff]
    %v87 = vld [vmem:[%s1 + $0x200] sm:$0xff]
    %v88 = vld [vmem:[%s1 + $0x208] sm:$0xff]
    %v89 = vld [vmem:[%s1 + $0x210] sm:$0xff]
    %v90 = vld [vmem:[%s1 + $0x218] sm:$0xff]
    %v91 = vld [vmem:[%s1 + $0x220] sm:$0xff]
    %v92 = vld [vmem:[%s1 + $0x228] sm:$0xff]
    %v93 = vld [vmem:[%s1 + $0x230] sm:$0xff]
    %v94 = vld [vmem:[%s1 + $0x238] sm:$0xff]
    %v95 = vld [vmem:[%s1 + $0x240] sm:$0xff]
    %v96 = vld [vmem:[%s1 + $0x248] sm:$0xff]
    %v97 = vld [vmem:[%s1 + $0x250] sm:$0xff]
    %v98 = vld [vmem:[%s1 + $0x258] sm:$0xff]
    %v99 = vld [vmem:[%s1 + $0x260] sm:$0xff]
    %v100 = vld [vmem:[%s1 + $0x268] sm:$0xff]
    %v101 = vld [vmem:[%s1 + $0x270] sm:$0xff]
    %v102 = vld [vmem:[%s1 + $0x278] sm:$0xff]
    %v103 = vld [vmem:[%s1 + $0x280] sm:$0xff]
    %v104 = vld [vmem:[%s1 + $0x288] sm:$0xff]
    %v105 = vld [vmem:[%s1 + $0x290] sm:$0xff]
    %v106 = vld [vmem:[%s1 + $0x298] sm:$0xff]
    %v107 = vld [vmem:[%s1 + $0x2a0] sm:$0xff]
    %v108 = vld [vmem:[%s1 + $0x2a8] sm:$0xff]
    %v109 = vld [vmem:[%s1 + $0x2b0] sm:$0xff]
    %v110 = vld [vmem:[%s1 + $0x2b8] sm:$0xff]
    %v111 = vld [vmem:[%s1 + $0x2c0] sm:$0xff]
    %v112 = vld [vmem:[%s1 + $0x2c8] sm:$0xff]
    %v113 = vld [vmem:[%s1 + $0x2d0] sm:$0xff]
    %v114 = vld [vmem:[%s1 + $0x2d8] sm:$0xff]
    %v115 = vld [vmem:[%s1 + $0x2e0] sm:$0xff]
    %v116 = vld [vmem:[%s1 + $0x2e8] sm:$0xff]
    %v117 = vld [vmem:[%s1 + $0x2f0] sm:$0xff]
    %v118 = vld [vmem:[%s1 + $0x2f8] sm:$0xff]
    %v119 = vld [vmem:[%s1 + $0x300] sm:$0xff]
    %v120 = vld [vmem:[%s1 + $0x308] sm:$0xff]
    %v121 = vld [vmem:[%s1 + $0x310] sm:$0xff]
    %v122 = vld [vmem:[%s1 + $0x318] sm:$0xff]
    %v123 = vld [vmem:[%s1 + $0x320] sm:$0xff]
    %v124 = vld [vmem:[%s1 + $0x328] sm:$0xff]
    %v125 = vld [vmem:[%s1 + $0x330] sm:$0xff]
    %v126 = vld [vmem:[%s1 + $0x338] sm:$0xff]
    %v127 = vld [vmem:[%s1 + $0x340] sm:$0xff]
    %v128 = vld [vmem:[%s1 + $0x348] sm:$0xff]
    %v129 = vld [vmem:[%s1 + $0x350] sm:$0xff]
    %v130 = vld [vmem:[%s1 + $0x358] sm:$0xff]
    %v131 = vld [vmem:[%s1 + $0x360] sm:$0xff]
    %v132 = vld [vmem:[%s1 + $0x368] sm:$0xff]
    %v133 = vld [vmem:[%s1 + $0x370] sm:$0xff]
    %v134 = vld [vmem:[%s1 + $0x378] sm:$0xff]
    %v135 = vld [vmem:[%s1 + $0x380] sm:$0xff]
    %v136 = vld [vmem:[%s1 + $0x388] sm:$0xff]
    %v137 = vld [vmem:[%s1 + $0x390] sm:$0xff]
    %v138 = vld [vmem:[%s1 + $0x398] sm:$0xff]
    %v139 = vld [vmem:[%s1 + $0x3a0] sm:$0xff]
    %v140 = vld [vmem:[%s1 + $0x3a8] sm:$0xff]
    %v141 = vld [vmem:[%s1 + $0x3b0] sm:$0xff]
    %v142 = vld [vmem:[%s1 + $0x3b8] sm:$0xff]
    %v143 = vld [vmem:[%s1 + $0x3c0] sm:$0xff]
    %v144 = vld [vmem:[%s1 + $0x3c8] sm:$0xff]
    %v145 = vld [vmem:[%s1 + $0x3d0] sm:$0xff]
    %v146 = vld [vmem:[%s1 + $0x3d8] sm:$0xff]
    %v147 = vld [vmem:[%s1 + $0x3e0] sm:$0xff]
    %v148 = vld [vmem:[%s1 + $0x3e8] sm:$0xff]
    %v149 = vld [vmem:[%s1 + $0x3f0] sm:$0xff]
    %v150 = vld [vmem:[%s1 + $0x3f8] sm:$0xff]
    %v151 = vld [vmem:[%s1 + $0x400] sm:$0xff]
    %v152 = vld [vmem:[%s1 + $0x408] sm:$0xff]
    %v153 = vld [vmem:[%s1 + $0x410] sm:$0xff]
    %v154 = vld [vmem:[%s1 + $0x418] sm:$0xff]
    %v155 = vld [vmem:[%s1 + $0x420] sm:$0xff]
    %v156 = vld [vmem:[%s1 + $0x428] sm:$0xff]
    %v157 = vld [vmem:[%s1 + $0x430] sm:$0xff]
    %v158 = vld [vmem:[%s1 + $0x438] sm:$0xff]
    %v159 = vld [vmem:[%s1 + $0x440] sm:$0xff]
    %v160 = vld [vmem:[%s1 + $0x448] sm:$0xff]
    %v161 = vld [vmem:[%s1 + $0x450] sm:$0xff]
    %v162 = vld [vmem:[%s1 + $0x458] sm:$0xff]
    %v163 = vld [vmem:[%s1 + $0x460] sm:$0xff]
    %v164 = vld [vmem:[%s1 + $0x468] sm:$0xff]
    %v165 = vld [vmem:[%s1 + $0x470] sm:$0xff]
    %v166 = vld [vmem:[%s1 + $0x478] sm:$0xff]
    %v167 = vld [vmem:[%s1 + $0x480] sm:$0xff]
    %v168 = vld [vmem:[%s1 + $0x488] sm:$0xff]
    %v169 = vld [vmem:[%s1 + $0x490] sm:$0xff]
    %v170 = vld [vmem:[%s1 + $0x498] sm:$0xff]
    %v171 = vld [vmem:[%s1 + $0x4a0] sm:$0xff]
    %v172 = vld [vmem:[%s1 + $0x4a8] sm:$0xff]
    %v173 = vld [vmem:[%s1 + $0x4b0] sm:$0xff]
    %v174 = vld [vmem:[%s1 + $0x4b8] sm:$0xff]
    %v175 = vld [vmem:[%s1 + $0x4c0] sm:$0xff]
    %v176 = vld [vmem:[%s1 + $0x4c8] sm:$0xff]
    %v177 = vld [vmem:[%s1 + $0x4d0] sm:$0xff]
    %v178 = vld [vmem:[%s1 + $0x4d8] sm:$0xff]
    %v179 = vld [vmem:[%s1 + $0x4e0] sm:$0xff]
    %v180 = vld [vmem:[%s1 + $0x4e8] sm:$0xff]
    %v181 = vld [vmem:[%s1 + $0x4f0] sm:$0xff]
    %v182 = vld [vmem:[%s1 + $0x4f8] sm:$0xff]
    %v183 = vld [vmem:[%s1 + $0x500] sm:$0xff]
    %v184 = vld [vmem:[%s1 + $0x508] sm:$0xff]
    %v185 = vld [vmem:[%s1 + $0x510] sm:$0xff]
    %v186 = vld [vmem:[%s1 + $0x518] sm:$0xff]
    %v187 = vld [vmem:[%s1 + $0x520] sm:$0xff]
    %v188 = vld [vmem:[%s1 + $0x528] sm:$0xff]
    %v189 = vld [vmem:[%s1 + $0x530] sm:$0xff]
    %v190 = vld [vmem:[%s1 + $0x538] sm:$0xff]
    %v191 = vld [vmem:[%s1 + $0x540] sm:$0xff]
    %v192 = vld [vmem:[%s1 + $0x548] sm:$0xff]
    %v193 = vld [vmem:[%s1 + $0x550] sm:$0xff]
    %v194 = vld [vmem:[%s1 + $0x558] sm:$0xff]
    %v195 = vld [vmem:[%s1 + $0x560] sm:$0xff]
    %v196 = vld [vmem:[%s1 + $0x568] sm:$0xff]
    %v197 = vld [vmem:[%s1 + $0x570] sm:$0xff]
    %v198 = vld [vmem:[%s1 + $0x578] sm:$0xff]
    %v199 = vld [vmem:[%s1 + $0x580] sm:$0xff]
    %v200 = vld [vmem:[%s1 + $0x588] sm:$0xff]
    %v201 = vld [vmem:[%s1 + $0x590] sm:$0xff]
    %v202 = vld [vmem:[%s1 + $0x598] sm:$0xff]
    %v203 = vld [vmem:[%s1 + $0x5a0] sm:$0xff]
    %v204 = vld [vmem:[%s1 + $0x5a8] sm:$0xff]
    %v205 = vld [vmem:[%s1 + $0x5b0] sm:$0xff]
    %v206 = vld [vmem:[%s1 + $0x5b8] sm:$0xff]
    %v207 = vld [vmem:[%s1 + $0x5c0] sm:$0xff]
    %v208 = vld [vmem:[%s1 + $0x5c8] sm:$0xff]
    %v209 = vld [vmem:[%s1 + $0x5d0] sm:$0xff]
    %v210 = vld [vmem:[%s1 + $0x5d8] sm:$0xff]
    %v211 = vld [vmem:[%s1 + $0x5e0] sm:$0xff]
    %v212 = vld [vmem:[%s1 + $0x5e8] sm:$0xff]
    %v213 = vld [vmem:[%s1 + $0x5f0] sm:$0xff]
    %v214 = vld [vmem:[%s1 + $0x5f8] sm:$0xff]
    %v215 = vld [vmem:[%s1 + $0x600] sm:$0xff]
    %v216 = vld [vmem:[%s1 + $0x608] sm:$0xff]
    %v217 = vld [vmem:[%s1 + $0x610] sm:$0xff]
    %v218 = vld [vmem:[%s1 + $0x618] sm:$0xff]
    %v219 = vld [vmem:[%s1 + $0x620] sm:$0xff]
    %v220 = vld [vmem:[%s1 + $0x628] sm:$0xff]
    %v221 = vld [vmem:[%s1 + $0x630] sm:$0xff]
    %v222 = vld [vmem:[%s1 + $0x638] sm:$0xff]
    %v223 = vld [vmem:[%s2] sm:$0xf]
    %v225 = vlaneseq
    %v226 = vshrl.u32 %v225, 7
    %v227 = vsub.s32 0, %v226
    %v228 = vrot.slane %v223, %v227
    %v229 = vlaneseq
    %v230 = vshrl.u32 %v229, 7
    %v231 = vsub.s32 1, %v230
    %v232 = vrot.slane %v223, %v231
    %v233 = vlaneseq
    %v234 = vshrl.u32 %v233, 7
    %v235 = vsub.s32 2, %v234
    %v236 = vrot.slane %v223, %v235
    %v237 = vlaneseq
    %v238 = vshrl.u32 %v237, 7
    %v239 = vsub.s32 3, %v238
    %v240 = vrot.slane %v223, %v239
    %v246 = vcombine.high %v22, %v22
    %v248 = vunpack.c.l.s4 1966171168
    %v249 = vunpack.c.0.s8 %v248
    %v250 = vlaneseq
    %v251 = vshrl.u32 %v250, 7
    %v252 = vsub.s32 %v249, %v251
    %v253 = vrot.slane %v22, %v252
    %v255 = vunpack.c.l.s4 1966171168
    %v256 = vunpack.c.0.s8 %v255
    %v257 = vlaneseq
    %v258 = vshrl.u32 %v257, 7
    %v259 = vsub.s32 %v256, %v258
    %v260 = vrot.slane %v246, %v259
    %v261 = vcombine.high %v253, %v253
    %v262 = vcombine.high %v260, %v260
    %v264 = vunpack.c.l.s4 1966171168
    %v265 = vunpack.c.0.s8 %v264
    %v266 = vlaneseq
    %v267 = vshrl.u32 %v266, 7
    %v268 = vsub.s32 %v265, %v267
    %v269 = vrot.slane %v253, %v268
    %v271 = vunpack.c.l.s4 1966171168
    %v272 = vunpack.c.0.s8 %v271
    %v273 = vlaneseq
    %v274 = vshrl.u32 %v273, 7
    %v275 = vsub.s32 %v272, %v274
    %v276 = vrot.slane %v260, %v275
    %v278 = vunpack.c.l.s4 1966171168
    %v279 = vunpack.c.0.s8 %v278
    %v280 = vlaneseq
    %v281 = vshrl.u32 %v280, 7
    %v282 = vsub.s32 %v279, %v281
    %v283 = vrot.slane %v261, %v282
    %v285 = vunpack.c.l.s4 1966171168
    %v286 = vunpack.c.0.s8 %v285
    %v287 = vlaneseq
    %v288 = vshrl.u32 %v287, 7
    %v289 = vsub.s32 %v286, %v288
    %v290 = vrot.slane %v262, %v289
    %v291 = vcombine.high %v269, %v269
    %v292 = vcombine.high %v276, %v276
    %v293 = vcombine.high %v283, %v283
    %v500 = vunpack.c.l.b16 %v23
    %v501 = vunpack.c.h.b16 %v23
    %v502 = vunpack.c.l.b16 %v24
    %v503 = vunpack.c.h.b16 %v24
    %v504 = vunpack.c.l.b16 %v25
    %v505 = vunpack.c.h.b16 %v25
    %v506 = vunpack.c.l.b16 %v26
    %v507 = vunpack.c.h.b16 %v26
    %v508 = vunpack.c.l.b16 %v27
    %v509 = vunpack.c.h.b16 %v27
    %v510 = vunpack.c.l.b16 %v28
    %v511 = vunpack.c.h.b16 %v28
    %v512 = vunpack.c.l.b16 %v29
    %v513 = vunpack.c.h.b16 %v29
    %v514 = vunpack.c.l.b16 %v30
    %v515 = vunpack.c.h.b16 %v30
    %v516 = vunpack.c.l.b16 %v31
    %v517 = vunpack.c.h.b16 %v31
    %v518 = vunpack.c.l.b16 %v32
    %v519 = vunpack.c.h.b16 %v32
    %v520 = vunpack.c.l.b16 %v33
    %v521 = vunpack.c.h.b16 %v33
    %v522 = vunpack.c.l.b16 %v34
    %v523 = vunpack.c.h.b16 %v34
    %v524 = vunpack.c.l.b16 %v35
    %v525 = vunpack.c.h.b16 %v35
    %v526 = vunpack.c.l.b16 %v36
    %v527 = vunpack.c.h.b16 %v36
    %v528 = vunpack.c.l.b16 %v37
    %v529 = vunpack.c.h.b16 %v37
    %v530 = vunpack.c.l.b16 %v38
    %v531 = vunpack.c.h.b16 %v38
    %v532 = vunpack.c.l.b16 %v39
    %v533 = vunpack.c.h.b16 %v39
    %v534 = vunpack.c.l.b16 %v40
    %v535 = vunpack.c.h.b16 %v40
    %v536 = vunpack.c.l.b16 %v41
    %v537 = vunpack.c.h.b16 %v41
    %v538 = vunpack.c.l.b16 %v42
    %v539 = vunpack.c.h.b16 %v42
    %v540 = vunpack.c.l.b16 %v43
    %v541 = vunpack.c.h.b16 %v43
    %v542 = vunpack.c.l.b16 %v44
    %v543 = vunpack.c.h.b16 %v44
    %v544 = vunpack.c.l.b16 %v45
    %v545 = vunpack.c.h.b16 %v45
    %v546 = vunpack.c.l.b16 %v46
    %v547 = vunpack.c.h.b16 %v46
    %v548 = vunpack.c.l.b16 %v47
    %v549 = vunpack.c.h.b16 %v47
    %v550 = vunpack.c.l.b16 %v48
    %v551 = vunpack.c.h.b16 %v48
    %v552 = vunpack.c.l.b16 %v49
    %v553 = vunpack.c.h.b16 %v49
    %v554 = vunpack.c.l.b16 %v50
    %v555 = vunpack.c.h.b16 %v50
    %v556 = vunpack.c.l.b16 %v51
    %v557 = vunpack.c.h.b16 %v51
    %v558 = vunpack.c.l.b16 %v52
    %v559 = vunpack.c.h.b16 %v52
    %v560 = vunpack.c.l.b16 %v53
    %v561 = vunpack.c.h.b16 %v53
    %v562 = vunpack.c.l.b16 %v54
    %v563 = vunpack.c.h.b16 %v54
    %v564 = vunpack.c.l.b16 %v55
    %v565 = vunpack.c.h.b16 %v55
    %v566 = vunpack.c.l.b16 %v56
    %v567 = vunpack.c.h.b16 %v56
    %v568 = vunpack.c.l.b16 %v57
    %v569 = vunpack.c.h.b16 %v57
    %v570 = vunpack.c.l.b16 %v58
    %v571 = vunpack.c.h.b16 %v58
    %v572 = vunpack.c.l.b16 %v59
    %v573 = vunpack.c.h.b16 %v59
    %v574 = vunpack.c.l.b16 %v60
    %v575 = vunpack.c.h.b16 %v60
    %v576 = vunpack.c.l.b16 %v61
    %v577 = vunpack.c.h.b16 %v61
    %v578 = vunpack.c.l.b16 %v62
    %v579 = vunpack.c.h.b16 %v62
    %v580 = vunpack.c.l.b16 %v63
    %v581 = vunpack.c.h.b16 %v63
    %v582 = vunpack.c.l.b16 %v64
    %v583 = vunpack.c.h.b16 %v64
    %v584 = vunpack.c.l.b16 %v65
    %v585 = vunpack.c.h.b16 %v65
    %v586 = vunpack.c.l.b16 %v66
    %v587 = vunpack.c.h.b16 %v66
    %v588 = vunpack.c.l.b16 %v67
    %v589 = vunpack.c.h.b16 %v67
    %v590 = vunpack.c.l.b16 %v68
    %v591 = vunpack.c.h.b16 %v68
    %v592 = vunpack.c.l.b16 %v69
    %v593 = vunpack.c.h.b16 %v69
    %v594 = vunpack.c.l.b16 %v70
    %v595 = vunpack.c.h.b16 %v70
    %v596 = vunpack.c.l.b16 %v71
    %v597 = vunpack.c.h.b16 %v71
    %v598 = vunpack.c.l.b16 %v72
    %v599 = vunpack.c.h.b16 %v72
    %v600 = vunpack.c.l.b16 %v73
    %v601 = vunpack.c.h.b16 %v73
    %v602 = vunpack.c.l.b16 %v74
    %v603 = vunpack.c.h.b16 %v74
    %v604 = vunpack.c.l.b16 %v75
    %v605 = vunpack.c.h.b16 %v75
    %v606 = vunpack.c.l.b16 %v76
    %v607 = vunpack.c.h.b16 %v76
    %v608 = vunpack.c.l.b16 %v77
    %v609 = vunpack.c.h.b16 %v77
    %v610 = vunpack.c.l.b16 %v78
    %v611 = vunpack.c.h.b16 %v78
    %v612 = vunpack.c.l.b16 %v79
    %v613 = vunpack.c.h.b16 %v79
    %v614 = vunpack.c.l.b16 %v80
    %v615 = vunpack.c.h.b16 %v80
    %v616 = vunpack.c.l.b16 %v81
    %v617 = vunpack.c.h.b16 %v81
    %v618 = vunpack.c.l.b16 %v82
    %v619 = vunpack.c.h.b16 %v82
    %v620 = vunpack.c.l.b16 %v83
    %v621 = vunpack.c.h.b16 %v83
    %v622 = vunpack.c.l.b16 %v84
    %v623 = vunpack.c.h.b16 %v84
    %v624 = vunpack.c.l.b16 %v85
    %v625 = vunpack.c.h.b16 %v85
    %v626 = vunpack.c.l.b16 %v86
    %v627 = vunpack.c.h.b16 %v86
    %v628 = vunpack.c.l.b16 %v87
    %v629 = vunpack.c.h.b16 %v87
    %v630 = vunpack.c.l.b16 %v88
    %v631 = vunpack.c.h.b16 %v88
    %v632 = vunpack.c.l.b16 %v89
    %v633 = vunpack.c.h.b16 %v89
    %v634 = vunpack.c.l.b16 %v90
    %v635 = vunpack.c.h.b16 %v90
    %v636 = vunpack.c.l.b16 %v91
    %v637 = vunpack.c.h.b16 %v91
    %v638 = vunpack.c.l.b16 %v92
    %v639 = vunpack.c.h.b16 %v92
    %v640 = vunpack.c.l.b16 %v93
    %v641 = vunpack.c.h.b16 %v93
    %v642 = vunpack.c.l.b16 %v94
    %v643 = vunpack.c.h.b16 %v94
    %v644 = vunpack.c.l.b16 %v95
    %v645 = vunpack.c.h.b16 %v95
    %v646 = vunpack.c.l.b16 %v96
    %v647 = vunpack.c.h.b16 %v96
    %v648 = vunpack.c.l.b16 %v97
    %v649 = vunpack.c.h.b16 %v97
    %v650 = vunpack.c.l.b16 %v98
    %v651 = vunpack.c.h.b16 %v98
    %v652 = vunpack.c.l.b16 %v99
    %v653 = vunpack.c.h.b16 %v99
    %v654 = vunpack.c.l.b16 %v100
    %v655 = vunpack.c.h.b16 %v100
    %v656 = vunpack.c.l.b16 %v101
    %v657 = vunpack.c.h.b16 %v101
    %v658 = vunpack.c.l.b16 %v102
    %v659 = vunpack.c.h.b16 %v102
    %v660 = vunpack.c.l.b16 %v103
    %v661 = vunpack.c.h.b16 %v103
    %v662 = vunpack.c.l.b16 %v104
    %v663 = vunpack.c.h.b16 %v104
    %v664 = vunpack.c.l.b16 %v105
    %v665 = vunpack.c.h.b16 %v105
    %v666 = vunpack.c.l.b16 %v106
    %v667 = vunpack.c.h.b16 %v106
    %v668 = vunpack.c.l.b16 %v107
    %v669 = vunpack.c.h.b16 %v107
    %v670 = vunpack.c.l.b16 %v108
    %v671 = vunpack.c.h.b16 %v108
    %v672 = vunpack.c.l.b16 %v109
    %v673 = vunpack.c.h.b16 %v109
    %v674 = vunpack.c.l.b16 %v110
    %v675 = vunpack.c.h.b16 %v110
    %v676 = vunpack.c.l.b16 %v111
    %v677 = vunpack.c.h.b16 %v111
    %v678 = vunpack.c.l.b16 %v112
    %v679 = vunpack.c.h.b16 %v112
    %v680 = vunpack.c.l.b16 %v113
    %v681 = vunpack.c.h.b16 %v113
    %v682 = vunpack.c.l.b16 %v114
    %v683 = vunpack.c.h.b16 %v114
    %v684 = vunpack.c.l.b16 %v115
    %v685 = vunpack.c.h.b16 %v115
    %v686 = vunpack.c.l.b16 %v116
    %v687 = vunpack.c.h.b16 %v116
    %v688 = vunpack.c.l.b16 %v117
    %v689 = vunpack.c.h.b16 %v117
    %v690 = vunpack.c.l.b16 %v118
    %v691 = vunpack.c.h.b16 %v118
    %v692 = vunpack.c.l.b16 %v119
    %v693 = vunpack.c.h.b16 %v119
    %v694 = vunpack.c.l.b16 %v120
    %v695 = vunpack.c.h.b16 %v120
    %v696 = vunpack.c.l.b16 %v121
    %v697 = vunpack.c.h.b16 %v121
    %v698 = vunpack.c.l.b16 %v122
    %v699 = vunpack.c.h.b16 %v122
    %v700 = vunpack.c.l.b16 %v123
    %v701 = vunpack.c.h.b16 %v123
    %v702 = vunpack.c.l.b16 %v124
    %v703 = vunpack.c.h.b16 %v124
    %v704 = vunpack.c.l.b16 %v125
    %v705 = vunpack.c.h.b16 %v125
    %v706 = vunpack.c.l.b16 %v126
    %v707 = vunpack.c.h.b16 %v126
    %v708 = vunpack.c.l.b16 %v127
    %v709 = vunpack.c.h.b16 %v127
    %v710 = vunpack.c.l.b16 %v128
    %v711 = vunpack.c.h.b16 %v128
    %v712 = vunpack.c.l.b16 %v129
    %v713 = vunpack.c.h.b16 %v129
    %v714 = vunpack.c.l.b16 %v130
    %v715 = vunpack.c.h.b16 %v130
    %v716 = vunpack.c.l.b16 %v131
    %v717 = vunpack.c.h.b16 %v131
    %v718 = vunpack.c.l.b16 %v132
    %v719 = vunpack.c.h.b16 %v132
    %v720 = vunpack.c.l.b16 %v133
    %v721 = vunpack.c.h.b16 %v133
    %v722 = vunpack.c.l.b16 %v134
    %v723 = vunpack.c.h.b16 %v134
    %v724 = vunpack.c.l.b16 %v135
    %v725 = vunpack.c.h.b16 %v135
    %v726 = vunpack.c.l.b16 %v136
    %v727 = vunpack.c.h.b16 %v136
    %v728 = vunpack.c.l.b16 %v137
    %v729 = vunpack.c.h.b16 %v137
    %v730 = vunpack.c.l.b16 %v138
    %v731 = vunpack.c.h.b16 %v138
    %v732 = vunpack.c.l.b16 %v139
    %v733 = vunpack.c.h.b16 %v139
    %v734 = vunpack.c.l.b16 %v140
    %v735 = vunpack.c.h.b16 %v140
    %v736 = vunpack.c.l.b16 %v141
    %v737 = vunpack.c.h.b16 %v141
    %v738 = vunpack.c.l.b16 %v142
    %v739 = vunpack.c.h.b16 %v142
    %v740 = vunpack.c.l.b16 %v143
    %v741 = vunpack.c.h.b16 %v143
    %v742 = vunpack.c.l.b16 %v144
    %v743 = vunpack.c.h.b16 %v144
    %v744 = vunpack.c.l.b16 %v145
    %v745 = vunpack.c.h.b16 %v145
    %v746 = vunpack.c.l.b16 %v146
    %v747 = vunpack.c.h.b16 %v146
    %v748 = vunpack.c.l.b16 %v147
    %v749 = vunpack.c.h.b16 %v147
    %v750 = vunpack.c.l.b16 %v148
    %v751 = vunpack.c.h.b16 %v148
    %v752 = vunpack.c.l.b16 %v149
    %v753 = vunpack.c.h.b16 %v149
    %v754 = vunpack.c.l.b16 %v150
    %v755 = vunpack.c.h.b16 %v150
    %v756 = vunpack.c.l.b16 %v151
    %v757 = vunpack.c.h.b16 %v151
    %v758 = vunpack.c.l.b16 %v152
    %v759 = vunpack.c.h.b16 %v152
    %v760 = vunpack.c.l.b16 %v153
    %v761 = vunpack.c.h.b16 %v153
    %v762 = vunpack.c.l.b16 %v154
    %v763 = vunpack.c.h.b16 %v154
    %v764 = vunpack.c.l.b16 %v155
    %v765 = vunpack.c.h.b16 %v155
    %v766 = vunpack.c.l.b16 %v156
    %v767 = vunpack.c.h.b16 %v156
    %v768 = vunpack.c.l.b16 %v157
    %v769 = vunpack.c.h.b16 %v157
    %v770 = vunpack.c.l.b16 %v158
    %v771 = vunpack.c.h.b16 %v158
    %v772 = vunpack.c.l.b16 %v159
    %v773 = vunpack.c.h.b16 %v159
    %v774 = vunpack.c.l.b16 %v160
    %v775 = vunpack.c.h.b16 %v160
    %v776 = vunpack.c.l.b16 %v161
    %v777 = vunpack.c.h.b16 %v161
    %v778 = vunpack.c.l.b16 %v162
    %v779 = vunpack.c.h.b16 %v162
    %v780 = vunpack.c.l.b16 %v163
    %v781 = vunpack.c.h.b16 %v163
    %v782 = vunpack.c.l.b16 %v164
    %v783 = vunpack.c.h.b16 %v164
    %v784 = vunpack.c.l.b16 %v165
    %v785 = vunpack.c.h.b16 %v165
    %v786 = vunpack.c.l.b16 %v166
    %v787 = vunpack.c.h.b16 %v166
    %v788 = vunpack.c.l.b16 %v167
    %v789 = vunpack.c.h.b16 %v167
    %v790 = vunpack.c.l.b16 %v168
    %v791 = vunpack.c.h.b16 %v168
    %v792 = vunpack.c.l.b16 %v169
    %v793 = vunpack.c.h.b16 %v169
    %v794 = vunpack.c.l.b16 %v170
    %v795 = vunpack.c.h.b16 %v170
    %v796 = vunpack.c.l.b16 %v171
    %v797 = vunpack.c.h.b16 %v171
    %v798 = vunpack.c.l.b16 %v172
    %v799 = vunpack.c.h.b16 %v172
    %v800 = vunpack.c.l.b16 %v173
    %v801 = vunpack.c.h.b16 %v173
    %v802 = vunpack.c.l.b16 %v174
    %v803 = vunpack.c.h.b16 %v174
    %v804 = vunpack.c.l.b16 %v175
    %v805 = vunpack.c.h.b16 %v175
    %v806 = vunpack.c.l.b16 %v176
    %v807 = vunpack.c.h.b16 %v176
    %v808 = vunpack.c.l.b16 %v177
    %v809 = vunpack.c.h.b16 %v177
    %v810 = vunpack.c.l.b16 %v178
    %v811 = vunpack.c.h.b16 %v178
    %v812 = vunpack.c.l.b16 %v179
    %v813 = vunpack.c.h.b16 %v179
    %v814 = vunpack.c.l.b16 %v180
    %v815 = vunpack.c.h.b16 %v180
    %v816 = vunpack.c.l.b16 %v181
    %v817 = vunpack.c.h.b16 %v181
    %v818 = vunpack.c.l.b16 %v182
    %v819 = vunpack.c.h.b16 %v182
    %v820 = vunpack.c.l.b16 %v183
    %v821 = vunpack.c.h.b16 %v183
    %v822 = vunpack.c.l.b16 %v184
    %v823 = vunpack.c.h.b16 %v184
    %v824 = vunpack.c.l.b16 %v185
    %v825 = vunpack.c.h.b16 %v185
    %v826 = vunpack.c.l.b16 %v186
    %v827 = vunpack.c.h.b16 %v186
    %v828 = vunpack.c.l.b16 %v187
    %v829 = vunpack.c.h.b16 %v187
    %v830 = vunpack.c.l.b16 %v188
    %v831 = vunpack.c.h.b16 %v188
    %v832 = vunpack.c.l.b16 %v189
    %v833 = vunpack.c.h.b16 %v189
    %v834 = vunpack.c.l.b16 %v190
    %v835 = vunpack.c.h.b16 %v190
    %v836 = vunpack.c.l.b16 %v191
    %v837 = vunpack.c.h.b16 %v191
    %v838 = vunpack.c.l.b16 %v192
    %v839 = vunpack.c.h.b16 %v192
    %v840 = vunpack.c.l.b16 %v193
    %v841 = vunpack.c.h.b16 %v193
    %v842 = vunpack.c.l.b16 %v194
    %v843 = vunpack.c.h.b16 %v194
    %v844 = vunpack.c.l.b16 %v195
    %v845 = vunpack.c.h.b16 %v195
    %v846 = vunpack.c.l.b16 %v196
    %v847 = vunpack.c.h.b16 %v196
    %v848 = vunpack.c.l.b16 %v197
    %v849 = vunpack.c.h.b16 %v197
    %v850 = vunpack.c.l.b16 %v198
    %v851 = vunpack.c.h.b16 %v198
    %v852 = vunpack.c.l.b16 %v199
    %v853 = vunpack.c.h.b16 %v199
    %v854 = vunpack.c.l.b16 %v200
    %v855 = vunpack.c.h.b16 %v200
    %v856 = vunpack.c.l.b16 %v201
    %v857 = vunpack.c.h.b16 %v201
    %v858 = vunpack.c.l.b16 %v202
    %v859 = vunpack.c.h.b16 %v202
    %v860 = vunpack.c.l.b16 %v203
    %v861 = vunpack.c.h.b16 %v203
    %v862 = vunpack.c.l.b16 %v204
    %v863 = vunpack.c.h.b16 %v204
    %v864 = vunpack.c.l.b16 %v205
    %v865 = vunpack.c.h.b16 %v205
    %v866 = vunpack.c.l.b16 %v206
    %v867 = vunpack.c.h.b16 %v206
    %v868 = vunpack.c.l.b16 %v207
    %v869 = vunpack.c.h.b16 %v207
    %v870 = vunpack.c.l.b16 %v208
    %v871 = vunpack.c.h.b16 %v208
    %v872 = vunpack.c.l.b16 %v209
    %v873 = vunpack.c.h.b16 %v209
    %v874 = vunpack.c.l.b16 %v210
    %v875 = vunpack.c.h.b16 %v210
    %v876 = vunpack.c.l.b16 %v211
    %v877 = vunpack.c.h.b16 %v211
    %v878 = vunpack.c.l.b16 %v212
    %v879 = vunpack.c.h.b16 %v212
    %v880 = vunpack.c.l.b16 %v213
    %v881 = vunpack.c.h.b16 %v213
    %v882 = vunpack.c.l.b16 %v214
    %v883 = vunpack.c.h.b16 %v214
    %v884 = vunpack.c.l.b16 %v215
    %v885 = vunpack.c.h.b16 %v215
    %v886 = vunpack.c.l.b16 %v216
    %v887 = vunpack.c.h.b16 %v216
    %v888 = vunpack.c.l.b16 %v217
    %v889 = vunpack.c.h.b16 %v217
    %v890 = vunpack.c.l.b16 %v218
    %v891 = vunpack.c.h.b16 %v218
    %v892 = vunpack.c.l.b16 %v219
    %v893 = vunpack.c.h.b16 %v219
    %v894 = vunpack.c.l.b16 %v220
    %v895 = vunpack.c.h.b16 %v220
    %v896 = vunpack.c.l.b16 %v221
    %v897 = vunpack.c.h.b16 %v221
    %v898 = vunpack.c.l.b16 %v222
    %v899 = vunpack.c.h.b16 %v222
    %v900 = vpack.c.b16 %v504, %v500
    %v901 = vpack.c.b16 %v505, %v501
    %v902 = vpack.c.b16 %v506, %v502
    %v903 = vpack.c.b16 %v507, %v503
    %v904 = vpack.c.b16 %v512, %v508
    %v905 = vpack.c.b16 %v513, %v509
    %v906 = vpack.c.b16 %v514, %v510
    %v907 = vpack.c.b16 %v515, %v511
    %v908 = vpack.c.b16 %v520, %v516
    %v909 = vpack.c.b16 %v521, %v517
    %v910 = vpack.c.b16 %v522, %v518
    %v911 = vpack.c.b16 %v523, %v519
    %v912 = vpack.c.b16 %v528, %v524
    %v913 = vpack.c.b16 %v529, %v525
    %v914 = vpack.c.b16 %v530, %v526
    %v915 = vpack.c.b16 %v531, %v527
    %v916 = vpack.c.b16 %v536, %v532
    %v917 = vpack.c.b16 %v537, %v533
    %v918 = vpack.c.b16 %v538, %v534
    %v919 = vpack.c.b16 %v539, %v535
    %v920 = vpack.c.b16 %v544, %v540
    %v921 = vpack.c.b16 %v545, %v541
    %v922 = vpack.c.b16 %v546, %v542
    %v923 = vpack.c.b16 %v547, %v543
    %v924 = vpack.c.b16 %v552, %v548
    %v925 = vpack.c.b16 %v553, %v549
    %v926 = vpack.c.b16 %v554, %v550
    %v927 = vpack.c.b16 %v555, %v551
    %v928 = vpack.c.b16 %v560, %v556
    %v929 = vpack.c.b16 %v561, %v557
    %v930 = vpack.c.b16 %v562, %v558
    %v931 = vpack.c.b16 %v563, %v559
    %v932 = vpack.c.b16 %v568, %v564
    %v933 = vpack.c.b16 %v569, %v565
    %v934 = vpack.c.b16 %v570, %v566
    %v935 = vpack.c.b16 %v571, %v567
    %v936 = vpack.c.b16 %v576, %v572
    %v937 = vpack.c.b16 %v577, %v573
    %v938 = vpack.c.b16 %v578, %v574
    %v939 = vpack.c.b16 %v579, %v575
    %v940 = vpack.c.b16 %v584, %v580
    %v941 = vpack.c.b16 %v585, %v581
    %v942 = vpack.c.b16 %v586, %v582
    %v943 = vpack.c.b16 %v587, %v583
    %v944 = vpack.c.b16 %v592, %v588
    %v945 = vpack.c.b16 %v593, %v589
    %v946 = vpack.c.b16 %v594, %v590
    %v947 = vpack.c.b16 %v595, %v591
    %v948 = vpack.c.b16 %v600, %v596
    %v949 = vpack.c.b16 %v601, %v597
    %v950 = vpack.c.b16 %v602, %v598
    %v951 = vpack.c.b16 %v603, %v599
    %v952 = vpack.c.b16 %v608, %v604
    %v953 = vpack.c.b16 %v609, %v605
    %v954 = vpack.c.b16 %v610, %v606
    %v955 = vpack.c.b16 %v611, %v607
    %v956 = vpack.c.b16 %v616, %v612
    %v957 = vpack.c.b16 %v617, %v613
    %v958 = vpack.c.b16 %v618, %v614
    %v959 = vpack.c.b16 %v619, %v615
    %v960 = vpack.c.b16 %v624, %v620
    %v961 = vpack.c.b16 %v625, %v621
    %v962 = vpack.c.b16 %v626, %v622
    %v963 = vpack.c.b16 %v627, %v623
    %v964 = vpack.c.b16 %v632, %v628
    %v965 = vpack.c.b16 %v633, %v629
    %v966 = vpack.c.b16 %v634, %v630
    %v967 = vpack.c.b16 %v635, %v631
    %v968 = vpack.c.b16 %v640, %v636
    %v969 = vpack.c.b16 %v641, %v637
    %v970 = vpack.c.b16 %v642, %v638
    %v971 = vpack.c.b16 %v643, %v639
    %v972 = vpack.c.b16 %v648, %v644
    %v973 = vpack.c.b16 %v649, %v645
    %v974 = vpack.c.b16 %v650, %v646
    %v975 = vpack.c.b16 %v651, %v647
    %v976 = vpack.c.b16 %v656, %v652
    %v977 = vpack.c.b16 %v657, %v653
    %v978 = vpack.c.b16 %v658, %v654
    %v979 = vpack.c.b16 %v659, %v655
    %v980 = vpack.c.b16 %v664, %v660
    %v981 = vpack.c.b16 %v665, %v661
    %v982 = vpack.c.b16 %v666, %v662
    %v983 = vpack.c.b16 %v667, %v663
    %v984 = vpack.c.b16 %v672, %v668
    %v985 = vpack.c.b16 %v673, %v669
    %v986 = vpack.c.b16 %v674, %v670
    %v987 = vpack.c.b16 %v675, %v671
    %v988 = vpack.c.b16 %v680, %v676
    %v989 = vpack.c.b16 %v681, %v677
    %v990 = vpack.c.b16 %v682, %v678
    %v991 = vpack.c.b16 %v683, %v679
    %v992 = vpack.c.b16 %v688, %v684
    %v993 = vpack.c.b16 %v689, %v685
    %v994 = vpack.c.b16 %v690, %v686
    %v995 = vpack.c.b16 %v691, %v687
    %v996 = vpack.c.b16 %v696, %v692
    %v997 = vpack.c.b16 %v697, %v693
    %v998 = vpack.c.b16 %v698, %v694
    %v999 = vpack.c.b16 %v699, %v695
    %v1000 = vpack.c.b16 %v704, %v700
    %v1001 = vpack.c.b16 %v705, %v701
    %v1002 = vpack.c.b16 %v706, %v702
    %v1003 = vpack.c.b16 %v707, %v703
    %v1004 = vpack.c.b16 %v712, %v708
    %v1005 = vpack.c.b16 %v713, %v709
    %v1006 = vpack.c.b16 %v714, %v710
    %v1007 = vpack.c.b16 %v715, %v711
    %v1008 = vpack.c.b16 %v720, %v716
    %v1009 = vpack.c.b16 %v721, %v717
    %v1010 = vpack.c.b16 %v722, %v718
    %v1011 = vpack.c.b16 %v723, %v719
    %v1012 = vpack.c.b16 %v728, %v724
    %v1013 = vpack.c.b16 %v729, %v725
    %v1014 = vpack.c.b16 %v730, %v726
    %v1015 = vpack.c.b16 %v731, %v727
    %v1016 = vpack.c.b16 %v736, %v732
    %v1017 = vpack.c.b16 %v737, %v733
    %v1018 = vpack.c.b16 %v738, %v734
    %v1019 = vpack.c.b16 %v739, %v735
    %v1020 = vpack.c.b16 %v744, %v740
    %v1021 = vpack.c.b16 %v745, %v741
    %v1022 = vpack.c.b16 %v746, %v742
    %v1023 = vpack.c.b16 %v747, %v743
    %v1024 = vpack.c.b16 %v752, %v748
    %v1025 = vpack.c.b16 %v753, %v749
    %v1026 = vpack.c.b16 %v754, %v750
    %v1027 = vpack.c.b16 %v755, %v751
    %v1028 = vpack.c.b16 %v760, %v756
    %v1029 = vpack.c.b16 %v761, %v757
    %v1030 = vpack.c.b16 %v762, %v758
    %v1031 = vpack.c.b16 %v763, %v759
    %v1032 = vpack.c.b16 %v768, %v764
    %v1033 = vpack.c.b16 %v769, %v765
    %v1034 = vpack.c.b16 %v770, %v766
    %v1035 = vpack.c.b16 %v771, %v767
    %v1036 = vpack.c.b16 %v776, %v772
    %v1037 = vpack.c.b16 %v777, %v773
    %v1038 = vpack.c.b16 %v778, %v774
    %v1039 = vpack.c.b16 %v779, %v775
    %v1040 = vpack.c.b16 %v784, %v780
    %v1041 = vpack.c.b16 %v785, %v781
    %v1042 = vpack.c.b16 %v786, %v782
    %v1043 = vpack.c.b16 %v787, %v783
    %v1044 = vpack.c.b16 %v792, %v788
    %v1045 = vpack.c.b16 %v793, %v789
    %v1046 = vpack.c.b16 %v794, %v790
    %v1047 = vpack.c.b16 %v795, %v791
    %v1048 = vpack.c.b16 %v800, %v796
    %v1049 = vpack.c.b16 %v801, %v797
    %v1050 = vpack.c.b16 %v802, %v798
    %v1051 = vpack.c.b16 %v803, %v799
    %v1052 = vpack.c.b16 %v808, %v804
    %v1053 = vpack.c.b16 %v809, %v805
    %v1054 = vpack.c.b16 %v810, %v806
    %v1055 = vpack.c.b16 %v811, %v807
    %v1056 = vpack.c.b16 %v816, %v812
    %v1057 = vpack.c.b16 %v817, %v813
    %v1058 = vpack.c.b16 %v818, %v814
    %v1059 = vpack.c.b16 %v819, %v815
    %v1060 = vpack.c.b16 %v824, %v820
    %v1061 = vpack.c.b16 %v825, %v821
    %v1062 = vpack.c.b16 %v826, %v822
    %v1063 = vpack.c.b16 %v827, %v823
    %v1064 = vpack.c.b16 %v832, %v828
    %v1065 = vpack.c.b16 %v833, %v829
    %v1066 = vpack.c.b16 %v834, %v830
    %v1067 = vpack.c.b16 %v835, %v831
    %v1068 = vpack.c.b16 %v840, %v836
    %v1069 = vpack.c.b16 %v841, %v837
    %v1070 = vpack.c.b16 %v842, %v838
    %v1071 = vpack.c.b16 %v843, %v839
    %v1072 = vpack.c.b16 %v848, %v844
    %v1073 = vpack.c.b16 %v849, %v845
    %v1074 = vpack.c.b16 %v850, %v846
    %v1075 = vpack.c.b16 %v851, %v847
    %v1076 = vpack.c.b16 %v856, %v852
    %v1077 = vpack.c.b16 %v857, %v853
    %v1078 = vpack.c.b16 %v858, %v854
    %v1079 = vpack.c.b16 %v859, %v855
    %v1080 = vpack.c.b16 %v864, %v860
    %v1081 = vpack.c.b16 %v865, %v861
    %v1082 = vpack.c.b16 %v866, %v862
    %v1083 = vpack.c.b16 %v867, %v863
    %v1084 = vpack.c.b16 %v872, %v868
    %v1085 = vpack.c.b16 %v873, %v869
    %v1086 = vpack.c.b16 %v874, %v870
    %v1087 = vpack.c.b16 %v875, %v871
    %v1088 = vpack.c.b16 %v880, %v876
    %v1089 = vpack.c.b16 %v881, %v877
    %v1090 = vpack.c.b16 %v882, %v878
    %v1091 = vpack.c.b16 %v883, %v879
    %v1092 = vpack.c.b16 %v888, %v884
    %v1093 = vpack.c.b16 %v889, %v885
    %v1094 = vpack.c.b16 %v890, %v886
    %v1095 = vpack.c.b16 %v891, %v887
    %v1096 = vpack.c.b16 %v896, %v892
    %v1097 = vpack.c.b16 %v897, %v893
    %v1098 = vpack.c.b16 %v898, %v894
    %v1099 = vpack.c.b16 %v899, %v895
    %vm1300 = vcmask 261120
    %v1302 = vsel %vm1300, %v292, 0
    %1304 = vmatprep.subr.bf16.mxu0 %v929
    %1305 = vmatpush1.bf16.msra.mxu0 %v928
    %1306 = vmatprep.subr.bf16.mxu0 %v925
    %1307 = vmatpush1.bf16.msra.mxu0 %v924
    %1308 = vmatprep.subr.bf16.mxu0 %v921
    %1309 = vmatpush1.bf16.msra.mxu0 %v920
    %1310 = vmatprep.subr.bf16.mxu0 %v917
    %1311 = vmatpush1.bf16.msra.mxu0 %v916
    %1312 = vmatprep.subr.bf16.mxu0 %v913
    %1313 = vmatpush1.bf16.msra.mxu0 %v912
    %1314 = vmatprep.subr.bf16.mxu0 %v909
    %1315 = vmatpush1.bf16.msra.mxu0 %v908
    %1316 = vmatprep.subr.bf16.mxu0 %v905
    %1317 = vmatpush1.bf16.msra.mxu0 %v904
    %1318 = vmatprep.subr.bf16.mxu0 %v901
    %1319 = vmatpush1.bf16.msra.mxu0 %v900
    %1320 = vmatprep.subr.bf16.mxu0 %v961
    %1321 = vmatpush2.bf16.msra.mxu0 %v960
    %1322 = vmatprep.subr.bf16.mxu0 %v957
    %1323 = vmatpush2.bf16.msra.mxu0 %v956
    %1324 = vmatprep.subr.bf16.mxu0 %v953
    %1325 = vmatpush2.bf16.msra.mxu0 %v952
    %1326 = vmatprep.subr.bf16.mxu0 %v949
    %1327 = vmatpush2.bf16.msra.mxu0 %v948
    %1328 = vmatprep.subr.bf16.mxu0 %v945
    %1329 = vmatpush2.bf16.msra.mxu0 %v944
    %1330 = vmatprep.subr.bf16.mxu0 %v941
    %1331 = vmatpush2.bf16.msra.mxu0 %v940
    %1332 = vmatprep.subr.bf16.mxu0 %v937
    %1333 = vmatpush2.bf16.msra.mxu0 %v936
    %1334 = vmatprep.subr.bf16.mxu0 %v933
    %1335 = vmatpush2.bf16.msra.mxu0 %v932
    %1336 = vmatprep.mubr.bf16.mxu0 %v283
    %1337 = vmatmul.mubr.bf16.gmra.mxu0 %v269
    %v1338 = vpop.f32.mrf.mxu0
    %v1339 = vadd.f32 %v228, %v1338
    %v1340 = vpop.f32.mrf.mxu0
    %v1341 = vadd.f32 %v232, %v1340
    %v1342 = vpop.f32.mrf.mxu0
    %v1343 = vpop.f32.mrf.mxu0
    %1344 = vdwg.mxu0
    %1345 = vmatprep.subr.bf16.mxu0 %v993
    %1346 = vmatpush1.bf16.msra.mxu0 %v992
    %1347 = vmatprep.subr.bf16.mxu0 %v989
    %1348 = vmatpush1.bf16.msra.mxu0 %v988
    %1349 = vmatprep.subr.bf16.mxu0 %v985
    %1350 = vmatpush1.bf16.msra.mxu0 %v984
    %1351 = vmatprep.subr.bf16.mxu0 %v981
    %1352 = vmatpush1.bf16.msra.mxu0 %v980
    %1353 = vmatprep.subr.bf16.mxu0 %v977
    %1354 = vmatpush1.bf16.msra.mxu0 %v976
    %1355 = vmatprep.subr.bf16.mxu0 %v973
    %1356 = vmatpush1.bf16.msra.mxu0 %v972
    %1357 = vmatprep.subr.bf16.mxu0 %v969
    %1358 = vmatpush1.bf16.msra.mxu0 %v968
    %1359 = vmatprep.subr.bf16.mxu0 %v965
    %1360 = vmatpush1.bf16.msra.mxu0 %v964
    %1361 = vmatprep.subr.bf16.mxu0 %v1025
    %1362 = vmatpush2.bf16.msra.mxu0 %v1024
    %1363 = vmatprep.subr.bf16.mxu0 %v1021
    %1364 = vmatpush2.bf16.msra.mxu0 %v1020
    %1365 = vmatprep.subr.bf16.mxu0 %v1017
    %1366 = vmatpush2.bf16.msra.mxu0 %v1016
    %1367 = vmatprep.subr.bf16.mxu0 %v1013
    %1368 = vmatpush2.bf16.msra.mxu0 %v1012
    %1369 = vmatprep.subr.bf16.mxu0 %v1009
    %1370 = vmatpush2.bf16.msra.mxu0 %v1008
    %1371 = vmatprep.subr.bf16.mxu0 %v1005
    %1372 = vmatpush2.bf16.msra.mxu0 %v1004
    %1373 = vmatprep.subr.bf16.mxu0 %v1001
    %1374 = vmatpush2.bf16.msra.mxu0 %v1000
    %1375 = vmatprep.subr.bf16.mxu0 %v997
    %1376 = vmatpush2.bf16.msra.mxu0 %v996
    %1377 = vmatprep.mubr.bf16.mxu0 %v293
    %1378 = vmatmul.mubr.bf16.gmra.mxu0 %v291
    %v1379 = vpop.f32.mrf.mxu0
    %v1380 = vadd.f32 %v1339, %v1379
    %v1381 = vpop.f32.mrf.mxu0
    %v1382 = vadd.f32 %v1341, %v1381
    %v1383 = vpop.f32.mrf.mxu0
    %v1384 = vpop.f32.mrf.mxu0
    %1385 = vdwg.mxu0
    %1386 = vmatprep.subr.bf16.mxu0 %v1057
    %1387 = vmatpush1.bf16.msra.mxu0 %v1056
    %1388 = vmatprep.subr.bf16.mxu0 %v1053
    %1389 = vmatpush1.bf16.msra.mxu0 %v1052
    %1390 = vmatprep.subr.bf16.mxu0 %v1049
    %1391 = vmatpush1.bf16.msra.mxu0 %v1048
    %1392 = vmatprep.subr.bf16.mxu0 %v1045
    %1393 = vmatpush1.bf16.msra.mxu0 %v1044
    %1394 = vmatprep.subr.bf16.mxu0 %v1041
    %1395 = vmatpush1.bf16.msra.mxu0 %v1040
    %1396 = vmatprep.subr.bf16.mxu0 %v1037
    %1397 = vmatpush1.bf16.msra.mxu0 %v1036
    %1398 = vmatprep.subr.bf16.mxu0 %v1033
    %1399 = vmatpush1.bf16.msra.mxu0 %v1032
    %1400 = vmatprep.subr.bf16.mxu0 %v1029
    %1401 = vmatpush1.bf16.msra.mxu0 %v1028
    %1402 = vmatprep.subr.bf16.mxu0 %v1089
    %1403 = vmatpush2.bf16.msra.mxu0 %v1088
    %1404 = vmatprep.subr.bf16.mxu0 %v1085
    %1405 = vmatpush2.bf16.msra.mxu0 %v1084
    %1406 = vmatprep.subr.bf16.mxu0 %v1081
    %1407 = vmatpush2.bf16.msra.mxu0 %v1080
    %1408 = vmatprep.subr.bf16.mxu0 %v1077
    %1409 = vmatpush2.bf16.msra.mxu0 %v1076
    %1410 = vmatprep.subr.bf16.mxu0 %v1073
    %1411 = vmatpush2.bf16.msra.mxu0 %v1072
    %1412 = vmatprep.subr.bf16.mxu0 %v1069
    %1413 = vmatpush2.bf16.msra.mxu0 %v1068
    %1414 = vmatprep.subr.bf16.mxu0 %v1065
    %1415 = vmatpush2.bf16.msra.mxu0 %v1064
    %1416 = vmatprep.subr.bf16.mxu0 %v1061
    %1417 = vmatpush2.bf16.msra.mxu0 %v1060
    %1418 = vmatprep.mubr.bf16.mxu0 %v290
    %1419 = vmatmul.mubr.bf16.gmra.mxu0 %v276
    %v1420 = vpop.f32.mrf.mxu0
    %v1421 = vadd.f32 %v1380, %v1420
    %v1422 = vpop.f32.mrf.mxu0
    %v1423 = vadd.f32 %v1382, %v1422
    %v1424 = vpop.f32.mrf.mxu0
    %v1425 = vpop.f32.mrf.mxu0
    %1426 = vdwg.mxu0
    %1427 = vmatprep.subr.bf16.mxu0 0
    %1428 = vmatpush1.bf16.msra.mxu0 0
    %1429 = vmatprep.subr.bf16.mxu0 0
    %1430 = vmatpush1.bf16.msra.mxu0 0
    %1431 = vmatprep.subr.bf16.mxu0 0
    %1432 = vmatpush1.bf16.msra.mxu0 0
    %1433 = vmatprep.subr.bf16.mxu0 0
    %1434 = vmatpush1.bf16.msra.mxu0 0
    %1435 = vmatprep.subr.bf16.mxu0 0
    %1436 = vmatpush1.bf16.msra.mxu0 0
    %1437 = vmatprep.subr.bf16.mxu0 0
    %1438 = vmatpush1.bf16.msra.mxu0 0
    %1439 = vmatprep.subr.bf16.mxu0 %v1097
    %1440 = vmatpush1.bf16.msra.mxu0 %v1096
    %1441 = vmatprep.subr.bf16.mxu0 %v1093
    %1442 = vmatpush1.bf16.msra.mxu0 %v1092
    %1443 = vmatprep.subr.bf16.mxu0 0
    %1444 = vmatpush2.bf16.msra.mxu0 0
    %1445 = vmatprep.subr.bf16.mxu0 0
    %1446 = vmatpush2.bf16.msra.mxu0 0
    %1447 = vmatprep.subr.bf16.mxu0 0
    %1448 = vmatpush2.bf16.msra.mxu0 0
    %1449 = vmatprep.subr.bf16.mxu0 0
    %1450 = vmatpush2.bf16.msra.mxu0 0
    %1451 = vmatprep.subr.bf16.mxu0 0
    %1452 = vmatpush2.bf16.msra.mxu0 0
    %1453 = vmatprep.subr.bf16.mxu0 0
    %1454 = vmatpush2.bf16.msra.mxu0 0
    %1455 = vmatprep.subr.bf16.mxu0 0
    %1456 = vmatpush2.bf16.msra.mxu0 0
    %1457 = vmatprep.subr.bf16.mxu0 0
    %1458 = vmatpush2.bf16.msra.mxu0 0
    %1459 = vmatprep.mubr.bf16.mxu0 0
    %1460 = vmatmul.mubr.bf16.gmra.mxu0 %v1302
    %v1461 = vpop.f32.mrf.mxu0
    %v1462 = vadd.f32 %v1421, %v1461
    %v1463 = vpop.f32.mrf.mxu0
    %v1464 = vadd.f32 %v1423, %v1463
    %v1465 = vpop.f32.mrf.mxu0
    %v1466 = vpop.f32.mrf.mxu0
    %1467 = vdwg.mxu0
    %1468 = vmatprep.subr.bf16.mxu0 %v931
    %1469 = vmatpush1.bf16.msra.mxu0 %v930
    %1470 = vmatprep.subr.bf16.mxu0 %v927
    %1471 = vmatpush1.bf16.msra.mxu0 %v926
    %1472 = vmatprep.subr.bf16.mxu0 %v923
    %1473 = vmatpush1.bf16.msra.mxu0 %v922
    %1474 = vmatprep.subr.bf16.mxu0 %v919
    %1475 = vmatpush1.bf16.msra.mxu0 %v918
    %1476 = vmatprep.subr.bf16.mxu0 %v915
    %1477 = vmatpush1.bf16.msra.mxu0 %v914
    %1478 = vmatprep.subr.bf16.mxu0 %v911
    %1479 = vmatpush1.bf16.msra.mxu0 %v910
    %1480 = vmatprep.subr.bf16.mxu0 %v907
    %1481 = vmatpush1.bf16.msra.mxu0 %v906
    %1482 = vmatprep.subr.bf16.mxu0 %v903
    %1483 = vmatpush1.bf16.msra.mxu0 %v902
    %1484 = vmatprep.subr.bf16.mxu0 %v963
    %1485 = vmatpush2.bf16.msra.mxu0 %v962
    %1486 = vmatprep.subr.bf16.mxu0 %v959
    %1487 = vmatpush2.bf16.msra.mxu0 %v958
    %1488 = vmatprep.subr.bf16.mxu0 %v955
    %1489 = vmatpush2.bf16.msra.mxu0 %v954
    %1490 = vmatprep.subr.bf16.mxu0 %v951
    %1491 = vmatpush2.bf16.msra.mxu0 %v950
    %1492 = vmatprep.subr.bf16.mxu0 %v947
    %1493 = vmatpush2.bf16.msra.mxu0 %v946
    %1494 = vmatprep.subr.bf16.mxu0 %v943
    %1495 = vmatpush2.bf16.msra.mxu0 %v942
    %1496 = vmatprep.subr.bf16.mxu0 %v939
    %1497 = vmatpush2.bf16.msra.mxu0 %v938
    %1498 = vmatprep.subr.bf16.mxu0 %v935
    %1499 = vmatpush2.bf16.msra.mxu0 %v934
    %1500 = vmatprep.mubr.bf16.mxu0 %v283
    %1501 = vmatmul.mubr.bf16.gmra.mxu0 %v269
    %v1502 = vpop.f32.mrf.mxu0
    %v1503 = vadd.f32 %v236, %v1502
    %v1504 = vpop.f32.mrf.mxu0
    %v1505 = vadd.f32 %v240, %v1504
    %v1506 = vpop.f32.mrf.mxu0
    %v1507 = vpop.f32.mrf.mxu0
    %1508 = vdwg.mxu0
    %1509 = vmatprep.subr.bf16.mxu0 %v995
    %1510 = vmatpush1.bf16.msra.mxu0 %v994
    %1511 = vmatprep.subr.bf16.mxu0 %v991
    %1512 = vmatpush1.bf16.msra.mxu0 %v990
    %1513 = vmatprep.subr.bf16.mxu0 %v987
    %1514 = vmatpush1.bf16.msra.mxu0 %v986
    %1515 = vmatprep.subr.bf16.mxu0 %v983
    %1516 = vmatpush1.bf16.msra.mxu0 %v982
    %1517 = vmatprep.subr.bf16.mxu0 %v979
    %1518 = vmatpush1.bf16.msra.mxu0 %v978
    %1519 = vmatprep.subr.bf16.mxu0 %v975
    %1520 = vmatpush1.bf16.msra.mxu0 %v974
    %1521 = vmatprep.subr.bf16.mxu0 %v971
    %1522 = vmatpush1.bf16.msra.mxu0 %v970
    %1523 = vmatprep.subr.bf16.mxu0 %v967
    %1524 = vmatpush1.bf16.msra.mxu0 %v966
    %1525 = vmatprep.subr.bf16.mxu0 %v1027
    %1526 = vmatpush2.bf16.msra.mxu0 %v1026
    %1527 = vmatprep.subr.bf16.mxu0 %v1023
    %1528 = vmatpush2.bf16.msra.mxu0 %v1022
    %1529 = vmatprep.subr.bf16.mxu0 %v1019
    %1530 = vmatpush2.bf16.msra.mxu0 %v1018
    %1531 = vmatprep.subr.bf16.mxu0 %v1015
    %1532 = vmatpush2.bf16.msra.mxu0 %v1014
    %1533 = vmatprep.subr.bf16.mxu0 %v1011
    %1534 = vmatpush2.bf16.msra.mxu0 %v1010
    %1535 = vmatprep.subr.bf16.mxu0 %v1007
    %1536 = vmatpush2.bf16.msra.mxu0 %v1006
    %1537 = vmatprep.subr.bf16.mxu0 %v1003
    %1538 = vmatpush2.bf16.msra.mxu0 %v1002
    %1539 = vmatprep.subr.bf16.mxu0 %v999
    %1540 = vmatpush2.bf16.msra.mxu0 %v998
    %1541 = vmatprep.mubr.bf16.mxu0 %v293
    %1542 = vmatmul.mubr.bf16.gmra.mxu0 %v291
    %v1543 = vpop.f32.mrf.mxu0
    %v1544 = vadd.f32 %v1503, %v1543
    %v1545 = vpop.f32.mrf.mxu0
    %v1546 = vadd.f32 %v1505, %v1545
    %v1547 = vpop.f32.mrf.mxu0
    %v1548 = vpop.f32.mrf.mxu0
    %1549 = vdwg.mxu0
    %1550 = vmatprep.subr.bf16.mxu0 %v1059
    %1551 = vmatpush1.bf16.msra.mxu0 %v1058
    %1552 = vmatprep.subr.bf16.mxu0 %v1055
    %1553 = vmatpush1.bf16.msra.mxu0 %v1054
    %1554 = vmatprep.subr.bf16.mxu0 %v1051
    %1555 = vmatpush1.bf16.msra.mxu0 %v1050
    %1556 = vmatprep.subr.bf16.mxu0 %v1047
    %1557 = vmatpush1.bf16.msra.mxu0 %v1046
    %1558 = vmatprep.subr.bf16.mxu0 %v1043
    %1559 = vmatpush1.bf16.msra.mxu0 %v1042
    %1560 = vmatprep.subr.bf16.mxu0 %v1039
    %1561 = vmatpush1.bf16.msra.mxu0 %v1038
    %1562 = vmatprep.subr.bf16.mxu0 %v1035
    %1563 = vmatpush1.bf16.msra.mxu0 %v1034
    %1564 = vmatprep.subr.bf16.mxu0 %v1031
    %1565 = vmatpush1.bf16.msra.mxu0 %v1030
    %1566 = vmatprep.subr.bf16.mxu0 %v1091
    %1567 = vmatpush2.bf16.msra.mxu0 %v1090
    %1568 = vmatprep.subr.bf16.mxu0 %v1087
    %1569 = vmatpush2.bf16.msra.mxu0 %v1086
    %1570 = vmatprep.subr.bf16.mxu0 %v1083
    %1571 = vmatpush2.bf16.msra.mxu0 %v1082
    %1572 = vmatprep.subr.bf16.mxu0 %v1079
    %1573 = vmatpush2.bf16.msra.mxu0 %v1078
    %1574 = vmatprep.subr.bf16.mxu0 %v1075
    %1575 = vmatpush2.bf16.msra.mxu0 %v1074
    %1576 = vmatprep.subr.bf16.mxu0 %v1071
    %1577 = vmatpush2.bf16.msra.mxu0 %v1070
    %1578 = vmatprep.subr.bf16.mxu0 %v1067
    %1579 = vmatpush2.bf16.msra.mxu0 %v1066
    %1580 = vmatprep.subr.bf16.mxu0 %v1063
    %1581 = vmatpush2.bf16.msra.mxu0 %v1062
    %1582 = vmatprep.mubr.bf16.mxu0 %v290
    %1583 = vmatmul.mubr.bf16.gmra.mxu0 %v276
    %v1584 = vpop.f32.mrf.mxu0
    %v1585 = vadd.f32 %v1544, %v1584
    %v1586 = vpop.f32.mrf.mxu0
    %v1587 = vadd.f32 %v1546, %v1586
    %v1588 = vpop.f32.mrf.mxu0
    %v1589 = vpop.f32.mrf.mxu0
    %1590 = vdwg.mxu0
    %1591 = vmatprep.subr.bf16.mxu0 0
    %1592 = vmatpush1.bf16.msra.mxu0 0
    %1593 = vmatprep.subr.bf16.mxu0 0
    %1594 = vmatpush1.bf16.msra.mxu0 0
    %1595 = vmatprep.subr.bf16.mxu0 0
    %1596 = vmatpush1.bf16.msra.mxu0 0
    %1597 = vmatprep.subr.bf16.mxu0 0
    %1598 = vmatpush1.bf16.msra.mxu0 0
    %1599 = vmatprep.subr.bf16.mxu0 0
    %1600 = vmatpush1.bf16.msra.mxu0 0
    %1601 = vmatprep.subr.bf16.mxu0 0
    %1602 = vmatpush1.bf16.msra.mxu0 0
    %1603 = vmatprep.subr.bf16.mxu0 %v1099
    %1604 = vmatpush1.bf16.msra.mxu0 %v1098
    %1605 = vmatprep.subr.bf16.mxu0 %v1095
    %1606 = vmatpush1.bf16.msra.mxu0 %v1094
    %1607 = vmatprep.subr.bf16.mxu0 0
    %1608 = vmatpush2.bf16.msra.mxu0 0
    %1609 = vmatprep.subr.bf16.mxu0 0
    %1610 = vmatpush2.bf16.msra.mxu0 0
    %1611 = vmatprep.subr.bf16.mxu0 0
    %1612 = vmatpush2.bf16.msra.mxu0 0
    %1613 = vmatprep.subr.bf16.mxu0 0
    %1614 = vmatpush2.bf16.msra.mxu0 0
    %1615 = vmatprep.subr.bf16.mxu0 0
    %1616 = vmatpush2.bf16.msra.mxu0 0
    %1617 = vmatprep.subr.bf16.mxu0 0
    %1618 = vmatpush2.bf16.msra.mxu0 0
    %1619 = vmatprep.subr.bf16.mxu0 0
    %1620 = vmatpush2.bf16.msra.mxu0 0
    %1621 = vmatprep.subr.bf16.mxu0 0
    %1622 = vmatpush2.bf16.msra.mxu0 0
    %1623 = vmatprep.mubr.bf16.mxu0 0
    %1624 = vmatmul.mubr.bf16.gmra.mxu0 %v1302
    %v1625 = vpop.f32.mrf.mxu0
    %v1626 = vadd.f32 %v1585, %v1625
    %v1627 = vpop.f32.mrf.mxu0
    %v1628 = vadd.f32 %v1587, %v1627
    %v1629 = vpop.f32.mrf.mxu0
    %v1630 = vpop.f32.mrf.mxu0
    %1631 = vdwg.mxu0
    %v1632 = vmax.f32 %v1462, 0.0
    %v1633 = vmax.f32 %v1464, 0.0
    %v1634 = vmax.f32 %v1626, 0.0
    %v1635 = vmax.f32 %v1628, 0.0
    %v1636 = vpack.c.bf16 %v1632, %v1632
    %v1637 = vpack.c.bf16 %v1633, %v1633
    %v1638 = vpack.c.bf16 %v1634, %v1634
    %v1639 = vpack.c.bf16 %v1635, %v1635
    %v1640 = vld [vmem:[%s3] sm:$0xf]
    %v1641 = vld [vmem:[%s3 + $0x4] sm:$0xf]
    %v1642 = vld [vmem:[%s3 + $0x8] sm:$0xf]
    %v1643 = vld [vmem:[%s3 + $0xc] sm:$0xf]
    %v1644 = vld [vmem:[%s3 + $0x10] sm:$0xf]
    %v1645 = vld [vmem:[%s3 + $0x14] sm:$0xf]
    %v1646 = vld [vmem:[%s3 + $0x18] sm:$0xf]
    %v1647 = vld [vmem:[%s3 + $0x1c] sm:$0xf]
    %v1648 = vld [vmem:[%s3 + $0x20] sm:$0xf]
    %v1649 = vld [vmem:[%s3 + $0x24] sm:$0xf]
    %v1650 = vld [vmem:[%s3 + $0x28] sm:$0xf]
    %v1651 = vld [vmem:[%s3 + $0x2c] sm:$0xf]
    %v1652 = vld [vmem:[%s3 + $0x30] sm:$0xf]
    %v1653 = vld [vmem:[%s3 + $0x34] sm:$0xf]
    %v1654 = vld [vmem:[%s3 + $0x38] sm:$0xf]
    %v1655 = vld [vmem:[%s3 + $0x3c] sm:$0xf]
    %v1656 = vld [vmem:[%s3 + $0x40] sm:$0xf]
    %v1657 = vld [vmem:[%s3 + $0x44] sm:$0xf]
    %v1658 = vld [vmem:[%s3 + $0x48] sm:$0xf]
    %v1659 = vld [vmem:[%s3 + $0x4c] sm:$0xf]
    %v1660 = vld [vmem:[%s3 + $0x50] sm:$0xf]
    %v1661 = vld [vmem:[%s3 + $0x54] sm:$0xf]
    %v1662 = vld [vmem:[%s3 + $0x58] sm:$0xf]
    %v1663 = vld [vmem:[%s3 + $0x5c] sm:$0xf]
    %v1664 = vld [vmem:[%s3 + $0x60] sm:$0xf]
    %v1665 = vld [vmem:[%s3 + $0x64] sm:$0xf]
    %v1666 = vld [vmem:[%s3 + $0x68] sm:$0xf]
    %v1667 = vld [vmem:[%s3 + $0x6c] sm:$0xf]
    %v1668 = vld [vmem:[%s3 + $0x70] sm:$0xf]
    %v1669 = vld [vmem:[%s3 + $0x74] sm:$0xf]
    %v1670 = vld [vmem:[%s3 + $0x78] sm:$0xf]
    %v1671 = vld [vmem:[%s3 + $0x7c] sm:$0xf]
    %v1672 = vld [vmem:[%s3 + $0x80] sm:$0xf]
    %v1673 = vld [vmem:[%s3 + $0x84] sm:$0xf]
    %v1674 = vld [vmem:[%s3 + $0x88] sm:$0xf]
    %v1675 = vld [vmem:[%s3 + $0x8c] sm:$0xf]
    %v1676 = vld [vmem:[%s3 + $0x90] sm:$0xf]
    %v1677 = vld [vmem:[%s3 + $0x94] sm:$0xf]
    %v1678 = vld [vmem:[%s3 + $0x98] sm:$0xf]
    %v1679 = vld [vmem:[%s3 + $0x9c] sm:$0xf]
    %v1680 = vld [vmem:[%s3 + $0xa0] sm:$0xf]
    %v1681 = vld [vmem:[%s3 + $0xa4] sm:$0xf]
    %v1682 = vld [vmem:[%s3 + $0xa8] sm:$0xf]
    %v1683 = vld [vmem:[%s3 + $0xac] sm:$0xf]
    %v1684 = vld [vmem:[%s3 + $0xb0] sm:$0xf]
    %v1685 = vld [vmem:[%s3 + $0xb4] sm:$0xf]
    %v1686 = vld [vmem:[%s3 + $0xb8] sm:$0xf]
    %v1687 = vld [vmem:[%s3 + $0xbc] sm:$0xf]
    %v1688 = vld [vmem:[%s3 + $0xc0] sm:$0xf]
    %v1689 = vld [vmem:[%s3 + $0xc4] sm:$0xf]
    %v1690 = vld [vmem:[%s3 + $0xc8] sm:$0xf]
    %v1691 = vld [vmem:[%s3 + $0xcc] sm:$0xf]
    %v1692 = vld [vmem:[%s3 + $0xd0] sm:$0xf]
    %v1693 = vld [vmem:[%s3 + $0xd4] sm:$0xf]
    %v1694 = vld [vmem:[%s3 + $0xd8] sm:$0xf]
    %v1695 = vld [vmem:[%s3 + $0xdc] sm:$0xf]
    %v1696 = vld [vmem:[%s3 + $0xe0] sm:$0xf]
    %v1697 = vld [vmem:[%s3 + $0xe4] sm:$0xf]
    %v1698 = vld [vmem:[%s3 + $0xe8] sm:$0xf]
    %v1699 = vld [vmem:[%s3 + $0xec] sm:$0xf]
    %v1700 = vld [vmem:[%s3 + $0xf0] sm:$0xf]
    %v1701 = vld [vmem:[%s3 + $0xf4] sm:$0xf]
    %v1702 = vld [vmem:[%s3 + $0xf8] sm:$0x3]
    %v1703 = vld [vmem:[%s4] sm:$0x1]
    %v1705 = vlaneseq
    %v1706 = vshrl.u32 %v1705, 7
    %v1707 = vsub.s32 0, %v1706
    %v1708 = vrot.slane %v1703, %v1707
    %v1773 = vunpack.c.l.b16 %v1640
    %v1774 = vunpack.c.l.b16 %v1641
    %v1775 = vunpack.c.l.b16 %v1642
    %v1776 = vunpack.c.l.b16 %v1643
    %v1777 = vunpack.c.l.b16 %v1644
    %v1778 = vunpack.c.l.b16 %v1645
    %v1779 = vunpack.c.l.b16 %v1646
    %v1780 = vunpack.c.l.b16 %v1647
    %v1781 = vunpack.c.l.b16 %v1648
    %v1782 = vunpack.c.l.b16 %v1649
    %v1783 = vunpack.c.l.b16 %v1650
    %v1784 = vunpack.c.l.b16 %v1651
    %v1785 = vunpack.c.l.b16 %v1652
    %v1786 = vunpack.c.l.b16 %v1653
    %v1787 = vunpack.c.l.b16 %v1654
    %v1788 = vunpack.c.l.b16 %v1655
    %v1789 = vunpack.c.l.b16 %v1656
    %v1790 = vunpack.c.l.b16 %v1657
    %v1791 = vunpack.c.l.b16 %v1658
    %v1792 = vunpack.c.l.b16 %v1659
    %v1793 = vunpack.c.l.b16 %v1660
    %v1794 = vunpack.c.l.b16 %v1661
    %v1795 = vunpack.c.l.b16 %v1662
    %v1796 = vunpack.c.l.b16 %v1663
    %v1797 = vunpack.c.l.b16 %v1664
    %v1798 = vunpack.c.l.b16 %v1665
    %v1799 = vunpack.c.l.b16 %v1666
    %v1800 = vunpack.c.l.b16 %v1667
    %v1801 = vunpack.c.l.b16 %v1668
    %v1802 = vunpack.c.l.b16 %v1669
    %v1803 = vunpack.c.l.b16 %v1670
    %v1804 = vunpack.c.l.b16 %v1671
    %v1805 = vunpack.c.l.b16 %v1672
    %v1806 = vunpack.c.l.b16 %v1673
    %v1807 = vunpack.c.l.b16 %v1674
    %v1808 = vunpack.c.l.b16 %v1675
    %v1809 = vunpack.c.l.b16 %v1676
    %v1810 = vunpack.c.l.b16 %v1677
    %v1811 = vunpack.c.l.b16 %v1678
    %v1812 = vunpack.c.l.b16 %v1679
    %v1813 = vunpack.c.l.b16 %v1680
    %v1814 = vunpack.c.l.b16 %v1681
    %v1815 = vunpack.c.l.b16 %v1682
    %v1816 = vunpack.c.l.b16 %v1683
    %v1817 = vunpack.c.l.b16 %v1684
    %v1818 = vunpack.c.l.b16 %v1685
    %v1819 = vunpack.c.l.b16 %v1686
    %v1820 = vunpack.c.l.b16 %v1687
    %v1821 = vunpack.c.l.b16 %v1688
    %v1822 = vunpack.c.l.b16 %v1689
    %v1823 = vunpack.c.l.b16 %v1690
    %v1824 = vunpack.c.l.b16 %v1691
    %v1825 = vunpack.c.l.b16 %v1692
    %v1826 = vunpack.c.l.b16 %v1693
    %v1827 = vunpack.c.l.b16 %v1694
    %v1828 = vunpack.c.l.b16 %v1695
    %v1829 = vunpack.c.l.b16 %v1696
    %v1830 = vunpack.c.l.b16 %v1697
    %v1831 = vunpack.c.l.b16 %v1698
    %v1832 = vunpack.c.l.b16 %v1699
    %v1833 = vunpack.c.l.b16 %v1700
    %v1834 = vunpack.c.l.b16 %v1701
    %v1835 = vunpack.c.l.b16 %v1702
    %v1836 = vpack.c.b16 %v1774, %v1773
    %v1837 = vpack.c.b16 %v1776, %v1775
    %v1838 = vpack.c.b16 %v1778, %v1777
    %v1839 = vpack.c.b16 %v1780, %v1779
    %v1840 = vpack.c.b16 %v1782, %v1781
    %v1841 = vpack.c.b16 %v1784, %v1783
    %v1842 = vpack.c.b16 %v1786, %v1785
    %v1843 = vpack.c.b16 %v1788, %v1787
    %v1844 = vpack.c.b16 %v1790, %v1789
    %v1845 = vpack.c.b16 %v1792, %v1791
    %v1846 = vpack.c.b16 %v1794, %v1793
    %v1847 = vpack.c.b16 %v1796, %v1795
    %v1848 = vpack.c.b16 %v1798, %v1797
    %v1849 = vpack.c.b16 %v1800, %v1799
    %v1850 = vpack.c.b16 %v1802, %v1801
    %v1851 = vpack.c.b16 %v1804, %v1803
    %v1852 = vpack.c.b16 %v1806, %v1805
    %v1853 = vpack.c.b16 %v1808, %v1807
    %v1854 = vpack.c.b16 %v1810, %v1809
    %v1855 = vpack.c.b16 %v1812, %v1811
    %v1856 = vpack.c.b16 %v1814, %v1813
    %v1857 = vpack.c.b16 %v1816, %v1815
    %v1858 = vpack.c.b16 %v1818, %v1817
    %v1859 = vpack.c.b16 %v1820, %v1819
    %v1860 = vpack.c.b16 %v1822, %v1821
    %v1861 = vpack.c.b16 %v1824, %v1823
    %v1862 = vpack.c.b16 %v1826, %v1825
    %v1863 = vpack.c.b16 %v1828, %v1827
    %v1864 = vpack.c.b16 %v1830, %v1829
    %v1865 = vpack.c.b16 %v1832, %v1831
    %v1866 = vpack.c.b16 %v1834, %v1833
    %v1867 = vpack.c.b16 %v1835, %v1835
    %vm1899 = vcmask 949248
    %v1901 = vsel %vm1899, %v1639, 0
    %vm1903 = vcmask 1041408
    %v1905 = vsel %vm1903, %v1867, 0
    %1907 = vmatprep.subr.bf16.mxu0 0
    %1908 = vmatpush1.bf16.msra.mxu0 %v1843
    %1909 = vmatprep.subr.bf16.mxu0 0
    %1910 = vmatpush1.bf16.msra.mxu0 %v1842
    %1911 = vmatprep.subr.bf16.mxu0 0
    %1912 = vmatpush1.bf16.msra.mxu0 %v1841
    %1913 = vmatprep.subr.bf16.mxu0 0
    %1914 = vmatpush1.bf16.msra.mxu0 %v1840
    %1915 = vmatprep.subr.bf16.mxu0 0
    %1916 = vmatpush1.bf16.msra.mxu0 %v1839
    %1917 = vmatprep.subr.bf16.mxu0 0
    %1918 = vmatpush1.bf16.msra.mxu0 %v1838
    %1919 = vmatprep.subr.bf16.mxu0 0
    %1920 = vmatpush1.bf16.msra.mxu0 %v1837
    %1921 = vmatprep.subr.bf16.mxu0 0
    %1922 = vmatpush1.bf16.msra.mxu0 %v1836
    %1923 = vmatprep.subr.bf16.mxu0 0
    %1924 = vmatpush2.bf16.msra.mxu0 %v1851
    %1925 = vmatprep.subr.bf16.mxu0 0
    %1926 = vmatpush2.bf16.msra.mxu0 %v1850
    %1927 = vmatprep.subr.bf16.mxu0 0
    %1928 = vmatpush2.bf16.msra.mxu0 %v1849
    %1929 = vmatprep.subr.bf16.mxu0 0
    %1930 = vmatpush2.bf16.msra.mxu0 %v1848
    %1931 = vmatprep.subr.bf16.mxu0 0
    %1932 = vmatpush2.bf16.msra.mxu0 %v1847
    %1933 = vmatprep.subr.bf16.mxu0 0
    %1934 = vmatpush2.bf16.msra.mxu0 %v1846
    %1935 = vmatprep.subr.bf16.mxu0 0
    %1936 = vmatpush2.bf16.msra.mxu0 %v1845
    %1937 = vmatprep.subr.bf16.mxu0 0
    %1938 = vmatpush2.bf16.msra.mxu0 %v1844
    %1939 = vmatprep.mubr.bf16.mxu0 %v1637
    %1940 = vmatmul.mubr.bf16.gmra.mxu0 %v1636
    %v1941 = vpop.f32.mrf.mxu0
    %v1942 = vadd.f32 %v1708, %v1941
    %v1943 = vpop.f32.mrf.mxu0
    %v1944 = vpop.f32.mrf.mxu0
    %v1945 = vpop.f32.mrf.mxu0
    %1946 = vdwg.mxu0
    %1947 = vmatprep.subr.bf16.mxu0 0
    %1948 = vmatpush1.bf16.msra.mxu0 %v1859
    %1949 = vmatprep.subr.bf16.mxu0 0
    %1950 = vmatpush1.bf16.msra.mxu0 %v1858
    %1951 = vmatprep.subr.bf16.mxu0 0
    %1952 = vmatpush1.bf16.msra.mxu0 %v1857
    %1953 = vmatprep.subr.bf16.mxu0 0
    %1954 = vmatpush1.bf16.msra.mxu0 %v1856
    %1955 = vmatprep.subr.bf16.mxu0 0
    %1956 = vmatpush1.bf16.msra.mxu0 %v1855
    %1957 = vmatprep.subr.bf16.mxu0 0
    %1958 = vmatpush1.bf16.msra.mxu0 %v1854
    %1959 = vmatprep.subr.bf16.mxu0 0
    %1960 = vmatpush1.bf16.msra.mxu0 %v1853
    %1961 = vmatprep.subr.bf16.mxu0 0
    %1962 = vmatpush1.bf16.msra.mxu0 %v1852
    %1963 = vmatprep.subr.bf16.mxu0 0
    %1964 = vmatpush2.bf16.msra.mxu0 %v1905
    %1965 = vmatprep.subr.bf16.mxu0 0
    %1966 = vmatpush2.bf16.msra.mxu0 %v1866
    %1967 = vmatprep.subr.bf16.mxu0 0
    %1968 = vmatpush2.bf16.msra.mxu0 %v1865
    %1969 = vmatprep.subr.bf16.mxu0 0
    %1970 = vmatpush2.bf16.msra.mxu0 %v1864
    %1971 = vmatprep.subr.bf16.mxu0 0
    %1972 = vmatpush2.bf16.msra.mxu0 %v1863
    %1973 = vmatprep.subr.bf16.mxu0 0
    %1974 = vmatpush2.bf16.msra.mxu0 %v1862
    %1975 = vmatprep.subr.bf16.mxu0 0
    %1976 = vmatpush2.bf16.msra.mxu0 %v1861
    %1977 = vmatprep.subr.bf16.mxu0 0
    %1978 = vmatpush2.bf16.msra.mxu0 %v1860
    %1979 = vmatprep.mubr.bf16.mxu0 %v1901
    %1980 = vmatmul.mubr.bf16.gmra.mxu0 %v1638
    %v1981 = vpop.f32.mrf.mxu0
    %v1982 = vadd.f32 %v1942, %v1981
    %v1983 = vpop.f32.mrf.mxu0
    %v1984 = vpop.f32.mrf.mxu0
    %v1985 = vpop.f32.mrf.mxu0
    %1986 = vdwg.mxu0
    %vm1987 = vcmask 74752
    %1988 = vst.msk [vmem:[#allocation2] sm:$0x3] %vm1987, %v1982
    // Predicated region
    $region22: #{net2conv_forward.5} parent=1 // pred_check
      _
    $region23: #{net2conv_forward.5} parent=1 // pred_check_branch
      %1990 = sbr.rel (0) target = $region25
    $region24: #{net2conv_forward.5} parent=1 // pred_region
      %s1992 = ssub.s32 32, 32
      %1993 = vsyncadd [#allocation3], %s1992
      %s1995 = sshll.u32 [#allocation2], 4
      %s1996 = int_to_ptr.vmem [resolvable:$true] %s1995
      %1998 = dma.vmem_to_hbm [thread:$0]  %s1996, 32, %s5, [#allocation3]
    $region25: #{net2conv_forward.5} parent=1 // pred_fallthru
      _
    // Predicated region
    $region26: #{net2conv_forward.5} parent=1 // pred_check
      _
    $region27: #{net2conv_forward.5} parent=1 // pred_check_branch
      %2000 = sbr.rel (0) target = $region29
    $region28: #{net2conv_forward.5} parent=1 // pred_region
      %2001 = dma.done [#allocation3], 32
    $region29: #{net2conv_forward.5} parent=1 // pred_fallthru
      _
    %2002 = vsyncpa [#allocation3], 1

</llo_original>
